<compile_context>
chip_gen: v5e
topology: v5e:2x2
jax: 0.10.0
libtpu: 0.0.40
codegen_flags: <defaults>
</compile_context>

<pallas_src>
import functools

import jax
import jax.numpy as jnp
import numpy as np
from jax.experimental import pallas as pl
from jax.experimental.pallas import tpu as pltpu


def _bilinear_matrix(n_in, n_out):
    """Interpolation matrix (n_out, n_in) for bilinear, align_corners=True."""
    a = np.zeros((n_out, n_in), np.float32)
    scale = 0.0 if n_out <= 1 else (n_in - 1) / (n_out - 1)
    for i in range(n_out):
        src = i * scale
        i0 = int(np.floor(src))
        i1 = min(i0 + 1, n_in - 1)
        frac = src - i0
        a[i, i0] += 1.0 - frac
        a[i, i1] += frac
    return a


# ----------------------------- Pallas kernel ------------------------------


def _ffb_kernel(x0_ref, x1_ref, awtb_ref, ah_ref,
                w1a_ref, w1b_ref, w2a_ref, w2b_ref, wo_ref,
                b1a_ref, b1b_ref, b2a_ref, b2b_ref, bo_ref,
                o_ref, *, C, W, Cout):
    H = x0_ref.shape[1]
    CW = C * W

    row = jax.lax.broadcasted_iota(jnp.int32, (H, CW), 0)
    lane = jax.lax.broadcasted_iota(jnp.int32, (H, CW), 1)
    wpos = lane % W
    top_row = row == 0
    bot_row = row == (H - 1)
    seg_first = wpos == 0
    seg_last = wpos == (W - 1)

    def taps9(x):
        # 3x3 stencil taps on the packed (H, C*W) slab.  Row taps: sublane
        # rolls masked at top/bottom image rows.  Column taps: lane rolls
        # masked at the W-segment borders (image border + channel boundary).
        up = jnp.where(top_row, 0.0, pltpu.roll(x, 1, 0))          # x[h-1, w]
        dn = jnp.where(bot_row, 0.0, pltpu.roll(x, H - 1, 0))      # x[h+1, w]
        taps = []
        for r in (up, x, dn):                                      # ky = 0,1,2
            lf = jnp.where(seg_first, 0.0, pltpu.roll(r, 1, 1))    # x[., w-1]
            rt = jnp.where(seg_last, 0.0, pltpu.roll(r, CW - 1, 1))
            taps.extend((lf, r, rt))                               # kx = 0,1,2
        return taps

    def seg_reduce(acc):
        # (H, C*W) -> (H, W): sum the per-input-channel lane segments.
        s = acc[:, :W]
        for ci in range(1, C):
            s = s + acc[:, ci * W:(ci + 1) * W]
        return s

    def channel_mix(taps, w_ref, b_ref, n_out):
        # y[:, co*W + w] = b[co]
        #   + sum_{t,ci} w_tab[t*n_out + co, ci*W + w] * taps[t][:, ci*W + w]
        cols = []
        for co in range(n_out):
            acc = w_ref[pl.ds(co, 1), :] * taps[0]
            for t in range(1, len(taps)):
                acc = acc + w_ref[pl.ds(t * n_out + co, 1), :] * taps[t]
            cols.append(seg_reduce(acc))
        return jnp.concatenate(cols, axis=-1) + b_ref[...]

    def conv3x3(x, w_ref, b_ref):
        return channel_mix(taps9(x), w_ref, b_ref, C)

    def rcu(x, wa_ref, ba_ref, wb_ref, bb_ref):
        # ResidualConvUnit_custom (bn=False, groups=1, activation=ReLU).
        r = jnp.maximum(x, 0.0)
        r = conv3x3(r, wa_ref, ba_ref)
        r = jnp.maximum(r, 0.0)
        r = conv3x3(r, wb_ref, bb_ref)
        return r + x

    x0 = x0_ref[0].astype(jnp.float32)
    x1 = x1_ref[0].astype(jnp.float32)

    # output = xs[0] + resConfUnit1(xs[1]);  output = resConfUnit2(output)
    out = x0 + rcu(x1, w1a_ref, b1a_ref, w1b_ref, b1b_ref)
    out = rcu(out, w2a_ref, b2a_ref, w2b_ref, b2b_ref)

    # 1x1 out_conv before the upsample (channel mixing and the separable
    # bilinear operator commute; align_corners rows sum to 1 so the bias is
    # preserved exactly).
    z = channel_mix([out], wo_ref, bo_ref, Cout)                   # (H, Cout*W)

    # Separable bilinear x2 upsample (align_corners=True) as two batched MXU
    # matmuls; the H-pass result is lane-dense (Cout*2W lanes).
    t = jnp.dot(z, awtb_ref[...], preferred_element_type=jnp.float32)   # (H, Cout*2W)
    up = jnp.dot(ah_ref[...], t, preferred_element_type=jnp.float32)    # (2H, Cout*2W)
    o_ref[0] = up.astype(o_ref.dtype)


# ------------------------------ JAX wrapper -------------------------------


def feature_fusion_block(x0_nchw, x1_nchw, params):
    """FeatureFusionBlock_custom forward. Inputs/outputs are NCHW float32."""
    B, C, H, W = x0_nchw.shape
    Cout = params["wo"].shape[-1]
    CW = C * W

    # Lane-packed input layout: (B, H, C*W), channel-major on the lane axis.
    def pack(x):
        return jnp.transpose(x, (0, 2, 1, 3)).reshape(B, H, CW)

    x0_p = pack(x0_nchw)
    x1_p = pack(x1_nchw)

    # Pre-broadcast weight tables: row index (tap*n_out + co), column (ci*W+w).
    def conv_table(w):  # (3, 3, C, C) HWIO -> (9*C, C*W)
        t = jnp.transpose(w.reshape(9, C, C), (0, 2, 1))       # (tap, co, ci)
        return jnp.repeat(t, W, axis=2).reshape(9 * C, CW)

    def bias_row(b):    # (..., n) -> (1, n*W)
        return jnp.repeat(b.reshape(-1).astype(jnp.float32), W)[None, :]

    w1a = conv_table(params["w1a"]); w1b = conv_table(params["w1b"])
    w2a = conv_table(params["w2a"]); w2b = conv_table(params["w2b"])
    wo = jnp.repeat(params["wo"].T.astype(jnp.float32), W, axis=1)  # (Cout, C*W)
    b1a = bias_row(params["b1a"]); b1b = bias_row(params["b1b"])
    b2a = bias_row(params["b2a"]); b2b = bias_row(params["b2b"])
    bo = bias_row(params["bo"])                                     # (1, Cout*W)

    # Separable bilinear x2 (align_corners=True).  The W-direction matrix is
    # block-diagonal over output channels so one matmul covers all of them.
    ah = jnp.asarray(_bilinear_matrix(H, 2 * H))                    # (2H, H)
    awt_blk = jnp.asarray(np.kron(np.eye(Cout, dtype=np.float32),
                                  _bilinear_matrix(W, 2 * W).T))    # (Cout*W, Cout*2W)

    def full_spec(arr):
        nd = arr.ndim
        return pl.BlockSpec(arr.shape, lambda b, _n=nd: (0,) * _n)

    flops = int(B * (4 * 2 * 9 * H * W * C * C                     # four 3x3 convs
                     + 2 * H * W * C * Cout                        # 1x1 out_conv
                     + 2 * H * (Cout * W) * (Cout * 2 * W)         # W-pass matmul
                     + 2 * (2 * H) * H * (Cout * 2 * W)))          # H-pass matmul
    bytes_accessed = int(4 * (2 * B * H * CW + B * 2 * H * Cout * 2 * W
                              + 4 * w1a.size + wo.size
                              + 4 * b1a.size + bo.size
                              + ah.size + awt_blk.size))

    kernel = functools.partial(_ffb_kernel, C=C, W=W, Cout=Cout)

    out_packed = pl.pallas_call(
        kernel,
        out_shape=jax.ShapeDtypeStruct((B, 2 * H, Cout * 2 * W), jnp.float32),
        grid_spec=pltpu.PrefetchScalarGridSpec(
            num_scalar_prefetch=0,
            grid=(B,),
            in_specs=[pl.BlockSpec((1, H, CW), lambda b: (b, 0, 0)),
                      pl.BlockSpec((1, H, CW), lambda b: (b, 0, 0)),
                      full_spec(awt_blk), full_spec(ah),
                      full_spec(w1a), full_spec(w1b),
                      full_spec(w2a), full_spec(w2b), full_spec(wo),
                      full_spec(b1a), full_spec(b1b),
                      full_spec(b2a), full_spec(b2b), full_spec(bo)],
            out_specs=pl.BlockSpec((1, 2 * H, Cout * 2 * W),
                                   lambda b: (b, 0, 0))),
        compiler_params=pltpu.CompilerParams(
            dimension_semantics=("parallel",)),
        cost_estimate=pl.CostEstimate(flops=flops, transcendentals=0,
                                      bytes_accessed=bytes_accessed),
    )(x0_p, x1_p, awt_blk, ah, w1a, w1b, w2a, w2b, wo,
      b1a, b1b, b2a, b2b, bo)

    # Un-pack the lane-dense (B, 2H, Cout*2W) slab back to NCHW.
    return jnp.transpose(out_packed.reshape(B, 2 * H, Cout, 2 * W),
                         (0, 2, 1, 3))


# --------------------------- pure-JAX reference ---------------------------


def _reference(x0, x1, params):
    def conv3x3_ref(x, w, b):
        w_oihw = jnp.transpose(w, (3, 2, 0, 1))
        y = jax.lax.conv_general_dilated(
            x, w_oihw, window_strides=(1, 1), padding=((1, 1), (1, 1)),
            dimension_numbers=("NCHW", "OIHW", "NCHW"))
        return y + b.reshape(1, -1, 1, 1)

    def rcu_ref(x, wa, ba, wb, bb):
        r = jax.nn.relu(x)
        r = conv3x3_ref(r, wa, ba)
        r = jax.nn.relu(r)
        r = conv3x3_ref(r, wb, bb)
        return r + x

    out = x0 + rcu_ref(x1, params["w1a"], params["b1a"],
                       params["w1b"], params["b1b"])
    out = rcu_ref(out, params["w2a"], params["b2a"],
                  params["w2b"], params["b2b"])
    _, _, H, W = out.shape
    ah = jnp.asarray(_bilinear_matrix(H, 2 * H))
    aw = jnp.asarray(_bilinear_matrix(W, 2 * W))
    out = jnp.einsum("ph,nchw->ncpw", ah, out)
    out = jnp.einsum("qw,ncpw->ncpq", aw, out)
    out = (jnp.einsum("ncpq,cd->ndpq", out, params["wo"])
           + params["bo"].reshape(1, -1, 1, 1))
    return out


if __name__ == "__main__":
    B, C, H, W = 2, 4, 16, 16        # features = 4
    Cout = 4                         # out_features = 4

    key = jax.random.PRNGKey(0)
    ks = jax.random.split(key, 12)

    def w_init(k, shape, scale=0.1):
        return jax.random.normal(k, shape, jnp.float32) * scale

    params = {
        "w1a": w_init(ks[0], (3, 3, C, C)), "b1a": w_init(ks[1], (1, 1, C)),
        "w1b": w_init(ks[2], (3, 3, C, C)), "b1b": w_init(ks[3], (1, 1, C)),
        "w2a": w_init(ks[4], (3, 3, C, C)), "b2a": w_init(ks[5], (1, 1, C)),
        "w2b": w_init(ks[6], (3, 3, C, C)), "b2b": w_init(ks[7], (1, 1, C)),
        "wo":  w_init(ks[8], (C, Cout)),    "bo":  w_init(ks[9], (1, Cout)),
    }

    x0 = jax.random.normal(ks[10], (B, C, H, W), jnp.float32)   # xs[0]
    x1 = jax.random.normal(ks[11], (B, C, H, W), jnp.float32)   # xs[1]

    out = feature_fusion_block(x0, x1, params)
    out = jax.block_until_ready(out)

    ref = _reference(x0, x1, params)
    assert out.shape == (B, Cout, 2 * H, 2 * W)
    np.testing.assert_allclose(np.asarray(out), np.asarray(ref),
                               rtol=2e-3, atol=2e-3)
    print("KERNEL_OK")
</pallas_src>

<mosaic_0001>
module attributes {stable_mosaic.version = 11 : i64} {
  func.func @_ffb_kernel(%arg0: i32, %arg1: memref<1x16x64xf32, #tpu.memory_space<vmem>>, %arg2: memref<1x16x64xf32, #tpu.memory_space<vmem>>, %arg3: memref<64x128xf32, #tpu.memory_space<vmem>>, %arg4: memref<32x16xf32, #tpu.memory_space<vmem>>, %arg5: memref<36x64xf32, #tpu.memory_space<vmem>>, %arg6: memref<36x64xf32, #tpu.memory_space<vmem>>, %arg7: memref<36x64xf32, #tpu.memory_space<vmem>>, %arg8: memref<36x64xf32, #tpu.memory_space<vmem>>, %arg9: memref<4x64xf32, #tpu.memory_space<vmem>>, %arg10: memref<1x64xf32, #tpu.memory_space<vmem>>, %arg11: memref<1x64xf32, #tpu.memory_space<vmem>>, %arg12: memref<1x64xf32, #tpu.memory_space<vmem>>, %arg13: memref<1x64xf32, #tpu.memory_space<vmem>>, %arg14: memref<1x64xf32, #tpu.memory_space<vmem>>, %arg15: memref<1x32x128xf32, #tpu.memory_space<vmem>>) attributes {dimension_semantics = [#tpu.dimension_semantics<parallel>], iteration_bounds = array<i64: 2>, scalar_prefetch = 0 : i64, scratch_operands = 0 : i64, tpu.core_type = #tpu.core_type<tc>, window_params = [{transform_indices = @transform_0, window_bounds = array<i64: 1, 16, 64>}, {transform_indices = @transform_1, window_bounds = array<i64: 1, 16, 64>}, {pipeline_mode = #tpu.pipeline_mode<synchronous>, transform_indices = @transform_2, window_bounds = array<i64: 64, 128>}, {pipeline_mode = #tpu.pipeline_mode<synchronous>, transform_indices = @transform_3, window_bounds = array<i64: 32, 16>}, {pipeline_mode = #tpu.pipeline_mode<synchronous>, transform_indices = @transform_4, window_bounds = array<i64: 36, 64>}, {pipeline_mode = #tpu.pipeline_mode<synchronous>, transform_indices = @transform_5, window_bounds = array<i64: 36, 64>}, {pipeline_mode = #tpu.pipeline_mode<synchronous>, transform_indices = @transform_6, window_bounds = array<i64: 36, 64>}, {pipeline_mode = #tpu.pipeline_mode<synchronous>, transform_indices = @transform_7, window_bounds = array<i64: 36, 64>}, {pipeline_mode = #tpu.pipeline_mode<synchronous>, transform_indices = @transform_8, window_bounds = array<i64: 4, 64>}, {pipeline_mode = #tpu.pipeline_mode<synchronous>, transform_indices = @transform_9, window_bounds = array<i64: 1, 64>}, {pipeline_mode = #tpu.pipeline_mode<synchronous>, transform_indices = @transform_10, window_bounds = array<i64: 1, 64>}, {pipeline_mode = #tpu.pipeline_mode<synchronous>, transform_indices = @transform_11, window_bounds = array<i64: 1, 64>}, {pipeline_mode = #tpu.pipeline_mode<synchronous>, transform_indices = @transform_12, window_bounds = array<i64: 1, 64>}, {pipeline_mode = #tpu.pipeline_mode<synchronous>, transform_indices = @transform_13, window_bounds = array<i64: 1, 64>}, {transform_indices = @transform_14, window_bounds = array<i64: 1, 32, 128>}]} {
    %0 = tpu.iota {dimensions = array<i32: 0>} : vector<16x64xi32>
    %1 = tpu.iota {dimensions = array<i32: 1>} : vector<16x64xi32>
    %c16_i32 = arith.constant 16 : i32
    %c0_i32 = arith.constant 0 : i32
    %2 = arith.cmpi eq, %c16_i32, %c0_i32 : i32
    %c1_i32 = arith.constant 1 : i32
    %3 = arith.select %2, %c1_i32, %c16_i32 : i32
    %4 = vector.broadcast %3 : i32 to vector<16x64xi32>
    %5 = arith.remsi %1, %4 : vector<16x64xi32>
    %c0_i32_0 = arith.constant 0 : i32
    %6 = vector.broadcast %c0_i32_0 : i32 to vector<16x64xi32>
    %7 = arith.cmpi ne, %5, %6 : vector<16x64xi32>
    %c0_i32_1 = arith.constant 0 : i32
    %8 = vector.broadcast %c0_i32_1 : i32 to vector<16x64xi32>
    %9 = arith.cmpi slt, %5, %8 : vector<16x64xi32>
    %c0_i32_2 = arith.constant 0 : i32
    %10 = arith.cmpi slt, %3, %c0_i32_2 : i32
    %11 = vector.broadcast %10 : i1 to vector<16x64xi1>
    %12 = vector.broadcast %11 : vector<16x64xi1> to vector<16x64xi1>
    %13 = arith.xori %9, %12 : vector<16x64xi1>
    %14 = arith.andi %13, %7 : vector<16x64xi1>
    %15 = vector.broadcast %3 : i32 to vector<16x64xi32>
    %16 = arith.addi %5, %15 : vector<16x64xi32>
    %17 = arith.select %14, %16, %5 : vector<16x64xi1>, vector<16x64xi32>
    %c0_i32_3 = arith.constant 0 : i32
    %18 = vector.broadcast %c0_i32_3 : i32 to vector<16x64xi32>
    %19 = arith.cmpi eq, %0, %18 : vector<16x64xi32>
    %c15_i32 = arith.constant 15 : i32
    %20 = vector.broadcast %c15_i32 : i32 to vector<16x64xi32>
    %21 = arith.cmpi eq, %0, %20 : vector<16x64xi32>
    %c0_i32_4 = arith.constant 0 : i32
    %22 = vector.broadcast %c0_i32_4 : i32 to vector<16x64xi32>
    %23 = arith.cmpi eq, %17, %22 : vector<16x64xi32>
    %c15_i32_5 = arith.constant 15 : i32
    %24 = vector.broadcast %c15_i32_5 : i32 to vector<16x64xi32>
    %25 = arith.cmpi eq, %17, %24 : vector<16x64xi32>
    %c0 = arith.constant 0 : index
    %c0_6 = arith.constant 0 : index
    %c0_7 = arith.constant 0 : index
    %26 = vector.load %arg1[%c0, %c0_6, %c0_7] : memref<1x16x64xf32, #tpu.memory_space<vmem>>, vector<1x16x64xf32>
    %27 = vector.shape_cast %26 : vector<1x16x64xf32> to vector<16x64xf32>
    %c0_8 = arith.constant 0 : index
    %c0_9 = arith.constant 0 : index
    %c0_10 = arith.constant 0 : index
    %28 = vector.load %arg2[%c0_8, %c0_9, %c0_10] : memref<1x16x64xf32, #tpu.memory_space<vmem>>, vector<1x16x64xf32>
    %29 = vector.shape_cast %28 : vector<1x16x64xf32> to vector<16x64xf32>
    %cst = arith.constant 0.000000e+00 : f32
    %30 = vector.broadcast %cst : f32 to vector<16x64xf32>
    %31 = arith.maximumf %29, %30 : vector<16x64xf32>
    %c1_i32_11 = arith.constant 1 : i32
    %32 = tpu.dynamic_rotate %31 by %c1_i32_11 dim 0 : vector<16x64xf32>, i32 -> vector<16x64xf32>
    %cst_12 = arith.constant 0.000000e+00 : f32
    %33 = vector.broadcast %cst_12 : f32 to vector<16x64xf32>
    %34 = arith.select %19, %33, %32 : vector<16x64xi1>, vector<16x64xf32>
    %c15_i32_13 = arith.constant 15 : i32
    %35 = tpu.dynamic_rotate %31 by %c15_i32_13 dim 0 : vector<16x64xf32>, i32 -> vector<16x64xf32>
    %cst_14 = arith.constant 0.000000e+00 : f32
    %36 = vector.broadcast %cst_14 : f32 to vector<16x64xf32>
    %37 = arith.select %21, %36, %35 : vector<16x64xi1>, vector<16x64xf32>
    %c1_i32_15 = arith.constant 1 : i32
    %38 = tpu.dynamic_rotate %34 by %c1_i32_15 dim 1 : vector<16x64xf32>, i32 -> vector<16x64xf32>
    %cst_16 = arith.constant 0.000000e+00 : f32
    %39 = vector.broadcast %cst_16 : f32 to vector<16x64xf32>
    %40 = arith.select %23, %39, %38 : vector<16x64xi1>, vector<16x64xf32>
    %c63_i32 = arith.constant 63 : i32
    %41 = tpu.dynamic_rotate %34 by %c63_i32 dim 1 : vector<16x64xf32>, i32 -> vector<16x64xf32>
    %cst_17 = arith.constant 0.000000e+00 : f32
    %42 = vector.broadcast %cst_17 : f32 to vector<16x64xf32>
    %43 = arith.select %25, %42, %41 : vector<16x64xi1>, vector<16x64xf32>
    %c1_i32_18 = arith.constant 1 : i32
    %44 = tpu.dynamic_rotate %31 by %c1_i32_18 dim 1 : vector<16x64xf32>, i32 -> vector<16x64xf32>
    %cst_19 = arith.constant 0.000000e+00 : f32
    %45 = vector.broadcast %cst_19 : f32 to vector<16x64xf32>
    %46 = arith.select %23, %45, %44 : vector<16x64xi1>, vector<16x64xf32>
    %c63_i32_20 = arith.constant 63 : i32
    %47 = tpu.dynamic_rotate %31 by %c63_i32_20 dim 1 : vector<16x64xf32>, i32 -> vector<16x64xf32>
    %cst_21 = arith.constant 0.000000e+00 : f32
    %48 = vector.broadcast %cst_21 : f32 to vector<16x64xf32>
    %49 = arith.select %25, %48, %47 : vector<16x64xi1>, vector<16x64xf32>
    %c1_i32_22 = arith.constant 1 : i32
    %50 = tpu.dynamic_rotate %37 by %c1_i32_22 dim 1 : vector<16x64xf32>, i32 -> vector<16x64xf32>
    %cst_23 = arith.constant 0.000000e+00 : f32
    %51 = vector.broadcast %cst_23 : f32 to vector<16x64xf32>
    %52 = arith.select %23, %51, %50 : vector<16x64xi1>, vector<16x64xf32>
    %c63_i32_24 = arith.constant 63 : i32
    %53 = tpu.dynamic_rotate %37 by %c63_i32_24 dim 1 : vector<16x64xf32>, i32 -> vector<16x64xf32>
    %cst_25 = arith.constant 0.000000e+00 : f32
    %54 = vector.broadcast %cst_25 : f32 to vector<16x64xf32>
    %55 = arith.select %25, %54, %53 : vector<16x64xi1>, vector<16x64xf32>
    %c0_26 = arith.constant 0 : index
    %c0_27 = arith.constant 0 : index
    %56 = vector.load %arg5[%c0_26, %c0_27] : memref<36x64xf32, #tpu.memory_space<vmem>>, vector<1x64xf32>
    %57 = vector.broadcast %56 : vector<1x64xf32> to vector<16x64xf32>
    %58 = arith.mulf %57, %40 : vector<16x64xf32>
    %c4 = arith.constant 4 : index
    %c0_28 = arith.constant 0 : index
    %59 = vector.load %arg5[%c4, %c0_28] : memref<36x64xf32, #tpu.memory_space<vmem>>, vector<1x64xf32>
    %60 = vector.broadcast %59 : vector<1x64xf32> to vector<16x64xf32>
    %61 = arith.mulf %60, %34 : vector<16x64xf32>
    %62 = arith.addf %58, %61 : vector<16x64xf32>
    %c8 = arith.constant 8 : index
    %c0_29 = arith.constant 0 : index
    %63 = vector.load %arg5[%c8, %c0_29] : memref<36x64xf32, #tpu.memory_space<vmem>>, vector<1x64xf32>
    %64 = vector.broadcast %63 : vector<1x64xf32> to vector<16x64xf32>
    %65 = arith.mulf %64, %43 : vector<16x64xf32>
    %66 = arith.addf %62, %65 : vector<16x64xf32>
    %c12 = arith.constant 12 : index
    %c0_30 = arith.constant 0 : index
    %67 = vector.load %arg5[%c12, %c0_30] : memref<36x64xf32, #tpu.memory_space<vmem>>, vector<1x64xf32>
    %68 = vector.broadcast %67 : vector<1x64xf32> to vector<16x64xf32>
    %69 = arith.mulf %68, %46 : vector<16x64xf32>
    %70 = arith.addf %66, %69 : vector<16x64xf32>
    %c16 = arith.constant 16 : index
    %c0_31 = arith.constant 0 : index
    %71 = vector.load %arg5[%c16, %c0_31] : memref<36x64xf32, #tpu.memory_space<vmem>>, vector<1x64xf32>
    %72 = vector.broadcast %71 : vector<1x64xf32> to vector<16x64xf32>
    %73 = arith.mulf %72, %31 : vector<16x64xf32>
    %74 = arith.addf %70, %73 : vector<16x64xf32>
    %c20 = arith.constant 20 : index
    %c0_32 = arith.constant 0 : index
    %75 = vector.load %arg5[%c20, %c0_32] : memref<36x64xf32, #tpu.memory_space<vmem>>, vector<1x64xf32>
    %76 = vector.broadcast %75 : vector<1x64xf32> to vector<16x64xf32>
    %77 = arith.mulf %76, %49 : vector<16x64xf32>
    %78 = arith.addf %74, %77 : vector<16x64xf32>
    %c24 = arith.constant 24 : index
    %c0_33 = arith.constant 0 : index
    %79 = vector.load %arg5[%c24, %c0_33] : memref<36x64xf32, #tpu.memory_space<vmem>>, vector<1x64xf32>
    %80 = vector.broadcast %79 : vector<1x64xf32> to vector<16x64xf32>
    %81 = arith.mulf %80, %52 : vector<16x64xf32>
    %82 = arith.addf %78, %81 : vector<16x64xf32>
    %c28 = arith.constant 28 : index
    %c0_34 = arith.constant 0 : index
    %83 = vector.load %arg5[%c28, %c0_34] : memref<36x64xf32, #tpu.memory_space<vmem>>, vector<1x64xf32>
    %84 = vector.broadcast %83 : vector<1x64xf32> to vector<16x64xf32>
    %85 = arith.mulf %84, %37 : vector<16x64xf32>
    %86 = arith.addf %82, %85 : vector<16x64xf32>
    %c32 = arith.constant 32 : index
    %c0_35 = arith.constant 0 : index
    %87 = vector.load %arg5[%c32, %c0_35] : memref<36x64xf32, #tpu.memory_space<vmem>>, vector<1x64xf32>
    %88 = vector.broadcast %87 : vector<1x64xf32> to vector<16x64xf32>
    %89 = arith.mulf %88, %55 : vector<16x64xf32>
    %90 = arith.addf %86, %89 : vector<16x64xf32>
    %91 = vector.extract_strided_slice %90 {offsets = [0, 0], sizes = [16, 16], strides = [1, 1]} : vector<16x64xf32> to vector<16x16xf32>
    %92 = vector.extract_strided_slice %90 {offsets = [0, 16], sizes = [16, 16], strides = [1, 1]} : vector<16x64xf32> to vector<16x16xf32>
    %93 = arith.addf %91, %92 : vector<16x16xf32>
    %94 = vector.extract_strided_slice %90 {offsets = [0, 32], sizes = [16, 16], strides = [1, 1]} : vector<16x64xf32> to vector<16x16xf32>
    %95 = arith.addf %93, %94 : vector<16x16xf32>
    %96 = vector.extract_strided_slice %90 {offsets = [0, 48], sizes = [16, 16], strides = [1, 1]} : vector<16x64xf32> to vector<16x16xf32>
    %97 = arith.addf %95, %96 : vector<16x16xf32>
    %c1 = arith.constant 1 : index
    %c0_36 = arith.constant 0 : index
    %98 = vector.load %arg5[%c1, %c0_36] : memref<36x64xf32, #tpu.memory_space<vmem>>, vector<1x64xf32>
    %99 = vector.broadcast %98 : vector<1x64xf32> to vector<16x64xf32>
    %100 = arith.mulf %99, %40 : vector<16x64xf32>
    %c5 = arith.constant 5 : index
    %c0_37 = arith.constant 0 : index
    %101 = vector.load %arg5[%c5, %c0_37] : memref<36x64xf32, #tpu.memory_space<vmem>>, vector<1x64xf32>
    %102 = vector.broadcast %101 : vector<1x64xf32> to vector<16x64xf32>
    %103 = arith.mulf %102, %34 : vector<16x64xf32>
    %104 = arith.addf %100, %103 : vector<16x64xf32>
    %c9 = arith.constant 9 : index
    %c0_38 = arith.constant 0 : index
    %105 = vector.load %arg5[%c9, %c0_38] : memref<36x64xf32, #tpu.memory_space<vmem>>, vector<1x64xf32>
    %106 = vector.broadcast %105 : vector<1x64xf32> to vector<16x64xf32>
    %107 = arith.mulf %106, %43 : vector<16x64xf32>
    %108 = arith.addf %104, %107 : vector<16x64xf32>
    %c13 = arith.constant 13 : index
    %c0_39 = arith.constant 0 : index
    %109 = vector.load %arg5[%c13, %c0_39] : memref<36x64xf32, #tpu.memory_space<vmem>>, vector<1x64xf32>
    %110 = vector.broadcast %109 : vector<1x64xf32> to vector<16x64xf32>
    %111 = arith.mulf %110, %46 : vector<16x64xf32>
    %112 = arith.addf %108, %111 : vector<16x64xf32>
    %c17 = arith.constant 17 : index
    %c0_40 = arith.constant 0 : index
    %113 = vector.load %arg5[%c17, %c0_40] : memref<36x64xf32, #tpu.memory_space<vmem>>, vector<1x64xf32>
    %114 = vector.broadcast %113 : vector<1x64xf32> to vector<16x64xf32>
    %115 = arith.mulf %114, %31 : vector<16x64xf32>
    %116 = arith.addf %112, %115 : vector<16x64xf32>
    %c21 = arith.constant 21 : index
    %c0_41 = arith.constant 0 : index
    %117 = vector.load %arg5[%c21, %c0_41] : memref<36x64xf32, #tpu.memory_space<vmem>>, vector<1x64xf32>
    %118 = vector.broadcast %117 : vector<1x64xf32> to vector<16x64xf32>
    %119 = arith.mulf %118, %49 : vector<16x64xf32>
    %120 = arith.addf %116, %119 : vector<16x64xf32>
    %c25 = arith.constant 25 : index
    %c0_42 = arith.constant 0 : index
    %121 = vector.load %arg5[%c25, %c0_42] : memref<36x64xf32, #tpu.memory_space<vmem>>, vector<1x64xf32>
    %122 = vector.broadcast %121 : vector<1x64xf32> to vector<16x64xf32>
    %123 = arith.mulf %122, %52 : vector<16x64xf32>
    %124 = arith.addf %120, %123 : vector<16x64xf32>
    %c29 = arith.constant 29 : index
    %c0_43 = arith.constant 0 : index
    %125 = vector.load %arg5[%c29, %c0_43] : memref<36x64xf32, #tpu.memory_space<vmem>>, vector<1x64xf32>
    %126 = vector.broadcast %125 : vector<1x64xf32> to vector<16x64xf32>
    %127 = arith.mulf %126, %37 : vector<16x64xf32>
    %128 = arith.addf %124, %127 : vector<16x64xf32>
    %c33 = arith.constant 33 : index
    %c0_44 = arith.constant 0 : index
    %129 = vector.load %arg5[%c33, %c0_44] : memref<36x64xf32, #tpu.memory_space<vmem>>, vector<1x64xf32>
    %130 = vector.broadcast %129 : vector<1x64xf32> to vector<16x64xf32>
    %131 = arith.mulf %130, %55 : vector<16x64xf32>
    %132 = arith.addf %128, %131 : vector<16x64xf32>
    %133 = vector.extract_strided_slice %132 {offsets = [0, 0], sizes = [16, 16], strides = [1, 1]} : vector<16x64xf32> to vector<16x16xf32>
    %134 = vector.extract_strided_slice %132 {offsets = [0, 16], sizes = [16, 16], strides = [1, 1]} : vector<16x64xf32> to vector<16x16xf32>
    %135 = arith.addf %133, %134 : vector<16x16xf32>
    %136 = vector.extract_strided_slice %132 {offsets = [0, 32], sizes = [16, 16], strides = [1, 1]} : vector<16x64xf32> to vector<16x16xf32>
    %137 = arith.addf %135, %136 : vector<16x16xf32>
    %138 = vector.extract_strided_slice %132 {offsets = [0, 48], sizes = [16, 16], strides = [1, 1]} : vector<16x64xf32> to vector<16x16xf32>
    %139 = arith.addf %137, %138 : vector<16x16xf32>
    %c2 = arith.constant 2 : index
    %c0_45 = arith.constant 0 : index
    %140 = vector.load %arg5[%c2, %c0_45] : memref<36x64xf32, #tpu.memory_space<vmem>>, vector<1x64xf32>
    %141 = vector.broadcast %140 : vector<1x64xf32> to vector<16x64xf32>
    %142 = arith.mulf %141, %40 : vector<16x64xf32>
    %c6 = arith.constant 6 : index
    %c0_46 = arith.constant 0 : index
    %143 = vector.load %arg5[%c6, %c0_46] : memref<36x64xf32, #tpu.memory_space<vmem>>, vector<1x64xf32>
    %144 = vector.broadcast %143 : vector<1x64xf32> to vector<16x64xf32>
    %145 = arith.mulf %144, %34 : vector<16x64xf32>
    %146 = arith.addf %142, %145 : vector<16x64xf32>
    %c10 = arith.constant 10 : index
    %c0_47 = arith.constant 0 : index
    %147 = vector.load %arg5[%c10, %c0_47] : memref<36x64xf32, #tpu.memory_space<vmem>>, vector<1x64xf32>
    %148 = vector.broadcast %147 : vector<1x64xf32> to vector<16x64xf32>
    %149 = arith.mulf %148, %43 : vector<16x64xf32>
    %150 = arith.addf %146, %149 : vector<16x64xf32>
    %c14 = arith.constant 14 : index
    %c0_48 = arith.constant 0 : index
    %151 = vector.load %arg5[%c14, %c0_48] : memref<36x64xf32, #tpu.memory_space<vmem>>, vector<1x64xf32>
    %152 = vector.broadcast %151 : vector<1x64xf32> to vector<16x64xf32>
    %153 = arith.mulf %152, %46 : vector<16x64xf32>
    %154 = arith.addf %150, %153 : vector<16x64xf32>
    %c18 = arith.constant 18 : index
    %c0_49 = arith.constant 0 : index
    %155 = vector.load %arg5[%c18, %c0_49] : memref<36x64xf32, #tpu.memory_space<vmem>>, vector<1x64xf32>
    %156 = vector.broadcast %155 : vector<1x64xf32> to vector<16x64xf32>
    %157 = arith.mulf %156, %31 : vector<16x64xf32>
    %158 = arith.addf %154, %157 : vector<16x64xf32>
    %c22 = arith.constant 22 : index
    %c0_50 = arith.constant 0 : index
    %159 = vector.load %arg5[%c22, %c0_50] : memref<36x64xf32, #tpu.memory_space<vmem>>, vector<1x64xf32>
    %160 = vector.broadcast %159 : vector<1x64xf32> to vector<16x64xf32>
    %161 = arith.mulf %160, %49 : vector<16x64xf32>
    %162 = arith.addf %158, %161 : vector<16x64xf32>
    %c26 = arith.constant 26 : index
    %c0_51 = arith.constant 0 : index
    %163 = vector.load %arg5[%c26, %c0_51] : memref<36x64xf32, #tpu.memory_space<vmem>>, vector<1x64xf32>
    %164 = vector.broadcast %163 : vector<1x64xf32> to vector<16x64xf32>
    %165 = arith.mulf %164, %52 : vector<16x64xf32>
    %166 = arith.addf %162, %165 : vector<16x64xf32>
    %c30 = arith.constant 30 : index
    %c0_52 = arith.constant 0 : index
    %167 = vector.load %arg5[%c30, %c0_52] : memref<36x64xf32, #tpu.memory_space<vmem>>, vector<1x64xf32>
    %168 = vector.broadcast %167 : vector<1x64xf32> to vector<16x64xf32>
    %169 = arith.mulf %168, %37 : vector<16x64xf32>
    %170 = arith.addf %166, %169 : vector<16x64xf32>
    %c34 = arith.constant 34 : index
    %c0_53 = arith.constant 0 : index
    %171 = vector.load %arg5[%c34, %c0_53] : memref<36x64xf32, #tpu.memory_space<vmem>>, vector<1x64xf32>
    %172 = vector.broadcast %171 : vector<1x64xf32> to vector<16x64xf32>
    %173 = arith.mulf %172, %55 : vector<16x64xf32>
    %174 = arith.addf %170, %173 : vector<16x64xf32>
    %175 = vector.extract_strided_slice %174 {offsets = [0, 0], sizes = [16, 16], strides = [1, 1]} : vector<16x64xf32> to vector<16x16xf32>
    %176 = vector.extract_strided_slice %174 {offsets = [0, 16], sizes = [16, 16], strides = [1, 1]} : vector<16x64xf32> to vector<16x16xf32>
    %177 = arith.addf %175, %176 : vector<16x16xf32>
    %178 = vector.extract_strided_slice %174 {offsets = [0, 32], sizes = [16, 16], strides = [1, 1]} : vector<16x64xf32> to vector<16x16xf32>
    %179 = arith.addf %177, %178 : vector<16x16xf32>
    %180 = vector.extract_strided_slice %174 {offsets = [0, 48], sizes = [16, 16], strides = [1, 1]} : vector<16x64xf32> to vector<16x16xf32>
    %181 = arith.addf %179, %180 : vector<16x16xf32>
    %c3 = arith.constant 3 : index
    %c0_54 = arith.constant 0 : index
    %182 = vector.load %arg5[%c3, %c0_54] : memref<36x64xf32, #tpu.memory_space<vmem>>, vector<1x64xf32>
    %183 = vector.broadcast %182 : vector<1x64xf32> to vector<16x64xf32>
    %184 = arith.mulf %183, %40 : vector<16x64xf32>
    %c7 = arith.constant 7 : index
    %c0_55 = arith.constant 0 : index
    %185 = vector.load %arg5[%c7, %c0_55] : memref<36x64xf32, #tpu.memory_space<vmem>>, vector<1x64xf32>
    %186 = vector.broadcast %185 : vector<1x64xf32> to vector<16x64xf32>
    %187 = arith.mulf %186, %34 : vector<16x64xf32>
    %188 = arith.addf %184, %187 : vector<16x64xf32>
    %c11 = arith.constant 11 : index
    %c0_56 = arith.constant 0 : index
    %189 = vector.load %arg5[%c11, %c0_56] : memref<36x64xf32, #tpu.memory_space<vmem>>, vector<1x64xf32>
    %190 = vector.broadcast %189 : vector<1x64xf32> to vector<16x64xf32>
    %191 = arith.mulf %190, %43 : vector<16x64xf32>
    %192 = arith.addf %188, %191 : vector<16x64xf32>
    %c15 = arith.constant 15 : index
    %c0_57 = arith.constant 0 : index
    %193 = vector.load %arg5[%c15, %c0_57] : memref<36x64xf32, #tpu.memory_space<vmem>>, vector<1x64xf32>
    %194 = vector.broadcast %193 : vector<1x64xf32> to vector<16x64xf32>
    %195 = arith.mulf %194, %46 : vector<16x64xf32>
    %196 = arith.addf %192, %195 : vector<16x64xf32>
    %c19 = arith.constant 19 : index
    %c0_58 = arith.constant 0 : index
    %197 = vector.load %arg5[%c19, %c0_58] : memref<36x64xf32, #tpu.memory_space<vmem>>, vector<1x64xf32>
    %198 = vector.broadcast %197 : vector<1x64xf32> to vector<16x64xf32>
    %199 = arith.mulf %198, %31 : vector<16x64xf32>
    %200 = arith.addf %196, %199 : vector<16x64xf32>
    %c23 = arith.constant 23 : index
    %c0_59 = arith.constant 0 : index
    %201 = vector.load %arg5[%c23, %c0_59] : memref<36x64xf32, #tpu.memory_space<vmem>>, vector<1x64xf32>
    %202 = vector.broadcast %201 : vector<1x64xf32> to vector<16x64xf32>
    %203 = arith.mulf %202, %49 : vector<16x64xf32>
    %204 = arith.addf %200, %203 : vector<16x64xf32>
    %c27 = arith.constant 27 : index
    %c0_60 = arith.constant 0 : index
    %205 = vector.load %arg5[%c27, %c0_60] : memref<36x64xf32, #tpu.memory_space<vmem>>, vector<1x64xf32>
    %206 = vector.broadcast %205 : vector<1x64xf32> to vector<16x64xf32>
    %207 = arith.mulf %206, %52 : vector<16x64xf32>
    %208 = arith.addf %204, %207 : vector<16x64xf32>
    %c31 = arith.constant 31 : index
    %c0_61 = arith.constant 0 : index
    %209 = vector.load %arg5[%c31, %c0_61] : memref<36x64xf32, #tpu.memory_space<vmem>>, vector<1x64xf32>
    %210 = vector.broadcast %209 : vector<1x64xf32> to vector<16x64xf32>
    %211 = arith.mulf %210, %37 : vector<16x64xf32>
    %212 = arith.addf %208, %211 : vector<16x64xf32>
    %c35 = arith.constant 35 : index
    %c0_62 = arith.constant 0 : index
    %213 = vector.load %arg5[%c35, %c0_62] : memref<36x64xf32, #tpu.memory_space<vmem>>, vector<1x64xf32>
    %214 = vector.broadcast %213 : vector<1x64xf32> to vector<16x64xf32>
    %215 = arith.mulf %214, %55 : vector<16x64xf32>
    %216 = arith.addf %212, %215 : vector<16x64xf32>
    %217 = vector.extract_strided_slice %216 {offsets = [0, 0], sizes = [16, 16], strides = [1, 1]} : vector<16x64xf32> to vector<16x16xf32>
    %218 = vector.extract_strided_slice %216 {offsets = [0, 16], sizes = [16, 16], strides = [1, 1]} : vector<16x64xf32> to vector<16x16xf32>
    %219 = arith.addf %217, %218 : vector<16x16xf32>
    %220 = vector.extract_strided_slice %216 {offsets = [0, 32], sizes = [16, 16], strides = [1, 1]} : vector<16x64xf32> to vector<16x16xf32>
    %221 = arith.addf %219, %220 : vector<16x16xf32>
    %222 = vector.extract_strided_slice %216 {offsets = [0, 48], sizes = [16, 16], strides = [1, 1]} : vector<16x64xf32> to vector<16x16xf32>
    %223 = arith.addf %221, %222 : vector<16x16xf32>
    %224 = tpu.concatenate %97, %139, %181, %223 in 1 : vector<16x16xf32>, vector<16x16xf32>, vector<16x16xf32>, vector<16x16xf32> -> vector<16x64xf32>
    %c0_63 = arith.constant 0 : index
    %c0_64 = arith.constant 0 : index
    %225 = vector.load %arg10[%c0_63, %c0_64] : memref<1x64xf32, #tpu.memory_space<vmem>>, vector<1x64xf32>
    %226 = vector.broadcast %225 : vector<1x64xf32> to vector<16x64xf32>
    %227 = arith.addf %224, %226 : vector<16x64xf32>
    %cst_65 = arith.constant 0.000000e+00 : f32
    %228 = vector.broadcast %cst_65 : f32 to vector<16x64xf32>
    %229 = arith.maximumf %227, %228 : vector<16x64xf32>
    %c1_i32_66 = arith.constant 1 : i32
    %230 = tpu.dynamic_rotate %229 by %c1_i32_66 dim 0 : vector<16x64xf32>, i32 -> vector<16x64xf32>
    %cst_67 = arith.constant 0.000000e+00 : f32
    %231 = vector.broadcast %cst_67 : f32 to vector<16x64xf32>
    %232 = arith.select %19, %231, %230 : vector<16x64xi1>, vector<16x64xf32>
    %c15_i32_68 = arith.constant 15 : i32
    %233 = tpu.dynamic_rotate %229 by %c15_i32_68 dim 0 : vector<16x64xf32>, i32 -> vector<16x64xf32>
    %cst_69 = arith.constant 0.000000e+00 : f32
    %234 = vector.broadcast %cst_69 : f32 to vector<16x64xf32>
    %235 = arith.select %21, %234, %233 : vector<16x64xi1>, vector<16x64xf32>
    %c1_i32_70 = arith.constant 1 : i32
    %236 = tpu.dynamic_rotate %232 by %c1_i32_70 dim 1 : vector<16x64xf32>, i32 -> vector<16x64xf32>
    %cst_71 = arith.constant 0.000000e+00 : f32
    %237 = vector.broadcast %cst_71 : f32 to vector<16x64xf32>
    %238 = arith.select %23, %237, %236 : vector<16x64xi1>, vector<16x64xf32>
    %c63_i32_72 = arith.constant 63 : i32
    %239 = tpu.dynamic_rotate %232 by %c63_i32_72 dim 1 : vector<16x64xf32>, i32 -> vector<16x64xf32>
    %cst_73 = arith.constant 0.000000e+00 : f32
    %240 = vector.broadcast %cst_73 : f32 to vector<16x64xf32>
    %241 = arith.select %25, %240, %239 : vector<16x64xi1>, vector<16x64xf32>
    %c1_i32_74 = arith.constant 1 : i32
    %242 = tpu.dynamic_rotate %229 by %c1_i32_74 dim 1 : vector<16x64xf32>, i32 -> vector<16x64xf32>
    %cst_75 = arith.constant 0.000000e+00 : f32
    %243 = vector.broadcast %cst_75 : f32 to vector<16x64xf32>
    %244 = arith.select %23, %243, %242 : vector<16x64xi1>, vector<16x64xf32>
    %c63_i32_76 = arith.constant 63 : i32
    %245 = tpu.dynamic_rotate %229 by %c63_i32_76 dim 1 : vector<16x64xf32>, i32 -> vector<16x64xf32>
    %cst_77 = arith.constant 0.000000e+00 : f32
    %246 = vector.broadcast %cst_77 : f32 to vector<16x64xf32>
    %247 = arith.select %25, %246, %245 : vector<16x64xi1>, vector<16x64xf32>
    %c1_i32_78 = arith.constant 1 : i32
    %248 = tpu.dynamic_rotate %235 by %c1_i32_78 dim 1 : vector<16x64xf32>, i32 -> vector<16x64xf32>
    %cst_79 = arith.constant 0.000000e+00 : f32
    %249 = vector.broadcast %cst_79 : f32 to vector<16x64xf32>
    %250 = arith.select %23, %249, %248 : vector<16x64xi1>, vector<16x64xf32>
    %c63_i32_80 = arith.constant 63 : i32
    %251 = tpu.dynamic_rotate %235 by %c63_i32_80 dim 1 : vector<16x64xf32>, i32 -> vector<16x64xf32>
    %cst_81 = arith.constant 0.000000e+00 : f32
    %252 = vector.broadcast %cst_81 : f32 to vector<16x64xf32>
    %253 = arith.select %25, %252, %251 : vector<16x64xi1>, vector<16x64xf32>
    %c0_82 = arith.constant 0 : index
    %c0_83 = arith.constant 0 : index
    %254 = vector.load %arg6[%c0_82, %c0_83] : memref<36x64xf32, #tpu.memory_space<vmem>>, vector<1x64xf32>
    %255 = vector.broadcast %254 : vector<1x64xf32> to vector<16x64xf32>
    %256 = arith.mulf %255, %238 : vector<16x64xf32>
    %c4_84 = arith.constant 4 : index
    %c0_85 = arith.constant 0 : index
    %257 = vector.load %arg6[%c4_84, %c0_85] : memref<36x64xf32, #tpu.memory_space<vmem>>, vector<1x64xf32>
    %258 = vector.broadcast %257 : vector<1x64xf32> to vector<16x64xf32>
    %259 = arith.mulf %258, %232 : vector<16x64xf32>
    %260 = arith.addf %256, %259 : vector<16x64xf32>
    %c8_86 = arith.constant 8 : index
    %c0_87 = arith.constant 0 : index
    %261 = vector.load %arg6[%c8_86, %c0_87] : memref<36x64xf32, #tpu.memory_space<vmem>>, vector<1x64xf32>
    %262 = vector.broadcast %261 : vector<1x64xf32> to vector<16x64xf32>
    %263 = arith.mulf %262, %241 : vector<16x64xf32>
    %264 = arith.addf %260, %263 : vector<16x64xf32>
    %c12_88 = arith.constant 12 : index
    %c0_89 = arith.constant 0 : index
    %265 = vector.load %arg6[%c12_88, %c0_89] : memref<36x64xf32, #tpu.memory_space<vmem>>, vector<1x64xf32>
    %266 = vector.broadcast %265 : vector<1x64xf32> to vector<16x64xf32>
    %267 = arith.mulf %266, %244 : vector<16x64xf32>
    %268 = arith.addf %264, %267 : vector<16x64xf32>
    %c16_90 = arith.constant 16 : index
    %c0_91 = arith.constant 0 : index
    %269 = vector.load %arg6[%c16_90, %c0_91] : memref<36x64xf32, #tpu.memory_space<vmem>>, vector<1x64xf32>
    %270 = vector.broadcast %269 : vector<1x64xf32> to vector<16x64xf32>
    %271 = arith.mulf %270, %229 : vector<16x64xf32>
    %272 = arith.addf %268, %271 : vector<16x64xf32>
    %c20_92 = arith.constant 20 : index
    %c0_93 = arith.constant 0 : index
    %273 = vector.load %arg6[%c20_92, %c0_93] : memref<36x64xf32, #tpu.memory_space<vmem>>, vector<1x64xf32>
    %274 = vector.broadcast %273 : vector<1x64xf32> to vector<16x64xf32>
    %275 = arith.mulf %274, %247 : vector<16x64xf32>
    %276 = arith.addf %272, %275 : vector<16x64xf32>
    %c24_94 = arith.constant 24 : index
    %c0_95 = arith.constant 0 : index
    %277 = vector.load %arg6[%c24_94, %c0_95] : memref<36x64xf32, #tpu.memory_space<vmem>>, vector<1x64xf32>
    %278 = vector.broadcast %277 : vector<1x64xf32> to vector<16x64xf32>
    %279 = arith.mulf %278, %250 : vector<16x64xf32>
    %280 = arith.addf %276, %279 : vector<16x64xf32>
    %c28_96 = arith.constant 28 : index
    %c0_97 = arith.constant 0 : index
    %281 = vector.load %arg6[%c28_96, %c0_97] : memref<36x64xf32, #tpu.memory_space<vmem>>, vector<1x64xf32>
    %282 = vector.broadcast %281 : vector<1x64xf32> to vector<16x64xf32>
    %283 = arith.mulf %282, %235 : vector<16x64xf32>
    %284 = arith.addf %280, %283 : vector<16x64xf32>
    %c32_98 = arith.constant 32 : index
    %c0_99 = arith.constant 0 : index
    %285 = vector.load %arg6[%c32_98, %c0_99] : memref<36x64xf32, #tpu.memory_space<vmem>>, vector<1x64xf32>
    %286 = vector.broadcast %285 : vector<1x64xf32> to vector<16x64xf32>
    %287 = arith.mulf %286, %253 : vector<16x64xf32>
    %288 = arith.addf %284, %287 : vector<16x64xf32>
    %289 = vector.extract_strided_slice %288 {offsets = [0, 0], sizes = [16, 16], strides = [1, 1]} : vector<16x64xf32> to vector<16x16xf32>
    %290 = vector.extract_strided_slice %288 {offsets = [0, 16], sizes = [16, 16], strides = [1, 1]} : vector<16x64xf32> to vector<16x16xf32>
    %291 = arith.addf %289, %290 : vector<16x16xf32>
    %292 = vector.extract_strided_slice %288 {offsets = [0, 32], sizes = [16, 16], strides = [1, 1]} : vector<16x64xf32> to vector<16x16xf32>
    %293 = arith.addf %291, %292 : vector<16x16xf32>
    %294 = vector.extract_strided_slice %288 {offsets = [0, 48], sizes = [16, 16], strides = [1, 1]} : vector<16x64xf32> to vector<16x16xf32>
    %295 = arith.addf %293, %294 : vector<16x16xf32>
    %c1_100 = arith.constant 1 : index
    %c0_101 = arith.constant 0 : index
    %296 = vector.load %arg6[%c1_100, %c0_101] : memref<36x64xf32, #tpu.memory_space<vmem>>, vector<1x64xf32>
    %297 = vector.broadcast %296 : vector<1x64xf32> to vector<16x64xf32>
    %298 = arith.mulf %297, %238 : vector<16x64xf32>
    %c5_102 = arith.constant 5 : index
    %c0_103 = arith.constant 0 : index
    %299 = vector.load %arg6[%c5_102, %c0_103] : memref<36x64xf32, #tpu.memory_space<vmem>>, vector<1x64xf32>
    %300 = vector.broadcast %299 : vector<1x64xf32> to vector<16x64xf32>
    %301 = arith.mulf %300, %232 : vector<16x64xf32>
    %302 = arith.addf %298, %301 : vector<16x64xf32>
    %c9_104 = arith.constant 9 : index
    %c0_105 = arith.constant 0 : index
    %303 = vector.load %arg6[%c9_104, %c0_105] : memref<36x64xf32, #tpu.memory_space<vmem>>, vector<1x64xf32>
    %304 = vector.broadcast %303 : vector<1x64xf32> to vector<16x64xf32>
    %305 = arith.mulf %304, %241 : vector<16x64xf32>
    %306 = arith.addf %302, %305 : vector<16x64xf32>
    %c13_106 = arith.constant 13 : index
    %c0_107 = arith.constant 0 : index
    %307 = vector.load %arg6[%c13_106, %c0_107] : memref<36x64xf32, #tpu.memory_space<vmem>>, vector<1x64xf32>
    %308 = vector.broadcast %307 : vector<1x64xf32> to vector<16x64xf32>
    %309 = arith.mulf %308, %244 : vector<16x64xf32>
    %310 = arith.addf %306, %309 : vector<16x64xf32>
    %c17_108 = arith.constant 17 : index
    %c0_109 = arith.constant 0 : index
    %311 = vector.load %arg6[%c17_108, %c0_109] : memref<36x64xf32, #tpu.memory_space<vmem>>, vector<1x64xf32>
    %312 = vector.broadcast %311 : vector<1x64xf32> to vector<16x64xf32>
    %313 = arith.mulf %312, %229 : vector<16x64xf32>
    %314 = arith.addf %310, %313 : vector<16x64xf32>
    %c21_110 = arith.constant 21 : index
    %c0_111 = arith.constant 0 : index
    %315 = vector.load %arg6[%c21_110, %c0_111] : memref<36x64xf32, #tpu.memory_space<vmem>>, vector<1x64xf32>
    %316 = vector.broadcast %315 : vector<1x64xf32> to vector<16x64xf32>
    %317 = arith.mulf %316, %247 : vector<16x64xf32>
    %318 = arith.addf %314, %317 : vector<16x64xf32>
    %c25_112 = arith.constant 25 : index
    %c0_113 = arith.constant 0 : index
    %319 = vector.load %arg6[%c25_112, %c0_113] : memref<36x64xf32, #tpu.memory_space<vmem>>, vector<1x64xf32>
    %320 = vector.broadcast %319 : vector<1x64xf32> to vector<16x64xf32>
    %321 = arith.mulf %320, %250 : vector<16x64xf32>
    %322 = arith.addf %318, %321 : vector<16x64xf32>
    %c29_114 = arith.constant 29 : index
    %c0_115 = arith.constant 0 : index
    %323 = vector.load %arg6[%c29_114, %c0_115] : memref<36x64xf32, #tpu.memory_space<vmem>>, vector<1x64xf32>
    %324 = vector.broadcast %323 : vector<1x64xf32> to vector<16x64xf32>
    %325 = arith.mulf %324, %235 : vector<16x64xf32>
    %326 = arith.addf %322, %325 : vector<16x64xf32>
    %c33_116 = arith.constant 33 : index
    %c0_117 = arith.constant 0 : index
    %327 = vector.load %arg6[%c33_116, %c0_117] : memref<36x64xf32, #tpu.memory_space<vmem>>, vector<1x64xf32>
    %328 = vector.broadcast %327 : vector<1x64xf32> to vector<16x64xf32>
    %329 = arith.mulf %328, %253 : vector<16x64xf32>
    %330 = arith.addf %326, %329 : vector<16x64xf32>
    %331 = vector.extract_strided_slice %330 {offsets = [0, 0], sizes = [16, 16], strides = [1, 1]} : vector<16x64xf32> to vector<16x16xf32>
    %332 = vector.extract_strided_slice %330 {offsets = [0, 16], sizes = [16, 16], strides = [1, 1]} : vector<16x64xf32> to vector<16x16xf32>
    %333 = arith.addf %331, %332 : vector<16x16xf32>
    %334 = vector.extract_strided_slice %330 {offsets = [0, 32], sizes = [16, 16], strides = [1, 1]} : vector<16x64xf32> to vector<16x16xf32>
    %335 = arith.addf %333, %334 : vector<16x16xf32>
    %336 = vector.extract_strided_slice %330 {offsets = [0, 48], sizes = [16, 16], strides = [1, 1]} : vector<16x64xf32> to vector<16x16xf32>
    %337 = arith.addf %335, %336 : vector<16x16xf32>
    %c2_118 = arith.constant 2 : index
    %c0_119 = arith.constant 0 : index
    %338 = vector.load %arg6[%c2_118, %c0_119] : memref<36x64xf32, #tpu.memory_space<vmem>>, vector<1x64xf32>
    %339 = vector.broadcast %338 : vector<1x64xf32> to vector<16x64xf32>
    %340 = arith.mulf %339, %238 : vector<16x64xf32>
    %c6_120 = arith.constant 6 : index
    %c0_121 = arith.constant 0 : index
    %341 = vector.load %arg6[%c6_120, %c0_121] : memref<36x64xf32, #tpu.memory_space<vmem>>, vector<1x64xf32>
    %342 = vector.broadcast %341 : vector<1x64xf32> to vector<16x64xf32>
    %343 = arith.mulf %342, %232 : vector<16x64xf32>
    %344 = arith.addf %340, %343 : vector<16x64xf32>
    %c10_122 = arith.constant 10 : index
    %c0_123 = arith.constant 0 : index
    %345 = vector.load %arg6[%c10_122, %c0_123] : memref<36x64xf32, #tpu.memory_space<vmem>>, vector<1x64xf32>
    %346 = vector.broadcast %345 : vector<1x64xf32> to vector<16x64xf32>
    %347 = arith.mulf %346, %241 : vector<16x64xf32>
    %348 = arith.addf %344, %347 : vector<16x64xf32>
    %c14_124 = arith.constant 14 : index
    %c0_125 = arith.constant 0 : index
    %349 = vector.load %arg6[%c14_124, %c0_125] : memref<36x64xf32, #tpu.memory_space<vmem>>, vector<1x64xf32>
    %350 = vector.broadcast %349 : vector<1x64xf32> to vector<16x64xf32>
    %351 = arith.mulf %350, %244 : vector<16x64xf32>
    %352 = arith.addf %348, %351 : vector<16x64xf32>
    %c18_126 = arith.constant 18 : index
    %c0_127 = arith.constant 0 : index
    %353 = vector.load %arg6[%c18_126, %c0_127] : memref<36x64xf32, #tpu.memory_space<vmem>>, vector<1x64xf32>
    %354 = vector.broadcast %353 : vector<1x64xf32> to vector<16x64xf32>
    %355 = arith.mulf %354, %229 : vector<16x64xf32>
    %356 = arith.addf %352, %355 : vector<16x64xf32>
    %c22_128 = arith.constant 22 : index
    %c0_129 = arith.constant 0 : index
    %357 = vector.load %arg6[%c22_128, %c0_129] : memref<36x64xf32, #tpu.memory_space<vmem>>, vector<1x64xf32>
    %358 = vector.broadcast %357 : vector<1x64xf32> to vector<16x64xf32>
    %359 = arith.mulf %358, %247 : vector<16x64xf32>
    %360 = arith.addf %356, %359 : vector<16x64xf32>
    %c26_130 = arith.constant 26 : index
    %c0_131 = arith.constant 0 : index
    %361 = vector.load %arg6[%c26_130, %c0_131] : memref<36x64xf32, #tpu.memory_space<vmem>>, vector<1x64xf32>
    %362 = vector.broadcast %361 : vector<1x64xf32> to vector<16x64xf32>
    %363 = arith.mulf %362, %250 : vector<16x64xf32>
    %364 = arith.addf %360, %363 : vector<16x64xf32>
    %c30_132 = arith.constant 30 : index
    %c0_133 = arith.constant 0 : index
    %365 = vector.load %arg6[%c30_132, %c0_133] : memref<36x64xf32, #tpu.memory_space<vmem>>, vector<1x64xf32>
    %366 = vector.broadcast %365 : vector<1x64xf32> to vector<16x64xf32>
    %367 = arith.mulf %366, %235 : vector<16x64xf32>
    %368 = arith.addf %364, %367 : vector<16x64xf32>
    %c34_134 = arith.constant 34 : index
    %c0_135 = arith.constant 0 : index
    %369 = vector.load %arg6[%c34_134, %c0_135] : memref<36x64xf32, #tpu.memory_space<vmem>>, vector<1x64xf32>
    %370 = vector.broadcast %369 : vector<1x64xf32> to vector<16x64xf32>
    %371 = arith.mulf %370, %253 : vector<16x64xf32>
    %372 = arith.addf %368, %371 : vector<16x64xf32>
    %373 = vector.extract_strided_slice %372 {offsets = [0, 0], sizes = [16, 16], strides = [1, 1]} : vector<16x64xf32> to vector<16x16xf32>
    %374 = vector.extract_strided_slice %372 {offsets = [0, 16], sizes = [16, 16], strides = [1, 1]} : vector<16x64xf32> to vector<16x16xf32>
    %375 = arith.addf %373, %374 : vector<16x16xf32>
    %376 = vector.extract_strided_slice %372 {offsets = [0, 32], sizes = [16, 16], strides = [1, 1]} : vector<16x64xf32> to vector<16x16xf32>
    %377 = arith.addf %375, %376 : vector<16x16xf32>
    %378 = vector.extract_strided_slice %372 {offsets = [0, 48], sizes = [16, 16], strides = [1, 1]} : vector<16x64xf32> to vector<16x16xf32>
    %379 = arith.addf %377, %378 : vector<16x16xf32>
    %c3_136 = arith.constant 3 : index
    %c0_137 = arith.constant 0 : index
    %380 = vector.load %arg6[%c3_136, %c0_137] : memref<36x64xf32, #tpu.memory_space<vmem>>, vector<1x64xf32>
    %381 = vector.broadcast %380 : vector<1x64xf32> to vector<16x64xf32>
    %382 = arith.mulf %381, %238 : vector<16x64xf32>
    %c7_138 = arith.constant 7 : index
    %c0_139 = arith.constant 0 : index
    %383 = vector.load %arg6[%c7_138, %c0_139] : memref<36x64xf32, #tpu.memory_space<vmem>>, vector<1x64xf32>
    %384 = vector.broadcast %383 : vector<1x64xf32> to vector<16x64xf32>
    %385 = arith.mulf %384, %232 : vector<16x64xf32>
    %386 = arith.addf %382, %385 : vector<16x64xf32>
    %c11_140 = arith.constant 11 : index
    %c0_141 = arith.constant 0 : index
    %387 = vector.load %arg6[%c11_140, %c0_141] : memref<36x64xf32, #tpu.memory_space<vmem>>, vector<1x64xf32>
    %388 = vector.broadcast %387 : vector<1x64xf32> to vector<16x64xf32>
    %389 = arith.mulf %388, %241 : vector<16x64xf32>
    %390 = arith.addf %386, %389 : vector<16x64xf32>
    %c15_142 = arith.constant 15 : index
    %c0_143 = arith.constant 0 : index
    %391 = vector.load %arg6[%c15_142, %c0_143] : memref<36x64xf32, #tpu.memory_space<vmem>>, vector<1x64xf32>
    %392 = vector.broadcast %391 : vector<1x64xf32> to vector<16x64xf32>
    %393 = arith.mulf %392, %244 : vector<16x64xf32>
    %394 = arith.addf %390, %393 : vector<16x64xf32>
    %c19_144 = arith.constant 19 : index
    %c0_145 = arith.constant 0 : index
    %395 = vector.load %arg6[%c19_144, %c0_145] : memref<36x64xf32, #tpu.memory_space<vmem>>, vector<1x64xf32>
    %396 = vector.broadcast %395 : vector<1x64xf32> to vector<16x64xf32>
    %397 = arith.mulf %396, %229 : vector<16x64xf32>
    %398 = arith.addf %394, %397 : vector<16x64xf32>
    %c23_146 = arith.constant 23 : index
    %c0_147 = arith.constant 0 : index
    %399 = vector.load %arg6[%c23_146, %c0_147] : memref<36x64xf32, #tpu.memory_space<vmem>>, vector<1x64xf32>
    %400 = vector.broadcast %399 : vector<1x64xf32> to vector<16x64xf32>
    %401 = arith.mulf %400, %247 : vector<16x64xf32>
    %402 = arith.addf %398, %401 : vector<16x64xf32>
    %c27_148 = arith.constant 27 : index
    %c0_149 = arith.constant 0 : index
    %403 = vector.load %arg6[%c27_148, %c0_149] : memref<36x64xf32, #tpu.memory_space<vmem>>, vector<1x64xf32>
    %404 = vector.broadcast %403 : vector<1x64xf32> to vector<16x64xf32>
    %405 = arith.mulf %404, %250 : vector<16x64xf32>
    %406 = arith.addf %402, %405 : vector<16x64xf32>
    %c31_150 = arith.constant 31 : index
    %c0_151 = arith.constant 0 : index
    %407 = vector.load %arg6[%c31_150, %c0_151] : memref<36x64xf32, #tpu.memory_space<vmem>>, vector<1x64xf32>
    %408 = vector.broadcast %407 : vector<1x64xf32> to vector<16x64xf32>
    %409 = arith.mulf %408, %235 : vector<16x64xf32>
    %410 = arith.addf %406, %409 : vector<16x64xf32>
    %c35_152 = arith.constant 35 : index
    %c0_153 = arith.constant 0 : index
    %411 = vector.load %arg6[%c35_152, %c0_153] : memref<36x64xf32, #tpu.memory_space<vmem>>, vector<1x64xf32>
    %412 = vector.broadcast %411 : vector<1x64xf32> to vector<16x64xf32>
    %413 = arith.mulf %412, %253 : vector<16x64xf32>
    %414 = arith.addf %410, %413 : vector<16x64xf32>
    %415 = vector.extract_strided_slice %414 {offsets = [0, 0], sizes = [16, 16], strides = [1, 1]} : vector<16x64xf32> to vector<16x16xf32>
    %416 = vector.extract_strided_slice %414 {offsets = [0, 16], sizes = [16, 16], strides = [1, 1]} : vector<16x64xf32> to vector<16x16xf32>
    %417 = arith.addf %415, %416 : vector<16x16xf32>
    %418 = vector.extract_strided_slice %414 {offsets = [0, 32], sizes = [16, 16], strides = [1, 1]} : vector<16x64xf32> to vector<16x16xf32>
    %419 = arith.addf %417, %418 : vector<16x16xf32>
    %420 = vector.extract_strided_slice %414 {offsets = [0, 48], sizes = [16, 16], strides = [1, 1]} : vector<16x64xf32> to vector<16x16xf32>
    %421 = arith.addf %419, %420 : vector<16x16xf32>
    %422 = tpu.concatenate %295, %337, %379, %421 in 1 : vector<16x16xf32>, vector<16x16xf32>, vector<16x16xf32>, vector<16x16xf32> -> vector<16x64xf32>
    %c0_154 = arith.constant 0 : index
    %c0_155 = arith.constant 0 : index
    %423 = vector.load %arg11[%c0_154, %c0_155] : memref<1x64xf32, #tpu.memory_space<vmem>>, vector<1x64xf32>
    %424 = vector.broadcast %423 : vector<1x64xf32> to vector<16x64xf32>
    %425 = arith.addf %422, %424 : vector<16x64xf32>
    %426 = arith.addf %425, %29 : vector<16x64xf32>
    %427 = arith.addf %27, %426 : vector<16x64xf32>
    %cst_156 = arith.constant 0.000000e+00 : f32
    %428 = vector.broadcast %cst_156 : f32 to vector<16x64xf32>
    %429 = arith.maximumf %427, %428 : vector<16x64xf32>
    %c1_i32_157 = arith.constant 1 : i32
    %430 = tpu.dynamic_rotate %429 by %c1_i32_157 dim 0 : vector<16x64xf32>, i32 -> vector<16x64xf32>
    %cst_158 = arith.constant 0.000000e+00 : f32
    %431 = vector.broadcast %cst_158 : f32 to vector<16x64xf32>
    %432 = arith.select %19, %431, %430 : vector<16x64xi1>, vector<16x64xf32>
    %c15_i32_159 = arith.constant 15 : i32
    %433 = tpu.dynamic_rotate %429 by %c15_i32_159 dim 0 : vector<16x64xf32>, i32 -> vector<16x64xf32>
    %cst_160 = arith.constant 0.000000e+00 : f32
    %434 = vector.broadcast %cst_160 : f32 to vector<16x64xf32>
    %435 = arith.select %21, %434, %433 : vector<16x64xi1>, vector<16x64xf32>
    %c1_i32_161 = arith.constant 1 : i32
    %436 = tpu.dynamic_rotate %432 by %c1_i32_161 dim 1 : vector<16x64xf32>, i32 -> vector<16x64xf32>
    %cst_162 = arith.constant 0.000000e+00 : f32
    %437 = vector.broadcast %cst_162 : f32 to vector<16x64xf32>
    %438 = arith.select %23, %437, %436 : vector<16x64xi1>, vector<16x64xf32>
    %c63_i32_163 = arith.constant 63 : i32
    %439 = tpu.dynamic_rotate %432 by %c63_i32_163 dim 1 : vector<16x64xf32>, i32 -> vector<16x64xf32>
    %cst_164 = arith.constant 0.000000e+00 : f32
    %440 = vector.broadcast %cst_164 : f32 to vector<16x64xf32>
    %441 = arith.select %25, %440, %439 : vector<16x64xi1>, vector<16x64xf32>
    %c1_i32_165 = arith.constant 1 : i32
    %442 = tpu.dynamic_rotate %429 by %c1_i32_165 dim 1 : vector<16x64xf32>, i32 -> vector<16x64xf32>
    %cst_166 = arith.constant 0.000000e+00 : f32
    %443 = vector.broadcast %cst_166 : f32 to vector<16x64xf32>
    %444 = arith.select %23, %443, %442 : vector<16x64xi1>, vector<16x64xf32>
    %c63_i32_167 = arith.constant 63 : i32
    %445 = tpu.dynamic_rotate %429 by %c63_i32_167 dim 1 : vector<16x64xf32>, i32 -> vector<16x64xf32>
    %cst_168 = arith.constant 0.000000e+00 : f32
    %446 = vector.broadcast %cst_168 : f32 to vector<16x64xf32>
    %447 = arith.select %25, %446, %445 : vector<16x64xi1>, vector<16x64xf32>
    %c1_i32_169 = arith.constant 1 : i32
    %448 = tpu.dynamic_rotate %435 by %c1_i32_169 dim 1 : vector<16x64xf32>, i32 -> vector<16x64xf32>
    %cst_170 = arith.constant 0.000000e+00 : f32
    %449 = vector.broadcast %cst_170 : f32 to vector<16x64xf32>
    %450 = arith.select %23, %449, %448 : vector<16x64xi1>, vector<16x64xf32>
    %c63_i32_171 = arith.constant 63 : i32
    %451 = tpu.dynamic_rotate %435 by %c63_i32_171 dim 1 : vector<16x64xf32>, i32 -> vector<16x64xf32>
    %cst_172 = arith.constant 0.000000e+00 : f32
    %452 = vector.broadcast %cst_172 : f32 to vector<16x64xf32>
    %453 = arith.select %25, %452, %451 : vector<16x64xi1>, vector<16x64xf32>
    %c0_173 = arith.constant 0 : index
    %c0_174 = arith.constant 0 : index
    %454 = vector.load %arg7[%c0_173, %c0_174] : memref<36x64xf32, #tpu.memory_space<vmem>>, vector<1x64xf32>
    %455 = vector.broadcast %454 : vector<1x64xf32> to vector<16x64xf32>
    %456 = arith.mulf %455, %438 : vector<16x64xf32>
    %c4_175 = arith.constant 4 : index
    %c0_176 = arith.constant 0 : index
    %457 = vector.load %arg7[%c4_175, %c0_176] : memref<36x64xf32, #tpu.memory_space<vmem>>, vector<1x64xf32>
    %458 = vector.broadcast %457 : vector<1x64xf32> to vector<16x64xf32>
    %459 = arith.mulf %458, %432 : vector<16x64xf32>
    %460 = arith.addf %456, %459 : vector<16x64xf32>
    %c8_177 = arith.constant 8 : index
    %c0_178 = arith.constant 0 : index
    %461 = vector.load %arg7[%c8_177, %c0_178] : memref<36x64xf32, #tpu.memory_space<vmem>>, vector<1x64xf32>
    %462 = vector.broadcast %461 : vector<1x64xf32> to vector<16x64xf32>
    %463 = arith.mulf %462, %441 : vector<16x64xf32>
    %464 = arith.addf %460, %463 : vector<16x64xf32>
    %c12_179 = arith.constant 12 : index
    %c0_180 = arith.constant 0 : index
    %465 = vector.load %arg7[%c12_179, %c0_180] : memref<36x64xf32, #tpu.memory_space<vmem>>, vector<1x64xf32>
    %466 = vector.broadcast %465 : vector<1x64xf32> to vector<16x64xf32>
    %467 = arith.mulf %466, %444 : vector<16x64xf32>
    %468 = arith.addf %464, %467 : vector<16x64xf32>
    %c16_181 = arith.constant 16 : index
    %c0_182 = arith.constant 0 : index
    %469 = vector.load %arg7[%c16_181, %c0_182] : memref<36x64xf32, #tpu.memory_space<vmem>>, vector<1x64xf32>
    %470 = vector.broadcast %469 : vector<1x64xf32> to vector<16x64xf32>
    %471 = arith.mulf %470, %429 : vector<16x64xf32>
    %472 = arith.addf %468, %471 : vector<16x64xf32>
    %c20_183 = arith.constant 20 : index
    %c0_184 = arith.constant 0 : index
    %473 = vector.load %arg7[%c20_183, %c0_184] : memref<36x64xf32, #tpu.memory_space<vmem>>, vector<1x64xf32>
    %474 = vector.broadcast %473 : vector<1x64xf32> to vector<16x64xf32>
    %475 = arith.mulf %474, %447 : vector<16x64xf32>
    %476 = arith.addf %472, %475 : vector<16x64xf32>
    %c24_185 = arith.constant 24 : index
    %c0_186 = arith.constant 0 : index
    %477 = vector.load %arg7[%c24_185, %c0_186] : memref<36x64xf32, #tpu.memory_space<vmem>>, vector<1x64xf32>
    %478 = vector.broadcast %477 : vector<1x64xf32> to vector<16x64xf32>
    %479 = arith.mulf %478, %450 : vector<16x64xf32>
    %480 = arith.addf %476, %479 : vector<16x64xf32>
    %c28_187 = arith.constant 28 : index
    %c0_188 = arith.constant 0 : index
    %481 = vector.load %arg7[%c28_187, %c0_188] : memref<36x64xf32, #tpu.memory_space<vmem>>, vector<1x64xf32>
    %482 = vector.broadcast %481 : vector<1x64xf32> to vector<16x64xf32>
    %483 = arith.mulf %482, %435 : vector<16x64xf32>
    %484 = arith.addf %480, %483 : vector<16x64xf32>
    %c32_189 = arith.constant 32 : index
    %c0_190 = arith.constant 0 : index
    %485 = vector.load %arg7[%c32_189, %c0_190] : memref<36x64xf32, #tpu.memory_space<vmem>>, vector<1x64xf32>
    %486 = vector.broadcast %485 : vector<1x64xf32> to vector<16x64xf32>
    %487 = arith.mulf %486, %453 : vector<16x64xf32>
    %488 = arith.addf %484, %487 : vector<16x64xf32>
    %489 = vector.extract_strided_slice %488 {offsets = [0, 0], sizes = [16, 16], strides = [1, 1]} : vector<16x64xf32> to vector<16x16xf32>
    %490 = vector.extract_strided_slice %488 {offsets = [0, 16], sizes = [16, 16], strides = [1, 1]} : vector<16x64xf32> to vector<16x16xf32>
    %491 = arith.addf %489, %490 : vector<16x16xf32>
    %492 = vector.extract_strided_slice %488 {offsets = [0, 32], sizes = [16, 16], strides = [1, 1]} : vector<16x64xf32> to vector<16x16xf32>
    %493 = arith.addf %491, %492 : vector<16x16xf32>
    %494 = vector.extract_strided_slice %488 {offsets = [0, 48], sizes = [16, 16], strides = [1, 1]} : vector<16x64xf32> to vector<16x16xf32>
    %495 = arith.addf %493, %494 : vector<16x16xf32>
    %c1_191 = arith.constant 1 : index
    %c0_192 = arith.constant 0 : index
    %496 = vector.load %arg7[%c1_191, %c0_192] : memref<36x64xf32, #tpu.memory_space<vmem>>, vector<1x64xf32>
    %497 = vector.broadcast %496 : vector<1x64xf32> to vector<16x64xf32>
    %498 = arith.mulf %497, %438 : vector<16x64xf32>
    %c5_193 = arith.constant 5 : index
    %c0_194 = arith.constant 0 : index
    %499 = vector.load %arg7[%c5_193, %c0_194] : memref<36x64xf32, #tpu.memory_space<vmem>>, vector<1x64xf32>
    %500 = vector.broadcast %499 : vector<1x64xf32> to vector<16x64xf32>
    %501 = arith.mulf %500, %432 : vector<16x64xf32>
    %502 = arith.addf %498, %501 : vector<16x64xf32>
    %c9_195 = arith.constant 9 : index
    %c0_196 = arith.constant 0 : index
    %503 = vector.load %arg7[%c9_195, %c0_196] : memref<36x64xf32, #tpu.memory_space<vmem>>, vector<1x64xf32>
    %504 = vector.broadcast %503 : vector<1x64xf32> to vector<16x64xf32>
    %505 = arith.mulf %504, %441 : vector<16x64xf32>
    %506 = arith.addf %502, %505 : vector<16x64xf32>
    %c13_197 = arith.constant 13 : index
    %c0_198 = arith.constant 0 : index
    %507 = vector.load %arg7[%c13_197, %c0_198] : memref<36x64xf32, #tpu.memory_space<vmem>>, vector<1x64xf32>
    %508 = vector.broadcast %507 : vector<1x64xf32> to vector<16x64xf32>
    %509 = arith.mulf %508, %444 : vector<16x64xf32>
    %510 = arith.addf %506, %509 : vector<16x64xf32>
    %c17_199 = arith.constant 17 : index
    %c0_200 = arith.constant 0 : index
    %511 = vector.load %arg7[%c17_199, %c0_200] : memref<36x64xf32, #tpu.memory_space<vmem>>, vector<1x64xf32>
    %512 = vector.broadcast %511 : vector<1x64xf32> to vector<16x64xf32>
    %513 = arith.mulf %512, %429 : vector<16x64xf32>
    %514 = arith.addf %510, %513 : vector<16x64xf32>
    %c21_201 = arith.constant 21 : index
    %c0_202 = arith.constant 0 : index
    %515 = vector.load %arg7[%c21_201, %c0_202] : memref<36x64xf32, #tpu.memory_space<vmem>>, vector<1x64xf32>
    %516 = vector.broadcast %515 : vector<1x64xf32> to vector<16x64xf32>
    %517 = arith.mulf %516, %447 : vector<16x64xf32>
    %518 = arith.addf %514, %517 : vector<16x64xf32>
    %c25_203 = arith.constant 25 : index
    %c0_204 = arith.constant 0 : index
    %519 = vector.load %arg7[%c25_203, %c0_204] : memref<36x64xf32, #tpu.memory_space<vmem>>, vector<1x64xf32>
    %520 = vector.broadcast %519 : vector<1x64xf32> to vector<16x64xf32>
    %521 = arith.mulf %520, %450 : vector<16x64xf32>
    %522 = arith.addf %518, %521 : vector<16x64xf32>
    %c29_205 = arith.constant 29 : index
    %c0_206 = arith.constant 0 : index
    %523 = vector.load %arg7[%c29_205, %c0_206] : memref<36x64xf32, #tpu.memory_space<vmem>>, vector<1x64xf32>
    %524 = vector.broadcast %523 : vector<1x64xf32> to vector<16x64xf32>
    %525 = arith.mulf %524, %435 : vector<16x64xf32>
    %526 = arith.addf %522, %525 : vector<16x64xf32>
    %c33_207 = arith.constant 33 : index
    %c0_208 = arith.constant 0 : index
    %527 = vector.load %arg7[%c33_207, %c0_208] : memref<36x64xf32, #tpu.memory_space<vmem>>, vector<1x64xf32>
    %528 = vector.broadcast %527 : vector<1x64xf32> to vector<16x64xf32>
    %529 = arith.mulf %528, %453 : vector<16x64xf32>
    %530 = arith.addf %526, %529 : vector<16x64xf32>
    %531 = vector.extract_strided_slice %530 {offsets = [0, 0], sizes = [16, 16], strides = [1, 1]} : vector<16x64xf32> to vector<16x16xf32>
    %532 = vector.extract_strided_slice %530 {offsets = [0, 16], sizes = [16, 16], strides = [1, 1]} : vector<16x64xf32> to vector<16x16xf32>
    %533 = arith.addf %531, %532 : vector<16x16xf32>
    %534 = vector.extract_strided_slice %530 {offsets = [0, 32], sizes = [16, 16], strides = [1, 1]} : vector<16x64xf32> to vector<16x16xf32>
    %535 = arith.addf %533, %534 : vector<16x16xf32>
    %536 = vector.extract_strided_slice %530 {offsets = [0, 48], sizes = [16, 16], strides = [1, 1]} : vector<16x64xf32> to vector<16x16xf32>
    %537 = arith.addf %535, %536 : vector<16x16xf32>
    %c2_209 = arith.constant 2 : index
    %c0_210 = arith.constant 0 : index
    %538 = vector.load %arg7[%c2_209, %c0_210] : memref<36x64xf32, #tpu.memory_space<vmem>>, vector<1x64xf32>
    %539 = vector.broadcast %538 : vector<1x64xf32> to vector<16x64xf32>
    %540 = arith.mulf %539, %438 : vector<16x64xf32>
    %c6_211 = arith.constant 6 : index
    %c0_212 = arith.constant 0 : index
    %541 = vector.load %arg7[%c6_211, %c0_212] : memref<36x64xf32, #tpu.memory_space<vmem>>, vector<1x64xf32>
    %542 = vector.broadcast %541 : vector<1x64xf32> to vector<16x64xf32>
    %543 = arith.mulf %542, %432 : vector<16x64xf32>
    %544 = arith.addf %540, %543 : vector<16x64xf32>
    %c10_213 = arith.constant 10 : index
    %c0_214 = arith.constant 0 : index
    %545 = vector.load %arg7[%c10_213, %c0_214] : memref<36x64xf32, #tpu.memory_space<vmem>>, vector<1x64xf32>
    %546 = vector.broadcast %545 : vector<1x64xf32> to vector<16x64xf32>
    %547 = arith.mulf %546, %441 : vector<16x64xf32>
    %548 = arith.addf %544, %547 : vector<16x64xf32>
    %c14_215 = arith.constant 14 : index
    %c0_216 = arith.constant 0 : index
    %549 = vector.load %arg7[%c14_215, %c0_216] : memref<36x64xf32, #tpu.memory_space<vmem>>, vector<1x64xf32>
    %550 = vector.broadcast %549 : vector<1x64xf32> to vector<16x64xf32>
    %551 = arith.mulf %550, %444 : vector<16x64xf32>
    %552 = arith.addf %548, %551 : vector<16x64xf32>
    %c18_217 = arith.constant 18 : index
    %c0_218 = arith.constant 0 : index
    %553 = vector.load %arg7[%c18_217, %c0_218] : memref<36x64xf32, #tpu.memory_space<vmem>>, vector<1x64xf32>
    %554 = vector.broadcast %553 : vector<1x64xf32> to vector<16x64xf32>
    %555 = arith.mulf %554, %429 : vector<16x64xf32>
    %556 = arith.addf %552, %555 : vector<16x64xf32>
    %c22_219 = arith.constant 22 : index
    %c0_220 = arith.constant 0 : index
    %557 = vector.load %arg7[%c22_219, %c0_220] : memref<36x64xf32, #tpu.memory_space<vmem>>, vector<1x64xf32>
    %558 = vector.broadcast %557 : vector<1x64xf32> to vector<16x64xf32>
    %559 = arith.mulf %558, %447 : vector<16x64xf32>
    %560 = arith.addf %556, %559 : vector<16x64xf32>
    %c26_221 = arith.constant 26 : index
    %c0_222 = arith.constant 0 : index
    %561 = vector.load %arg7[%c26_221, %c0_222] : memref<36x64xf32, #tpu.memory_space<vmem>>, vector<1x64xf32>
    %562 = vector.broadcast %561 : vector<1x64xf32> to vector<16x64xf32>
    %563 = arith.mulf %562, %450 : vector<16x64xf32>
    %564 = arith.addf %560, %563 : vector<16x64xf32>
    %c30_223 = arith.constant 30 : index
    %c0_224 = arith.constant 0 : index
    %565 = vector.load %arg7[%c30_223, %c0_224] : memref<36x64xf32, #tpu.memory_space<vmem>>, vector<1x64xf32>
    %566 = vector.broadcast %565 : vector<1x64xf32> to vector<16x64xf32>
    %567 = arith.mulf %566, %435 : vector<16x64xf32>
    %568 = arith.addf %564, %567 : vector<16x64xf32>
    %c34_225 = arith.constant 34 : index
    %c0_226 = arith.constant 0 : index
    %569 = vector.load %arg7[%c34_225, %c0_226] : memref<36x64xf32, #tpu.memory_space<vmem>>, vector<1x64xf32>
    %570 = vector.broadcast %569 : vector<1x64xf32> to vector<16x64xf32>
    %571 = arith.mulf %570, %453 : vector<16x64xf32>
    %572 = arith.addf %568, %571 : vector<16x64xf32>
    %573 = vector.extract_strided_slice %572 {offsets = [0, 0], sizes = [16, 16], strides = [1, 1]} : vector<16x64xf32> to vector<16x16xf32>
    %574 = vector.extract_strided_slice %572 {offsets = [0, 16], sizes = [16, 16], strides = [1, 1]} : vector<16x64xf32> to vector<16x16xf32>
    %575 = arith.addf %573, %574 : vector<16x16xf32>
    %576 = vector.extract_strided_slice %572 {offsets = [0, 32], sizes = [16, 16], strides = [1, 1]} : vector<16x64xf32> to vector<16x16xf32>
    %577 = arith.addf %575, %576 : vector<16x16xf32>
    %578 = vector.extract_strided_slice %572 {offsets = [0, 48], sizes = [16, 16], strides = [1, 1]} : vector<16x64xf32> to vector<16x16xf32>
    %579 = arith.addf %577, %578 : vector<16x16xf32>
    %c3_227 = arith.constant 3 : index
    %c0_228 = arith.constant 0 : index
    %580 = vector.load %arg7[%c3_227, %c0_228] : memref<36x64xf32, #tpu.memory_space<vmem>>, vector<1x64xf32>
    %581 = vector.broadcast %580 : vector<1x64xf32> to vector<16x64xf32>
    %582 = arith.mulf %581, %438 : vector<16x64xf32>
    %c7_229 = arith.constant 7 : index
    %c0_230 = arith.constant 0 : index
    %583 = vector.load %arg7[%c7_229, %c0_230] : memref<36x64xf32, #tpu.memory_space<vmem>>, vector<1x64xf32>
    %584 = vector.broadcast %583 : vector<1x64xf32> to vector<16x64xf32>
    %585 = arith.mulf %584, %432 : vector<16x64xf32>
    %586 = arith.addf %582, %585 : vector<16x64xf32>
    %c11_231 = arith.constant 11 : index
    %c0_232 = arith.constant 0 : index
    %587 = vector.load %arg7[%c11_231, %c0_232] : memref<36x64xf32, #tpu.memory_space<vmem>>, vector<1x64xf32>
    %588 = vector.broadcast %587 : vector<1x64xf32> to vector<16x64xf32>
    %589 = arith.mulf %588, %441 : vector<16x64xf32>
    %590 = arith.addf %586, %589 : vector<16x64xf32>
    %c15_233 = arith.constant 15 : index
    %c0_234 = arith.constant 0 : index
    %591 = vector.load %arg7[%c15_233, %c0_234] : memref<36x64xf32, #tpu.memory_space<vmem>>, vector<1x64xf32>
    %592 = vector.broadcast %591 : vector<1x64xf32> to vector<16x64xf32>
    %593 = arith.mulf %592, %444 : vector<16x64xf32>
    %594 = arith.addf %590, %593 : vector<16x64xf32>
    %c19_235 = arith.constant 19 : index
    %c0_236 = arith.constant 0 : index
    %595 = vector.load %arg7[%c19_235, %c0_236] : memref<36x64xf32, #tpu.memory_space<vmem>>, vector<1x64xf32>
    %596 = vector.broadcast %595 : vector<1x64xf32> to vector<16x64xf32>
    %597 = arith.mulf %596, %429 : vector<16x64xf32>
    %598 = arith.addf %594, %597 : vector<16x64xf32>
    %c23_237 = arith.constant 23 : index
    %c0_238 = arith.constant 0 : index
    %599 = vector.load %arg7[%c23_237, %c0_238] : memref<36x64xf32, #tpu.memory_space<vmem>>, vector<1x64xf32>
    %600 = vector.broadcast %599 : vector<1x64xf32> to vector<16x64xf32>
    %601 = arith.mulf %600, %447 : vector<16x64xf32>
    %602 = arith.addf %598, %601 : vector<16x64xf32>
    %c27_239 = arith.constant 27 : index
    %c0_240 = arith.constant 0 : index
    %603 = vector.load %arg7[%c27_239, %c0_240] : memref<36x64xf32, #tpu.memory_space<vmem>>, vector<1x64xf32>
    %604 = vector.broadcast %603 : vector<1x64xf32> to vector<16x64xf32>
    %605 = arith.mulf %604, %450 : vector<16x64xf32>
    %606 = arith.addf %602, %605 : vector<16x64xf32>
    %c31_241 = arith.constant 31 : index
    %c0_242 = arith.constant 0 : index
    %607 = vector.load %arg7[%c31_241, %c0_242] : memref<36x64xf32, #tpu.memory_space<vmem>>, vector<1x64xf32>
    %608 = vector.broadcast %607 : vector<1x64xf32> to vector<16x64xf32>
    %609 = arith.mulf %608, %435 : vector<16x64xf32>
    %610 = arith.addf %606, %609 : vector<16x64xf32>
    %c35_243 = arith.constant 35 : index
    %c0_244 = arith.constant 0 : index
    %611 = vector.load %arg7[%c35_243, %c0_244] : memref<36x64xf32, #tpu.memory_space<vmem>>, vector<1x64xf32>
    %612 = vector.broadcast %611 : vector<1x64xf32> to vector<16x64xf32>
    %613 = arith.mulf %612, %453 : vector<16x64xf32>
    %614 = arith.addf %610, %613 : vector<16x64xf32>
    %615 = vector.extract_strided_slice %614 {offsets = [0, 0], sizes = [16, 16], strides = [1, 1]} : vector<16x64xf32> to vector<16x16xf32>
    %616 = vector.extract_strided_slice %614 {offsets = [0, 16], sizes = [16, 16], strides = [1, 1]} : vector<16x64xf32> to vector<16x16xf32>
    %617 = arith.addf %615, %616 : vector<16x16xf32>
    %618 = vector.extract_strided_slice %614 {offsets = [0, 32], sizes = [16, 16], strides = [1, 1]} : vector<16x64xf32> to vector<16x16xf32>
    %619 = arith.addf %617, %618 : vector<16x16xf32>
    %620 = vector.extract_strided_slice %614 {offsets = [0, 48], sizes = [16, 16], strides = [1, 1]} : vector<16x64xf32> to vector<16x16xf32>
    %621 = arith.addf %619, %620 : vector<16x16xf32>
    %622 = tpu.concatenate %495, %537, %579, %621 in 1 : vector<16x16xf32>, vector<16x16xf32>, vector<16x16xf32>, vector<16x16xf32> -> vector<16x64xf32>
    %c0_245 = arith.constant 0 : index
    %c0_246 = arith.constant 0 : index
    %623 = vector.load %arg12[%c0_245, %c0_246] : memref<1x64xf32, #tpu.memory_space<vmem>>, vector<1x64xf32>
    %624 = vector.broadcast %623 : vector<1x64xf32> to vector<16x64xf32>
    %625 = arith.addf %622, %624 : vector<16x64xf32>
    %cst_247 = arith.constant 0.000000e+00 : f32
    %626 = vector.broadcast %cst_247 : f32 to vector<16x64xf32>
    %627 = arith.maximumf %625, %626 : vector<16x64xf32>
    %c1_i32_248 = arith.constant 1 : i32
    %628 = tpu.dynamic_rotate %627 by %c1_i32_248 dim 0 : vector<16x64xf32>, i32 -> vector<16x64xf32>
    %cst_249 = arith.constant 0.000000e+00 : f32
    %629 = vector.broadcast %cst_249 : f32 to vector<16x64xf32>
    %630 = arith.select %19, %629, %628 : vector<16x64xi1>, vector<16x64xf32>
    %c15_i32_250 = arith.constant 15 : i32
    %631 = tpu.dynamic_rotate %627 by %c15_i32_250 dim 0 : vector<16x64xf32>, i32 -> vector<16x64xf32>
    %cst_251 = arith.constant 0.000000e+00 : f32
    %632 = vector.broadcast %cst_251 : f32 to vector<16x64xf32>
    %633 = arith.select %21, %632, %631 : vector<16x64xi1>, vector<16x64xf32>
    %c1_i32_252 = arith.constant 1 : i32
    %634 = tpu.dynamic_rotate %630 by %c1_i32_252 dim 1 : vector<16x64xf32>, i32 -> vector<16x64xf32>
    %cst_253 = arith.constant 0.000000e+00 : f32
    %635 = vector.broadcast %cst_253 : f32 to vector<16x64xf32>
    %636 = arith.select %23, %635, %634 : vector<16x64xi1>, vector<16x64xf32>
    %c63_i32_254 = arith.constant 63 : i32
    %637 = tpu.dynamic_rotate %630 by %c63_i32_254 dim 1 : vector<16x64xf32>, i32 -> vector<16x64xf32>
    %cst_255 = arith.constant 0.000000e+00 : f32
    %638 = vector.broadcast %cst_255 : f32 to vector<16x64xf32>
    %639 = arith.select %25, %638, %637 : vector<16x64xi1>, vector<16x64xf32>
    %c1_i32_256 = arith.constant 1 : i32
    %640 = tpu.dynamic_rotate %627 by %c1_i32_256 dim 1 : vector<16x64xf32>, i32 -> vector<16x64xf32>
    %cst_257 = arith.constant 0.000000e+00 : f32
    %641 = vector.broadcast %cst_257 : f32 to vector<16x64xf32>
    %642 = arith.select %23, %641, %640 : vector<16x64xi1>, vector<16x64xf32>
    %c63_i32_258 = arith.constant 63 : i32
    %643 = tpu.dynamic_rotate %627 by %c63_i32_258 dim 1 : vector<16x64xf32>, i32 -> vector<16x64xf32>
    %cst_259 = arith.constant 0.000000e+00 : f32
    %644 = vector.broadcast %cst_259 : f32 to vector<16x64xf32>
    %645 = arith.select %25, %644, %643 : vector<16x64xi1>, vector<16x64xf32>
    %c1_i32_260 = arith.constant 1 : i32
    %646 = tpu.dynamic_rotate %633 by %c1_i32_260 dim 1 : vector<16x64xf32>, i32 -> vector<16x64xf32>
    %cst_261 = arith.constant 0.000000e+00 : f32
    %647 = vector.broadcast %cst_261 : f32 to vector<16x64xf32>
    %648 = arith.select %23, %647, %646 : vector<16x64xi1>, vector<16x64xf32>
    %c63_i32_262 = arith.constant 63 : i32
    %649 = tpu.dynamic_rotate %633 by %c63_i32_262 dim 1 : vector<16x64xf32>, i32 -> vector<16x64xf32>
    %cst_263 = arith.constant 0.000000e+00 : f32
    %650 = vector.broadcast %cst_263 : f32 to vector<16x64xf32>
    %651 = arith.select %25, %650, %649 : vector<16x64xi1>, vector<16x64xf32>
    %c0_264 = arith.constant 0 : index
    %c0_265 = arith.constant 0 : index
    %652 = vector.load %arg8[%c0_264, %c0_265] : memref<36x64xf32, #tpu.memory_space<vmem>>, vector<1x64xf32>
    %653 = vector.broadcast %652 : vector<1x64xf32> to vector<16x64xf32>
    %654 = arith.mulf %653, %636 : vector<16x64xf32>
    %c4_266 = arith.constant 4 : index
    %c0_267 = arith.constant 0 : index
    %655 = vector.load %arg8[%c4_266, %c0_267] : memref<36x64xf32, #tpu.memory_space<vmem>>, vector<1x64xf32>
    %656 = vector.broadcast %655 : vector<1x64xf32> to vector<16x64xf32>
    %657 = arith.mulf %656, %630 : vector<16x64xf32>
    %658 = arith.addf %654, %657 : vector<16x64xf32>
    %c8_268 = arith.constant 8 : index
    %c0_269 = arith.constant 0 : index
    %659 = vector.load %arg8[%c8_268, %c0_269] : memref<36x64xf32, #tpu.memory_space<vmem>>, vector<1x64xf32>
    %660 = vector.broadcast %659 : vector<1x64xf32> to vector<16x64xf32>
    %661 = arith.mulf %660, %639 : vector<16x64xf32>
    %662 = arith.addf %658, %661 : vector<16x64xf32>
    %c12_270 = arith.constant 12 : index
    %c0_271 = arith.constant 0 : index
    %663 = vector.load %arg8[%c12_270, %c0_271] : memref<36x64xf32, #tpu.memory_space<vmem>>, vector<1x64xf32>
    %664 = vector.broadcast %663 : vector<1x64xf32> to vector<16x64xf32>
    %665 = arith.mulf %664, %642 : vector<16x64xf32>
    %666 = arith.addf %662, %665 : vector<16x64xf32>
    %c16_272 = arith.constant 16 : index
    %c0_273 = arith.constant 0 : index
    %667 = vector.load %arg8[%c16_272, %c0_273] : memref<36x64xf32, #tpu.memory_space<vmem>>, vector<1x64xf32>
    %668 = vector.broadcast %667 : vector<1x64xf32> to vector<16x64xf32>
    %669 = arith.mulf %668, %627 : vector<16x64xf32>
    %670 = arith.addf %666, %669 : vector<16x64xf32>
    %c20_274 = arith.constant 20 : index
    %c0_275 = arith.constant 0 : index
    %671 = vector.load %arg8[%c20_274, %c0_275] : memref<36x64xf32, #tpu.memory_space<vmem>>, vector<1x64xf32>
    %672 = vector.broadcast %671 : vector<1x64xf32> to vector<16x64xf32>
    %673 = arith.mulf %672, %645 : vector<16x64xf32>
    %674 = arith.addf %670, %673 : vector<16x64xf32>
    %c24_276 = arith.constant 24 : index
    %c0_277 = arith.constant 0 : index
    %675 = vector.load %arg8[%c24_276, %c0_277] : memref<36x64xf32, #tpu.memory_space<vmem>>, vector<1x64xf32>
    %676 = vector.broadcast %675 : vector<1x64xf32> to vector<16x64xf32>
    %677 = arith.mulf %676, %648 : vector<16x64xf32>
    %678 = arith.addf %674, %677 : vector<16x64xf32>
    %c28_278 = arith.constant 28 : index
    %c0_279 = arith.constant 0 : index
    %679 = vector.load %arg8[%c28_278, %c0_279] : memref<36x64xf32, #tpu.memory_space<vmem>>, vector<1x64xf32>
    %680 = vector.broadcast %679 : vector<1x64xf32> to vector<16x64xf32>
    %681 = arith.mulf %680, %633 : vector<16x64xf32>
    %682 = arith.addf %678, %681 : vector<16x64xf32>
    %c32_280 = arith.constant 32 : index
    %c0_281 = arith.constant 0 : index
    %683 = vector.load %arg8[%c32_280, %c0_281] : memref<36x64xf32, #tpu.memory_space<vmem>>, vector<1x64xf32>
    %684 = vector.broadcast %683 : vector<1x64xf32> to vector<16x64xf32>
    %685 = arith.mulf %684, %651 : vector<16x64xf32>
    %686 = arith.addf %682, %685 : vector<16x64xf32>
    %687 = vector.extract_strided_slice %686 {offsets = [0, 0], sizes = [16, 16], strides = [1, 1]} : vector<16x64xf32> to vector<16x16xf32>
    %688 = vector.extract_strided_slice %686 {offsets = [0, 16], sizes = [16, 16], strides = [1, 1]} : vector<16x64xf32> to vector<16x16xf32>
    %689 = arith.addf %687, %688 : vector<16x16xf32>
    %690 = vector.extract_strided_slice %686 {offsets = [0, 32], sizes = [16, 16], strides = [1, 1]} : vector<16x64xf32> to vector<16x16xf32>
    %691 = arith.addf %689, %690 : vector<16x16xf32>
    %692 = vector.extract_strided_slice %686 {offsets = [0, 48], sizes = [16, 16], strides = [1, 1]} : vector<16x64xf32> to vector<16x16xf32>
    %693 = arith.addf %691, %692 : vector<16x16xf32>
    %c1_282 = arith.constant 1 : index
    %c0_283 = arith.constant 0 : index
    %694 = vector.load %arg8[%c1_282, %c0_283] : memref<36x64xf32, #tpu.memory_space<vmem>>, vector<1x64xf32>
    %695 = vector.broadcast %694 : vector<1x64xf32> to vector<16x64xf32>
    %696 = arith.mulf %695, %636 : vector<16x64xf32>
    %c5_284 = arith.constant 5 : index
    %c0_285 = arith.constant 0 : index
    %697 = vector.load %arg8[%c5_284, %c0_285] : memref<36x64xf32, #tpu.memory_space<vmem>>, vector<1x64xf32>
    %698 = vector.broadcast %697 : vector<1x64xf32> to vector<16x64xf32>
    %699 = arith.mulf %698, %630 : vector<16x64xf32>
    %700 = arith.addf %696, %699 : vector<16x64xf32>
    %c9_286 = arith.constant 9 : index
    %c0_287 = arith.constant 0 : index
    %701 = vector.load %arg8[%c9_286, %c0_287] : memref<36x64xf32, #tpu.memory_space<vmem>>, vector<1x64xf32>
    %702 = vector.broadcast %701 : vector<1x64xf32> to vector<16x64xf32>
    %703 = arith.mulf %702, %639 : vector<16x64xf32>
    %704 = arith.addf %700, %703 : vector<16x64xf32>
    %c13_288 = arith.constant 13 : index
    %c0_289 = arith.constant 0 : index
    %705 = vector.load %arg8[%c13_288, %c0_289] : memref<36x64xf32, #tpu.memory_space<vmem>>, vector<1x64xf32>
    %706 = vector.broadcast %705 : vector<1x64xf32> to vector<16x64xf32>
    %707 = arith.mulf %706, %642 : vector<16x64xf32>
    %708 = arith.addf %704, %707 : vector<16x64xf32>
    %c17_290 = arith.constant 17 : index
    %c0_291 = arith.constant 0 : index
    %709 = vector.load %arg8[%c17_290, %c0_291] : memref<36x64xf32, #tpu.memory_space<vmem>>, vector<1x64xf32>
    %710 = vector.broadcast %709 : vector<1x64xf32> to vector<16x64xf32>
    %711 = arith.mulf %710, %627 : vector<16x64xf32>
    %712 = arith.addf %708, %711 : vector<16x64xf32>
    %c21_292 = arith.constant 21 : index
    %c0_293 = arith.constant 0 : index
    %713 = vector.load %arg8[%c21_292, %c0_293] : memref<36x64xf32, #tpu.memory_space<vmem>>, vector<1x64xf32>
    %714 = vector.broadcast %713 : vector<1x64xf32> to vector<16x64xf32>
    %715 = arith.mulf %714, %645 : vector<16x64xf32>
    %716 = arith.addf %712, %715 : vector<16x64xf32>
    %c25_294 = arith.constant 25 : index
    %c0_295 = arith.constant 0 : index
    %717 = vector.load %arg8[%c25_294, %c0_295] : memref<36x64xf32, #tpu.memory_space<vmem>>, vector<1x64xf32>
    %718 = vector.broadcast %717 : vector<1x64xf32> to vector<16x64xf32>
    %719 = arith.mulf %718, %648 : vector<16x64xf32>
    %720 = arith.addf %716, %719 : vector<16x64xf32>
    %c29_296 = arith.constant 29 : index
    %c0_297 = arith.constant 0 : index
    %721 = vector.load %arg8[%c29_296, %c0_297] : memref<36x64xf32, #tpu.memory_space<vmem>>, vector<1x64xf32>
    %722 = vector.broadcast %721 : vector<1x64xf32> to vector<16x64xf32>
    %723 = arith.mulf %722, %633 : vector<16x64xf32>
    %724 = arith.addf %720, %723 : vector<16x64xf32>
    %c33_298 = arith.constant 33 : index
    %c0_299 = arith.constant 0 : index
    %725 = vector.load %arg8[%c33_298, %c0_299] : memref<36x64xf32, #tpu.memory_space<vmem>>, vector<1x64xf32>
    %726 = vector.broadcast %725 : vector<1x64xf32> to vector<16x64xf32>
    %727 = arith.mulf %726, %651 : vector<16x64xf32>
    %728 = arith.addf %724, %727 : vector<16x64xf32>
    %729 = vector.extract_strided_slice %728 {offsets = [0, 0], sizes = [16, 16], strides = [1, 1]} : vector<16x64xf32> to vector<16x16xf32>
    %730 = vector.extract_strided_slice %728 {offsets = [0, 16], sizes = [16, 16], strides = [1, 1]} : vector<16x64xf32> to vector<16x16xf32>
    %731 = arith.addf %729, %730 : vector<16x16xf32>
    %732 = vector.extract_strided_slice %728 {offsets = [0, 32], sizes = [16, 16], strides = [1, 1]} : vector<16x64xf32> to vector<16x16xf32>
    %733 = arith.addf %731, %732 : vector<16x16xf32>
    %734 = vector.extract_strided_slice %728 {offsets = [0, 48], sizes = [16, 16], strides = [1, 1]} : vector<16x64xf32> to vector<16x16xf32>
    %735 = arith.addf %733, %734 : vector<16x16xf32>
    %c2_300 = arith.constant 2 : index
    %c0_301 = arith.constant 0 : index
    %736 = vector.load %arg8[%c2_300, %c0_301] : memref<36x64xf32, #tpu.memory_space<vmem>>, vector<1x64xf32>
    %737 = vector.broadcast %736 : vector<1x64xf32> to vector<16x64xf32>
    %738 = arith.mulf %737, %636 : vector<16x64xf32>
    %c6_302 = arith.constant 6 : index
    %c0_303 = arith.constant 0 : index
    %739 = vector.load %arg8[%c6_302, %c0_303] : memref<36x64xf32, #tpu.memory_space<vmem>>, vector<1x64xf32>
    %740 = vector.broadcast %739 : vector<1x64xf32> to vector<16x64xf32>
    %741 = arith.mulf %740, %630 : vector<16x64xf32>
    %742 = arith.addf %738, %741 : vector<16x64xf32>
    %c10_304 = arith.constant 10 : index
    %c0_305 = arith.constant 0 : index
    %743 = vector.load %arg8[%c10_304, %c0_305] : memref<36x64xf32, #tpu.memory_space<vmem>>, vector<1x64xf32>
    %744 = vector.broadcast %743 : vector<1x64xf32> to vector<16x64xf32>
    %745 = arith.mulf %744, %639 : vector<16x64xf32>
    %746 = arith.addf %742, %745 : vector<16x64xf32>
    %c14_306 = arith.constant 14 : index
    %c0_307 = arith.constant 0 : index
    %747 = vector.load %arg8[%c14_306, %c0_307] : memref<36x64xf32, #tpu.memory_space<vmem>>, vector<1x64xf32>
    %748 = vector.broadcast %747 : vector<1x64xf32> to vector<16x64xf32>
    %749 = arith.mulf %748, %642 : vector<16x64xf32>
    %750 = arith.addf %746, %749 : vector<16x64xf32>
    %c18_308 = arith.constant 18 : index
    %c0_309 = arith.constant 0 : index
    %751 = vector.load %arg8[%c18_308, %c0_309] : memref<36x64xf32, #tpu.memory_space<vmem>>, vector<1x64xf32>
    %752 = vector.broadcast %751 : vector<1x64xf32> to vector<16x64xf32>
    %753 = arith.mulf %752, %627 : vector<16x64xf32>
    %754 = arith.addf %750, %753 : vector<16x64xf32>
    %c22_310 = arith.constant 22 : index
    %c0_311 = arith.constant 0 : index
    %755 = vector.load %arg8[%c22_310, %c0_311] : memref<36x64xf32, #tpu.memory_space<vmem>>, vector<1x64xf32>
    %756 = vector.broadcast %755 : vector<1x64xf32> to vector<16x64xf32>
    %757 = arith.mulf %756, %645 : vector<16x64xf32>
    %758 = arith.addf %754, %757 : vector<16x64xf32>
    %c26_312 = arith.constant 26 : index
    %c0_313 = arith.constant 0 : index
    %759 = vector.load %arg8[%c26_312, %c0_313] : memref<36x64xf32, #tpu.memory_space<vmem>>, vector<1x64xf32>
    %760 = vector.broadcast %759 : vector<1x64xf32> to vector<16x64xf32>
    %761 = arith.mulf %760, %648 : vector<16x64xf32>
    %762 = arith.addf %758, %761 : vector<16x64xf32>
    %c30_314 = arith.constant 30 : index
    %c0_315 = arith.constant 0 : index
    %763 = vector.load %arg8[%c30_314, %c0_315] : memref<36x64xf32, #tpu.memory_space<vmem>>, vector<1x64xf32>
    %764 = vector.broadcast %763 : vector<1x64xf32> to vector<16x64xf32>
    %765 = arith.mulf %764, %633 : vector<16x64xf32>
    %766 = arith.addf %762, %765 : vector<16x64xf32>
    %c34_316 = arith.constant 34 : index
    %c0_317 = arith.constant 0 : index
    %767 = vector.load %arg8[%c34_316, %c0_317] : memref<36x64xf32, #tpu.memory_space<vmem>>, vector<1x64xf32>
    %768 = vector.broadcast %767 : vector<1x64xf32> to vector<16x64xf32>
    %769 = arith.mulf %768, %651 : vector<16x64xf32>
    %770 = arith.addf %766, %769 : vector<16x64xf32>
    %771 = vector.extract_strided_slice %770 {offsets = [0, 0], sizes = [16, 16], strides = [1, 1]} : vector<16x64xf32> to vector<16x16xf32>
    %772 = vector.extract_strided_slice %770 {offsets = [0, 16], sizes = [16, 16], strides = [1, 1]} : vector<16x64xf32> to vector<16x16xf32>
    %773 = arith.addf %771, %772 : vector<16x16xf32>
    %774 = vector.extract_strided_slice %770 {offsets = [0, 32], sizes = [16, 16], strides = [1, 1]} : vector<16x64xf32> to vector<16x16xf32>
    %775 = arith.addf %773, %774 : vector<16x16xf32>
    %776 = vector.extract_strided_slice %770 {offsets = [0, 48], sizes = [16, 16], strides = [1, 1]} : vector<16x64xf32> to vector<16x16xf32>
    %777 = arith.addf %775, %776 : vector<16x16xf32>
    %c3_318 = arith.constant 3 : index
    %c0_319 = arith.constant 0 : index
    %778 = vector.load %arg8[%c3_318, %c0_319] : memref<36x64xf32, #tpu.memory_space<vmem>>, vector<1x64xf32>
    %779 = vector.broadcast %778 : vector<1x64xf32> to vector<16x64xf32>
    %780 = arith.mulf %779, %636 : vector<16x64xf32>
    %c7_320 = arith.constant 7 : index
    %c0_321 = arith.constant 0 : index
    %781 = vector.load %arg8[%c7_320, %c0_321] : memref<36x64xf32, #tpu.memory_space<vmem>>, vector<1x64xf32>
    %782 = vector.broadcast %781 : vector<1x64xf32> to vector<16x64xf32>
    %783 = arith.mulf %782, %630 : vector<16x64xf32>
    %784 = arith.addf %780, %783 : vector<16x64xf32>
    %c11_322 = arith.constant 11 : index
    %c0_323 = arith.constant 0 : index
    %785 = vector.load %arg8[%c11_322, %c0_323] : memref<36x64xf32, #tpu.memory_space<vmem>>, vector<1x64xf32>
    %786 = vector.broadcast %785 : vector<1x64xf32> to vector<16x64xf32>
    %787 = arith.mulf %786, %639 : vector<16x64xf32>
    %788 = arith.addf %784, %787 : vector<16x64xf32>
    %c15_324 = arith.constant 15 : index
    %c0_325 = arith.constant 0 : index
    %789 = vector.load %arg8[%c15_324, %c0_325] : memref<36x64xf32, #tpu.memory_space<vmem>>, vector<1x64xf32>
    %790 = vector.broadcast %789 : vector<1x64xf32> to vector<16x64xf32>
    %791 = arith.mulf %790, %642 : vector<16x64xf32>
    %792 = arith.addf %788, %791 : vector<16x64xf32>
    %c19_326 = arith.constant 19 : index
    %c0_327 = arith.constant 0 : index
    %793 = vector.load %arg8[%c19_326, %c0_327] : memref<36x64xf32, #tpu.memory_space<vmem>>, vector<1x64xf32>
    %794 = vector.broadcast %793 : vector<1x64xf32> to vector<16x64xf32>
    %795 = arith.mulf %794, %627 : vector<16x64xf32>
    %796 = arith.addf %792, %795 : vector<16x64xf32>
    %c23_328 = arith.constant 23 : index
    %c0_329 = arith.constant 0 : index
    %797 = vector.load %arg8[%c23_328, %c0_329] : memref<36x64xf32, #tpu.memory_space<vmem>>, vector<1x64xf32>
    %798 = vector.broadcast %797 : vector<1x64xf32> to vector<16x64xf32>
    %799 = arith.mulf %798, %645 : vector<16x64xf32>
    %800 = arith.addf %796, %799 : vector<16x64xf32>
    %c27_330 = arith.constant 27 : index
    %c0_331 = arith.constant 0 : index
    %801 = vector.load %arg8[%c27_330, %c0_331] : memref<36x64xf32, #tpu.memory_space<vmem>>, vector<1x64xf32>
    %802 = vector.broadcast %801 : vector<1x64xf32> to vector<16x64xf32>
    %803 = arith.mulf %802, %648 : vector<16x64xf32>
    %804 = arith.addf %800, %803 : vector<16x64xf32>
    %c31_332 = arith.constant 31 : index
    %c0_333 = arith.constant 0 : index
    %805 = vector.load %arg8[%c31_332, %c0_333] : memref<36x64xf32, #tpu.memory_space<vmem>>, vector<1x64xf32>
    %806 = vector.broadcast %805 : vector<1x64xf32> to vector<16x64xf32>
    %807 = arith.mulf %806, %633 : vector<16x64xf32>
    %808 = arith.addf %804, %807 : vector<16x64xf32>
    %c35_334 = arith.constant 35 : index
    %c0_335 = arith.constant 0 : index
    %809 = vector.load %arg8[%c35_334, %c0_335] : memref<36x64xf32, #tpu.memory_space<vmem>>, vector<1x64xf32>
    %810 = vector.broadcast %809 : vector<1x64xf32> to vector<16x64xf32>
    %811 = arith.mulf %810, %651 : vector<16x64xf32>
    %812 = arith.addf %808, %811 : vector<16x64xf32>
    %813 = vector.extract_strided_slice %812 {offsets = [0, 0], sizes = [16, 16], strides = [1, 1]} : vector<16x64xf32> to vector<16x16xf32>
    %814 = vector.extract_strided_slice %812 {offsets = [0, 16], sizes = [16, 16], strides = [1, 1]} : vector<16x64xf32> to vector<16x16xf32>
    %815 = arith.addf %813, %814 : vector<16x16xf32>
    %816 = vector.extract_strided_slice %812 {offsets = [0, 32], sizes = [16, 16], strides = [1, 1]} : vector<16x64xf32> to vector<16x16xf32>
    %817 = arith.addf %815, %816 : vector<16x16xf32>
    %818 = vector.extract_strided_slice %812 {offsets = [0, 48], sizes = [16, 16], strides = [1, 1]} : vector<16x64xf32> to vector<16x16xf32>
    %819 = arith.addf %817, %818 : vector<16x16xf32>
    %820 = tpu.concatenate %693, %735, %777, %819 in 1 : vector<16x16xf32>, vector<16x16xf32>, vector<16x16xf32>, vector<16x16xf32> -> vector<16x64xf32>
    %c0_336 = arith.constant 0 : index
    %c0_337 = arith.constant 0 : index
    %821 = vector.load %arg13[%c0_336, %c0_337] : memref<1x64xf32, #tpu.memory_space<vmem>>, vector<1x64xf32>
    %822 = vector.broadcast %821 : vector<1x64xf32> to vector<16x64xf32>
    %823 = arith.addf %820, %822 : vector<16x64xf32>
    %824 = arith.addf %823, %427 : vector<16x64xf32>
    %c0_338 = arith.constant 0 : index
    %c0_339 = arith.constant 0 : index
    %825 = vector.load %arg9[%c0_338, %c0_339] : memref<4x64xf32, #tpu.memory_space<vmem>>, vector<1x64xf32>
    %826 = vector.broadcast %825 : vector<1x64xf32> to vector<16x64xf32>
    %827 = arith.mulf %826, %824 : vector<16x64xf32>
    %828 = vector.extract_strided_slice %827 {offsets = [0, 0], sizes = [16, 16], strides = [1, 1]} : vector<16x64xf32> to vector<16x16xf32>
    %829 = vector.extract_strided_slice %827 {offsets = [0, 16], sizes = [16, 16], strides = [1, 1]} : vector<16x64xf32> to vector<16x16xf32>
    %830 = arith.addf %828, %829 : vector<16x16xf32>
    %831 = vector.extract_strided_slice %827 {offsets = [0, 32], sizes = [16, 16], strides = [1, 1]} : vector<16x64xf32> to vector<16x16xf32>
    %832 = arith.addf %830, %831 : vector<16x16xf32>
    %833 = vector.extract_strided_slice %827 {offsets = [0, 48], sizes = [16, 16], strides = [1, 1]} : vector<16x64xf32> to vector<16x16xf32>
    %834 = arith.addf %832, %833 : vector<16x16xf32>
    %c1_340 = arith.constant 1 : index
    %c0_341 = arith.constant 0 : index
    %835 = vector.load %arg9[%c1_340, %c0_341] : memref<4x64xf32, #tpu.memory_space<vmem>>, vector<1x64xf32>
    %836 = vector.broadcast %835 : vector<1x64xf32> to vector<16x64xf32>
    %837 = arith.mulf %836, %824 : vector<16x64xf32>
    %838 = vector.extract_strided_slice %837 {offsets = [0, 0], sizes = [16, 16], strides = [1, 1]} : vector<16x64xf32> to vector<16x16xf32>
    %839 = vector.extract_strided_slice %837 {offsets = [0, 16], sizes = [16, 16], strides = [1, 1]} : vector<16x64xf32> to vector<16x16xf32>
    %840 = arith.addf %838, %839 : vector<16x16xf32>
    %841 = vector.extract_strided_slice %837 {offsets = [0, 32], sizes = [16, 16], strides = [1, 1]} : vector<16x64xf32> to vector<16x16xf32>
    %842 = arith.addf %840, %841 : vector<16x16xf32>
    %843 = vector.extract_strided_slice %837 {offsets = [0, 48], sizes = [16, 16], strides = [1, 1]} : vector<16x64xf32> to vector<16x16xf32>
    %844 = arith.addf %842, %843 : vector<16x16xf32>
    %c2_342 = arith.constant 2 : index
    %c0_343 = arith.constant 0 : index
    %845 = vector.load %arg9[%c2_342, %c0_343] : memref<4x64xf32, #tpu.memory_space<vmem>>, vector<1x64xf32>
    %846 = vector.broadcast %845 : vector<1x64xf32> to vector<16x64xf32>
    %847 = arith.mulf %846, %824 : vector<16x64xf32>
    %848 = vector.extract_strided_slice %847 {offsets = [0, 0], sizes = [16, 16], strides = [1, 1]} : vector<16x64xf32> to vector<16x16xf32>
    %849 = vector.extract_strided_slice %847 {offsets = [0, 16], sizes = [16, 16], strides = [1, 1]} : vector<16x64xf32> to vector<16x16xf32>
    %850 = arith.addf %848, %849 : vector<16x16xf32>
    %851 = vector.extract_strided_slice %847 {offsets = [0, 32], sizes = [16, 16], strides = [1, 1]} : vector<16x64xf32> to vector<16x16xf32>
    %852 = arith.addf %850, %851 : vector<16x16xf32>
    %853 = vector.extract_strided_slice %847 {offsets = [0, 48], sizes = [16, 16], strides = [1, 1]} : vector<16x64xf32> to vector<16x16xf32>
    %854 = arith.addf %852, %853 : vector<16x16xf32>
    %c3_344 = arith.constant 3 : index
    %c0_345 = arith.constant 0 : index
    %855 = vector.load %arg9[%c3_344, %c0_345] : memref<4x64xf32, #tpu.memory_space<vmem>>, vector<1x64xf32>
    %856 = vector.broadcast %855 : vector<1x64xf32> to vector<16x64xf32>
    %857 = arith.mulf %856, %824 : vector<16x64xf32>
    %858 = vector.extract_strided_slice %857 {offsets = [0, 0], sizes = [16, 16], strides = [1, 1]} : vector<16x64xf32> to vector<16x16xf32>
    %859 = vector.extract_strided_slice %857 {offsets = [0, 16], sizes = [16, 16], strides = [1, 1]} : vector<16x64xf32> to vector<16x16xf32>
    %860 = arith.addf %858, %859 : vector<16x16xf32>
    %861 = vector.extract_strided_slice %857 {offsets = [0, 32], sizes = [16, 16], strides = [1, 1]} : vector<16x64xf32> to vector<16x16xf32>
    %862 = arith.addf %860, %861 : vector<16x16xf32>
    %863 = vector.extract_strided_slice %857 {offsets = [0, 48], sizes = [16, 16], strides = [1, 1]} : vector<16x64xf32> to vector<16x16xf32>
    %864 = arith.addf %862, %863 : vector<16x16xf32>
    %865 = tpu.concatenate %834, %844, %854, %864 in 1 : vector<16x16xf32>, vector<16x16xf32>, vector<16x16xf32>, vector<16x16xf32> -> vector<16x64xf32>
    %c0_346 = arith.constant 0 : index
    %c0_347 = arith.constant 0 : index
    %866 = vector.load %arg14[%c0_346, %c0_347] : memref<1x64xf32, #tpu.memory_space<vmem>>, vector<1x64xf32>
    %867 = vector.broadcast %866 : vector<1x64xf32> to vector<16x64xf32>
    %868 = arith.addf %865, %867 : vector<16x64xf32>
    %c0_348 = arith.constant 0 : index
    %c0_349 = arith.constant 0 : index
    %869 = vector.load %arg3[%c0_348, %c0_349] : memref<64x128xf32, #tpu.memory_space<vmem>>, vector<64x128xf32>
    %cst_350 = arith.constant dense<0.000000e+00> : vector<16x128xf32>
    %870 = tpu.matmul %868, %869, %cst_350 {dimension_numbers = #tpu.dot_dimension_numbers<[1], [0], [0], [1], [0, 0, 1, 1], [], []>} : vector<16x64xf32>, vector<64x128xf32>, vector<16x128xf32> -> vector<16x128xf32>
    %c0_351 = arith.constant 0 : index
    %c0_352 = arith.constant 0 : index
    %871 = vector.load %arg4[%c0_351, %c0_352] : memref<32x16xf32, #tpu.memory_space<vmem>>, vector<32x16xf32>
    %cst_353 = arith.constant dense<0.000000e+00> : vector<32x128xf32>
    %872 = tpu.matmul %871, %870, %cst_353 {dimension_numbers = #tpu.dot_dimension_numbers<[1], [0], [0], [1], [0, 0, 1, 1], [], []>} : vector<32x16xf32>, vector<16x128xf32>, vector<32x128xf32> -> vector<32x128xf32>
    %c0_354 = arith.constant 0 : index
    %c0_355 = arith.constant 0 : index
    %c0_356 = arith.constant 0 : index
    %873 = vector.load %arg15[%c0_354, %c0_355, %c0_356] : memref<1x32x128xf32, #tpu.memory_space<vmem>>, vector<1x32x128xf32>
    %874 = vector.shape_cast %873 : vector<1x32x128xf32> to vector<32x128xf32>
    %875 = vector.shape_cast %872 : vector<32x128xf32> to vector<1x32x128xf32>
    tpu.vector_store %arg15[%c0_354, %c0_355, %c0_356], %875 {strides = array<i32>} : memref<1x32x128xf32, #tpu.memory_space<vmem>>, vector<1x32x128xf32>,
    return
  }
  func.func @transform_0(%arg0: i32) -> (i32, i32, i32) {
    %c0_i32 = arith.constant 0 : i32
    %c0_i32_0 = arith.constant 0 : i32
    %c0_i32_1 = arith.constant 0 : i32
    return %arg0, %c0_i32, %c0_i32_0 : i32, i32, i32
  }
  func.func @transform_1(%arg0: i32) -> (i32, i32, i32) {
    %c0_i32 = arith.constant 0 : i32
    %c0_i32_0 = arith.constant 0 : i32
    %c0_i32_1 = arith.constant 0 : i32
    return %arg0, %c0_i32, %c0_i32_0 : i32, i32, i32
  }
  func.func @transform_2(%arg0: i32) -> (i32, i32) {
    %c0_i32 = arith.constant 0 : i32
    %c0_i32_0 = arith.constant 0 : i32
    %c0_i32_1 = arith.constant 0 : i32
    return %c0_i32, %c0_i32_0 : i32, i32
  }
  func.func @transform_3(%arg0: i32) -> (i32, i32) {
    %c0_i32 = arith.constant 0 : i32
    %c0_i32_0 = arith.constant 0 : i32
    %c0_i32_1 = arith.constant 0 : i32
    return %c0_i32, %c0_i32_0 : i32, i32
  }
  func.func @transform_4(%arg0: i32) -> (i32, i32) {
    %c0_i32 = arith.constant 0 : i32
    %c0_i32_0 = arith.constant 0 : i32
    %c0_i32_1 = arith.constant 0 : i32
    return %c0_i32, %c0_i32_0 : i32, i32
  }
  func.func @transform_5(%arg0: i32) -> (i32, i32) {
    %c0_i32 = arith.constant 0 : i32
    %c0_i32_0 = arith.constant 0 : i32
    %c0_i32_1 = arith.constant 0 : i32
    return %c0_i32, %c0_i32_0 : i32, i32
  }
  func.func @transform_6(%arg0: i32) -> (i32, i32) {
    %c0_i32 = arith.constant 0 : i32
    %c0_i32_0 = arith.constant 0 : i32
    %c0_i32_1 = arith.constant 0 : i32
    return %c0_i32, %c0_i32_0 : i32, i32
  }
  func.func @transform_7(%arg0: i32) -> (i32, i32) {
    %c0_i32 = arith.constant 0 : i32
    %c0_i32_0 = arith.constant 0 : i32
    %c0_i32_1 = arith.constant 0 : i32
    return %c0_i32, %c0_i32_0 : i32, i32
  }
  func.func @transform_8(%arg0: i32) -> (i32, i32) {
    %c0_i32 = arith.constant 0 : i32
    %c0_i32_0 = arith.constant 0 : i32
    %c0_i32_1 = arith.constant 0 : i32
    return %c0_i32, %c0_i32_0 : i32, i32
  }
  func.func @transform_9(%arg0: i32) -> (i32, i32) {
    %c0_i32 = arith.constant 0 : i32
    %c0_i32_0 = arith.constant 0 : i32
    %c0_i32_1 = arith.constant 0 : i32
    return %c0_i32, %c0_i32_0 : i32, i32
  }
  func.func @transform_10(%arg0: i32) -> (i32, i32) {
    %c0_i32 = arith.constant 0 : i32
    %c0_i32_0 = arith.constant 0 : i32
    %c0_i32_1 = arith.constant 0 : i32
    return %c0_i32, %c0_i32_0 : i32, i32
  }
  func.func @transform_11(%arg0: i32) -> (i32, i32) {
    %c0_i32 = arith.constant 0 : i32
    %c0_i32_0 = arith.constant 0 : i32
    %c0_i32_1 = arith.constant 0 : i32
    return %c0_i32, %c0_i32_0 : i32, i32
  }
  func.func @transform_12(%arg0: i32) -> (i32, i32) {
    %c0_i32 = arith.constant 0 : i32
    %c0_i32_0 = arith.constant 0 : i32
    %c0_i32_1 = arith.constant 0 : i32
    return %c0_i32, %c0_i32_0 : i32, i32
  }
  func.func @transform_13(%arg0: i32) -> (i32, i32) {
    %c0_i32 = arith.constant 0 : i32
    %c0_i32_0 = arith.constant 0 : i32
    %c0_i32_1 = arith.constant 0 : i32
    return %c0_i32, %c0_i32_0 : i32, i32
  }
  func.func @transform_14(%arg0: i32) -> (i32, i32, i32) {
    %c0_i32 = arith.constant 0 : i32
    %c0_i32_0 = arith.constant 0 : i32
    %c0_i32_1 = arith.constant 0 : i32
    return %arg0, %c0_i32, %c0_i32_0 : i32, i32, i32
  }
}

</mosaic_0001>

<llo_original>
// kernel: tpu_custom_call.1
$region0: #{tpu_custom_call.1}
  #allocation0 [shape = 'u32[]', space=smem, size = 0x4, offset = 0x4, fixed_abs, tag = 'smem constant byte address 0x4 - core index']
  #allocation1 [shape = 'u32[72,128]{1,0:T(1,128)}', space=vmem, size = 0x9000, scoped, tag = 'internal scratch']
  %s0 = inlined_call_operand.hbm [shape: f32[2,16,64], index: 0, kind: input, shape index: {}]
  %s1 = inlined_call_operand.hbm [shape: f32[2,16,64], index: 1, kind: input, shape index: {}]
  %s2 = inlined_call_operand.hbm [shape: f32[64,128], index: 2, kind: input, shape index: {}]
  %s3 = inlined_call_operand.vmem [shape: f32[32,16], index: 3, kind: input, shape index: {}]
  %s4 = inlined_call_operand.vmem [shape: f32[36,64], index: 4, kind: input, shape index: {}]
  %s5 = inlined_call_operand.hbm [shape: f32[36,64], index: 5, kind: input, shape index: {}]
  %s6 = inlined_call_operand.hbm [shape: f32[36,64], index: 6, kind: input, shape index: {}]
  %s7 = inlined_call_operand.hbm [shape: f32[36,64], index: 7, kind: input, shape index: {}]
  %s8 = inlined_call_operand.vmem [shape: f32[4,64], index: 8, kind: input, shape index: {}]
  %s9 = inlined_call_operand.vmem [shape: f32[1,64], index: 9, kind: input, shape index: {}]
  %s10 = inlined_call_operand.vmem [shape: f32[1,64], index: 10, kind: input, shape index: {}]
  %s11 = inlined_call_operand.vmem [shape: f32[1,64], index: 11, kind: input, shape index: {}]
  %s12 = inlined_call_operand.vmem [shape: f32[1,64], index: 12, kind: input, shape index: {}]
  %s13 = inlined_call_operand.vmem [shape: f32[1,64], index: 13, kind: input, shape index: {}]
  %s14 = inlined_call_operand.hbm [shape: f32[2,32,128], index: 14, kind: output, shape index: {}]
  %s15 = sld [smem:[#allocation0]]
  $region113: #{tpu_custom_call.1} parent=0
    _
  %s17 = ssub.s32 1, %s15
  %s18 = scalar_select 0, %s17, %s15
  $region1: #{tpu_custom_call.1} parent=0
    #allocation2 [shape = 'u8[16384]{0}', space=vmem, size = 0x4000, scoped, tag = 'input window, operand 0']
    #allocation3 [shape = 's32[2]{0}', space=sflag, size = 0x8, scoped, tag = 'scoped memory for tpu_custom_call.1']
    #allocation4 [shape = 's32[2]{0}', space=sflag, size = 0x8, scoped, tag = 'scoped memory for tpu_custom_call.1']
    #allocation5 [shape = 'u8[16384]{0}', space=vmem, size = 0x4000, scoped, tag = 'input window, operand 1']
    #allocation6 [shape = 's32[2]{0}', space=sflag, size = 0x8, scoped, tag = 'scoped memory for tpu_custom_call.1']
    #allocation7 [shape = 'u8[32768]{0}', space=vmem, size = 0x8000, scoped, tag = 'input window, operand 2, single buffered']
    #allocation8 [shape = 'u8[20480]{0}', space=vmem, size = 0x5000, scoped, tag = 'input window, operand 5, single buffered']
    #allocation9 [shape = 's32[1]{0}', space=sflag, size = 0x4, scoped, tag = 'scoped memory for tpu_custom_call.1']
    #allocation10 [shape = 'u8[20480]{0}', space=vmem, size = 0x5000, scoped, tag = 'input window, operand 6, single buffered']
    #allocation11 [shape = 'u8[20480]{0}', space=vmem, size = 0x5000, scoped, tag = 'input window, operand 7, single buffered']
    #allocation12 [shape = 's32[1]{0}', space=sflag, size = 0x4, scoped, tag = 'scoped memory for tpu_custom_call.1']
    #allocation13 [shape = 'u8[32768]{0}', space=vmem, size = 0x8000, scoped, tag = 'output window, operand 0']
    %19 = vsyncpa [#allocation3], 0
    %s20 = scalar_lea.sflag [#allocation3], 1
    %21 = vsyncpa %s20, 0
    %22 = vsyncpa [#allocation6], 0
    %s23 = scalar_lea.sflag [#allocation6], 1
    %24 = vsyncpa %s23, 0
    %25 = vsyncpa [#allocation9], 0
    %26 = vsyncpa [#allocation12], 0
    %27 = vsyncpa [#allocation4], 0
    %s28 = scalar_lea.sflag [#allocation4], 1
    %29 = vsyncpa %s28, 0
    loop: start=0, step=1, limit=4
    $region2: #{tpu_custom_call.1} parent=1 // loop_pre_header
      _
    $region3: #{tpu_custom_call.1} parent=1 // loop_header
      %s31 = sphi 0, %s35
      %p32 = scmp.ge.s32.totalorder %s31, 4
      %s41 = sphi 0, %s43
      %s44 = sphi 0, %s41
      %s45 = sphi 0, %s44
      %s61 = sphi 0, %s45
      %s67 = sphi 0, %s69
      %s70 = sphi 0, %s67
      %s71 = sphi 0, %s70
      %s87 = sphi 0, %s71
      %s91 = sphi 0, %s91
      %s93 = sphi 0, %s91
      %s94 = sphi 0, %s93
      %s108 = sphi 0, %s94
      %s112 = sphi 0, %s112
      %s114 = sphi 0, %s112
      %s115 = sphi 0, %s114
      %s129 = sphi 0, %s115
      %s133 = sphi 0, %s133
      %s135 = sphi 0, %s133
      %s136 = sphi 0, %s135
      %s150 = sphi 0, %s136
      %s154 = sphi 0, %s154
      %s156 = sphi 0, %s154
      %s157 = sphi 0, %s156
      %s171 = sphi 0, %s157
      %s175 = sphi 0, %s175
      %s177 = sphi 0, %s175
      %s178 = sphi 0, %s177
      %s192 = sphi 0, %s178
      %s196 = sphi 0, %s196
      %s198 = sphi 0, %s196
      %s199 = sphi 0, %s198
      %s213 = sphi 0, %s199
      %s217 = sphi 0, %s217
      %s219 = sphi 0, %s217
      %s220 = sphi 0, %s219
      %s234 = sphi 0, %s220
      %s238 = sphi 0, %s238
      %s240 = sphi 0, %s238
      %s241 = sphi 0, %s240
      %s255 = sphi 0, %s241
      %s259 = sphi 0, %s259
      %s261 = sphi 0, %s259
      %s262 = sphi 0, %s261
      %s276 = sphi 0, %s262
      %s280 = sphi 0, %s280
      %s282 = sphi 0, %s280
      %s283 = sphi 0, %s282
      %s297 = sphi 0, %s283
      %s301 = sphi 0, %s301
      %s303 = sphi 0, %s301
      %s304 = sphi 0, %s303
      %s318 = sphi 0, %s304
      %s322 = sphi 0, %s322
      %s324 = sphi 0, %s322
      %s325 = sphi 0, %s324
      %s339 = sphi 0, %s325
      %s345 = sphi 0, %s347
      %s348 = sphi 0, %s345
      %s349 = sphi 0, %s348
      %s365 = sphi 0, %s349
    $region4: #{tpu_custom_call.1} parent=1 // loop_header_branch
      %34 = sbr.rel (%p32) target = $region8
    $region5: #{tpu_custom_call.1} parent=1 // loop_body
      %s36 = ssub.s32 %s31, 1
      %s37 = ssub.s32 %s31, 2
      %s38 = sadd.s32 %s31, 1
      %s39 = ssub.s32 %s31, %s38
      %p40 = scmp.eq.s32.totalorder %s39, 0
      %s42 = sadd.s32 %s41, 1
      %s43 = scalar_select %p40, %s41, %s42
      %p46 = pneg %p40
      %p47 = scmp.eq.s32.totalorder %s31, 1
      %p48 = por %p46, %p47
      %p49 = scmp.ne.s32.totalorder %s41, %s44
      %p50 = scmp.eq.s32.totalorder %s31, 0
      %p51 = por %p49, %p50
      %p52 = scmp.ne.s32.totalorder %s41, %s44
      %p53 = scmp.eq.s32.totalorder %s36, 1
      %p54 = por %p52, %p53
      %p55 = scmp.ne.s32.totalorder %s44, %s45
      %p56 = scmp.eq.s32.totalorder %s36, 0
      %p57 = por %p55, %p56
      %p58 = scmp.ne.s32.totalorder %s44, %s45
      %p59 = scmp.eq.s32.totalorder %s37, 1
      %p60 = por %p58, %p59
      %p62 = scmp.ne.s32.totalorder %s45, %s61
      %p63 = scmp.eq.s32.totalorder %s37, 0
      %p64 = por %p62, %p63
      %s65 = ssub.s32 %s31, %s38
      %p66 = scmp.eq.s32.totalorder %s65, 0
      %s68 = sadd.s32 %s67, 1
      %s69 = scalar_select %p66, %s67, %s68
      %p72 = pneg %p66
      %p73 = scmp.eq.s32.totalorder %s31, 1
      %p74 = por %p72, %p73
      %p75 = scmp.ne.s32.totalorder %s67, %s70
      %p76 = scmp.eq.s32.totalorder %s31, 0
      %p77 = por %p75, %p76
      %p78 = scmp.ne.s32.totalorder %s67, %s70
      %p79 = scmp.eq.s32.totalorder %s36, 1
      %p80 = por %p78, %p79
      %p81 = scmp.ne.s32.totalorder %s70, %s71
      %p82 = scmp.eq.s32.totalorder %s36, 0
      %p83 = por %p81, %p82
      %p84 = scmp.ne.s32.totalorder %s70, %s71
      %p85 = scmp.eq.s32.totalorder %s37, 1
      %p86 = por %p84, %p85
      %p88 = scmp.ne.s32.totalorder %s71, %s87
      %p89 = scmp.eq.s32.totalorder %s37, 0
      %p90 = por %p88, %p89
      %s92 = sadd.s32 %s91, 1
      %p95 = scmp.eq.s32.totalorder %s31, 1
      %p96 = scmp.ne.s32.totalorder %s91, %s93
      %p97 = scmp.eq.s32.totalorder %s31, 0
      %p98 = por %p96, %p97
      %p99 = scmp.ne.s32.totalorder %s91, %s93
      %p100 = scmp.eq.s32.totalorder %s36, 1
      %p101 = por %p99, %p100
      %p102 = scmp.ne.s32.totalorder %s93, %s94
      %p103 = scmp.eq.s32.totalorder %s36, 0
      %p104 = por %p102, %p103
      %p105 = scmp.ne.s32.totalorder %s93, %s94
      %p106 = scmp.eq.s32.totalorder %s37, 1
      %p107 = por %p105, %p106
      %p109 = scmp.ne.s32.totalorder %s94, %s108
      %p110 = scmp.eq.s32.totalorder %s37, 0
      %p111 = por %p109, %p110
      %s113 = sadd.s32 %s112, 1
      %p116 = scmp.eq.s32.totalorder %s31, 1
      %p117 = scmp.ne.s32.totalorder %s112, %s114
      %p118 = scmp.eq.s32.totalorder %s31, 0
      %p119 = por %p117, %p118
      %p120 = scmp.ne.s32.totalorder %s112, %s114
      %p121 = scmp.eq.s32.totalorder %s36, 1
      %p122 = por %p120, %p121
      %p123 = scmp.ne.s32.totalorder %s114, %s115
      %p124 = scmp.eq.s32.totalorder %s36, 0
      %p125 = por %p123, %p124
      %p126 = scmp.ne.s32.totalorder %s114, %s115
      %p127 = scmp.eq.s32.totalorder %s37, 1
      %p128 = por %p126, %p127
      %p130 = scmp.ne.s32.totalorder %s115, %s129
      %p131 = scmp.eq.s32.totalorder %s37, 0
      %p132 = por %p130, %p131
      %s134 = sadd.s32 %s133, 1
      %p137 = scmp.eq.s32.totalorder %s31, 1
      %p138 = scmp.ne.s32.totalorder %s133, %s135
      %p139 = scmp.eq.s32.totalorder %s31, 0
      %p140 = por %p138, %p139
      %p141 = scmp.ne.s32.totalorder %s133, %s135
      %p142 = scmp.eq.s32.totalorder %s36, 1
      %p143 = por %p141, %p142
      %p144 = scmp.ne.s32.totalorder %s135, %s136
      %p145 = scmp.eq.s32.totalorder %s36, 0
      %p146 = por %p144, %p145
      %p147 = scmp.ne.s32.totalorder %s135, %s136
      %p148 = scmp.eq.s32.totalorder %s37, 1
      %p149 = por %p147, %p148
      %p151 = scmp.ne.s32.totalorder %s136, %s150
      %p152 = scmp.eq.s32.totalorder %s37, 0
      %p153 = por %p151, %p152
      %s155 = sadd.s32 %s154, 1
      %p158 = scmp.eq.s32.totalorder %s31, 1
      %p159 = scmp.ne.s32.totalorder %s154, %s156
      %p160 = scmp.eq.s32.totalorder %s31, 0
      %p161 = por %p159, %p160
      %p162 = scmp.ne.s32.totalorder %s154, %s156
      %p163 = scmp.eq.s32.totalorder %s36, 1
      %p164 = por %p162, %p163
      %p165 = scmp.ne.s32.totalorder %s156, %s157
      %p166 = scmp.eq.s32.totalorder %s36, 0
      %p167 = por %p165, %p166
      %p168 = scmp.ne.s32.totalorder %s156, %s157
      %p169 = scmp.eq.s32.totalorder %s37, 1
      %p170 = por %p168, %p169
      %p172 = scmp.ne.s32.totalorder %s157, %s171
      %p173 = scmp.eq.s32.totalorder %s37, 0
      %p174 = por %p172, %p173
      %s176 = sadd.s32 %s175, 1
      %p179 = scmp.eq.s32.totalorder %s31, 1
      %p180 = scmp.ne.s32.totalorder %s175, %s177
      %p181 = scmp.eq.s32.totalorder %s31, 0
      %p182 = por %p180, %p181
      %p183 = scmp.ne.s32.totalorder %s175, %s177
      %p184 = scmp.eq.s32.totalorder %s36, 1
      %p185 = por %p183, %p184
      %p186 = scmp.ne.s32.totalorder %s177, %s178
      %p187 = scmp.eq.s32.totalorder %s36, 0
      %p188 = por %p186, %p187
      %p189 = scmp.ne.s32.totalorder %s177, %s178
      %p190 = scmp.eq.s32.totalorder %s37, 1
      %p191 = por %p189, %p190
      %p193 = scmp.ne.s32.totalorder %s178, %s192
      %p194 = scmp.eq.s32.totalorder %s37, 0
      %p195 = por %p193, %p194
      %s197 = sadd.s32 %s196, 1
      %p200 = scmp.eq.s32.totalorder %s31, 1
      %p201 = scmp.ne.s32.totalorder %s196, %s198
      %p202 = scmp.eq.s32.totalorder %s31, 0
      %p203 = por %p201, %p202
      %p204 = scmp.ne.s32.totalorder %s196, %s198
      %p205 = scmp.eq.s32.totalorder %s36, 1
      %p206 = por %p204, %p205
      %p207 = scmp.ne.s32.totalorder %s198, %s199
      %p208 = scmp.eq.s32.totalorder %s36, 0
      %p209 = por %p207, %p208
      %p210 = scmp.ne.s32.totalorder %s198, %s199
      %p211 = scmp.eq.s32.totalorder %s37, 1
      %p212 = por %p210, %p211
      %p214 = scmp.ne.s32.totalorder %s199, %s213
      %p215 = scmp.eq.s32.totalorder %s37, 0
      %p216 = por %p214, %p215
      %s218 = sadd.s32 %s217, 1
      %p221 = scmp.eq.s32.totalorder %s31, 1
      %p222 = scmp.ne.s32.totalorder %s217, %s219
      %p223 = scmp.eq.s32.totalorder %s31, 0
      %p224 = por %p222, %p223
      %p225 = scmp.ne.s32.totalorder %s217, %s219
      %p226 = scmp.eq.s32.totalorder %s36, 1
      %p227 = por %p225, %p226
      %p228 = scmp.ne.s32.totalorder %s219, %s220
      %p229 = scmp.eq.s32.totalorder %s36, 0
      %p230 = por %p228, %p229
      %p231 = scmp.ne.s32.totalorder %s219, %s220
      %p232 = scmp.eq.s32.totalorder %s37, 1
      %p233 = por %p231, %p232
      %p235 = scmp.ne.s32.totalorder %s220, %s234
      %p236 = scmp.eq.s32.totalorder %s37, 0
      %p237 = por %p235, %p236
      %s239 = sadd.s32 %s238, 1
      %p242 = scmp.eq.s32.totalorder %s31, 1
      %p243 = scmp.ne.s32.totalorder %s238, %s240
      %p244 = scmp.eq.s32.totalorder %s31, 0
      %p245 = por %p243, %p244
      %p246 = scmp.ne.s32.totalorder %s238, %s240
      %p247 = scmp.eq.s32.totalorder %s36, 1
      %p248 = por %p246, %p247
      %p249 = scmp.ne.s32.totalorder %s240, %s241
      %p250 = scmp.eq.s32.totalorder %s36, 0
      %p251 = por %p249, %p250
      %p252 = scmp.ne.s32.totalorder %s240, %s241
      %p253 = scmp.eq.s32.totalorder %s37, 1
      %p254 = por %p252, %p253
      %p256 = scmp.ne.s32.totalorder %s241, %s255
      %p257 = scmp.eq.s32.totalorder %s37, 0
      %p258 = por %p256, %p257
      %s260 = sadd.s32 %s259, 1
      %p263 = scmp.eq.s32.totalorder %s31, 1
      %p264 = scmp.ne.s32.totalorder %s259, %s261
      %p265 = scmp.eq.s32.totalorder %s31, 0
      %p266 = por %p264, %p265
      %p267 = scmp.ne.s32.totalorder %s259, %s261
      %p268 = scmp.eq.s32.totalorder %s36, 1
      %p269 = por %p267, %p268
      %p270 = scmp.ne.s32.totalorder %s261, %s262
      %p271 = scmp.eq.s32.totalorder %s36, 0
      %p272 = por %p270, %p271
      %p273 = scmp.ne.s32.totalorder %s261, %s262
      %p274 = scmp.eq.s32.totalorder %s37, 1
      %p275 = por %p273, %p274
      %p277 = scmp.ne.s32.totalorder %s262, %s276
      %p278 = scmp.eq.s32.totalorder %s37, 0
      %p279 = por %p277, %p278
      %s281 = sadd.s32 %s280, 1
      %p284 = scmp.eq.s32.totalorder %s31, 1
      %p285 = scmp.ne.s32.totalorder %s280, %s282
      %p286 = scmp.eq.s32.totalorder %s31, 0
      %p287 = por %p285, %p286
      %p288 = scmp.ne.s32.totalorder %s280, %s282
      %p289 = scmp.eq.s32.totalorder %s36, 1
      %p290 = por %p288, %p289
      %p291 = scmp.ne.s32.totalorder %s282, %s283
      %p292 = scmp.eq.s32.totalorder %s36, 0
      %p293 = por %p291, %p292
      %p294 = scmp.ne.s32.totalorder %s282, %s283
      %p295 = scmp.eq.s32.totalorder %s37, 1
      %p296 = por %p294, %p295
      %p298 = scmp.ne.s32.totalorder %s283, %s297
      %p299 = scmp.eq.s32.totalorder %s37, 0
      %p300 = por %p298, %p299
      %s302 = sadd.s32 %s301, 1
      %p305 = scmp.eq.s32.totalorder %s31, 1
      %p306 = scmp.ne.s32.totalorder %s301, %s303
      %p307 = scmp.eq.s32.totalorder %s31, 0
      %p308 = por %p306, %p307
      %p309 = scmp.ne.s32.totalorder %s301, %s303
      %p310 = scmp.eq.s32.totalorder %s36, 1
      %p311 = por %p309, %p310
      %p312 = scmp.ne.s32.totalorder %s303, %s304
      %p313 = scmp.eq.s32.totalorder %s36, 0
      %p314 = por %p312, %p313
      %p315 = scmp.ne.s32.totalorder %s303, %s304
      %p316 = scmp.eq.s32.totalorder %s37, 1
      %p317 = por %p315, %p316
      %p319 = scmp.ne.s32.totalorder %s304, %s318
      %p320 = scmp.eq.s32.totalorder %s37, 0
      %p321 = por %p319, %p320
      %s323 = sadd.s32 %s322, 1
      %p326 = scmp.eq.s32.totalorder %s31, 1
      %p327 = scmp.ne.s32.totalorder %s322, %s324
      %p328 = scmp.eq.s32.totalorder %s31, 0
      %p329 = por %p327, %p328
      %p330 = scmp.ne.s32.totalorder %s322, %s324
      %p331 = scmp.eq.s32.totalorder %s36, 1
      %p332 = por %p330, %p331
      %p333 = scmp.ne.s32.totalorder %s324, %s325
      %p334 = scmp.eq.s32.totalorder %s36, 0
      %p335 = por %p333, %p334
      %p336 = scmp.ne.s32.totalorder %s324, %s325
      %p337 = scmp.eq.s32.totalorder %s37, 1
      %p338 = por %p336, %p337
      %p340 = scmp.ne.s32.totalorder %s325, %s339
      %p341 = scmp.eq.s32.totalorder %s37, 0
      %p342 = por %p340, %p341
      %s343 = ssub.s32 %s31, %s38
      %p344 = scmp.eq.s32.totalorder %s343, 0
      %s346 = sadd.s32 %s345, 1
      %s347 = scalar_select %p344, %s345, %s346
      %p350 = pneg %p344
      %p351 = scmp.eq.s32.totalorder %s31, 1
      %p352 = por %p350, %p351
      %p353 = scmp.ne.s32.totalorder %s345, %s348
      %p354 = scmp.eq.s32.totalorder %s31, 0
      %p355 = por %p353, %p354
      %p356 = scmp.ne.s32.totalorder %s345, %s348
      %p357 = scmp.eq.s32.totalorder %s36, 1
      %p358 = por %p356, %p357
      %p359 = scmp.ne.s32.totalorder %s348, %s349
      %p360 = scmp.eq.s32.totalorder %s36, 0
      %p361 = por %p359, %p360
      %p362 = scmp.ne.s32.totalorder %s348, %s349
      %p363 = scmp.eq.s32.totalorder %s37, 1
      %p364 = por %p362, %p363
      %p366 = scmp.ne.s32.totalorder %s349, %s365
      %p367 = scmp.eq.s32.totalorder %s37, 0
      %p368 = por %p366, %p367
      %p369 = scmp.le.s32.totalorder 1, %s31
      %p370 = scmp.lt.s32.totalorder %s31, 3
      %p371 = pnand %p369, %p370
      %p372 = pneg %p371
      // Predicated region
      $region9: #{tpu_custom_call.1} parent=5 // pred_check
        _
      $region10: #{tpu_custom_call.1} parent=5 // pred_check_branch
        %374 = sbr.rel (%p371) target = $region12
      $region11: #{tpu_custom_call.1} parent=5 // pred_region
        %s375 = ssub.s32 %s31, 1
        // Predicated region
        $region13: #{tpu_custom_call.1} parent=11 // pred_check
          %p376 = pneg %p104
        $region14: #{tpu_custom_call.1} parent=11 // pred_check_branch
          %378 = sbr.rel (%p376) target = $region16
        $region15: #{tpu_custom_call.1} parent=11 // pred_region
          %380 = vsyncadd [#allocation6], 0
          %s381 = sshll.u32 %s2, 4
          %s382 = int_to_ptr.hbm [resolvable:$true] %s381
          %s383 = sshll.u32 [#allocation7], 4
          %s384 = int_to_ptr.vmem [resolvable:$true] %s383
          %389 = dma.hbm_to_vmem [thread:$0]  %s382, 1024, %s384, [#allocation6], 128, 128, 8
        $region16: #{tpu_custom_call.1} parent=11 // pred_fallthru
          _
        // Predicated region
        $region17: #{tpu_custom_call.1} parent=11 // pred_check
          %p390 = pneg %p125
        $region18: #{tpu_custom_call.1} parent=11 // pred_check_branch
          %392 = sbr.rel (%p390) target = $region20
        $region19: #{tpu_custom_call.1} parent=11 // pred_region
          _
        $region20: #{tpu_custom_call.1} parent=11 // pred_fallthru
          _
        // Predicated region
        $region21: #{tpu_custom_call.1} parent=11 // pred_check
          %p393 = pneg %p146
        $region22: #{tpu_custom_call.1} parent=11 // pred_check_branch
          %395 = sbr.rel (%p393) target = $region24
        $region23: #{tpu_custom_call.1} parent=11 // pred_region
          _
        $region24: #{tpu_custom_call.1} parent=11 // pred_fallthru
          _
        // Predicated region
        $region25: #{tpu_custom_call.1} parent=11 // pred_check
          %p396 = pneg %p167
        $region26: #{tpu_custom_call.1} parent=11 // pred_check_branch
          %398 = sbr.rel (%p396) target = $region28
        $region27: #{tpu_custom_call.1} parent=11 // pred_region
          %400 = vsyncadd [#allocation9], 0
          %s401 = sshll.u32 %s5, 4
          %s402 = int_to_ptr.hbm [resolvable:$true] %s401
          %s403 = sshll.u32 [#allocation8], 4
          %s404 = int_to_ptr.vmem [resolvable:$true] %s403
          %409 = dma.hbm_to_vmem [thread:$0]  %s402, 640, %s404, [#allocation9], 128, 128, 8
        $region28: #{tpu_custom_call.1} parent=11 // pred_fallthru
          _
        // Predicated region
        $region29: #{tpu_custom_call.1} parent=11 // pred_check
          %p410 = pneg %p188
        $region30: #{tpu_custom_call.1} parent=11 // pred_check_branch
          %412 = sbr.rel (%p410) target = $region32
        $region31: #{tpu_custom_call.1} parent=11 // pred_region
          %414 = vsyncadd [#allocation9], 0
          %s415 = sshll.u32 %s6, 4
          %s416 = int_to_ptr.hbm [resolvable:$true] %s415
          %s417 = sshll.u32 [#allocation10], 4
          %s418 = int_to_ptr.vmem [resolvable:$true] %s417
          %423 = dma.hbm_to_vmem [thread:$0]  %s416, 640, %s418, [#allocation9], 128, 128, 8
        $region32: #{tpu_custom_call.1} parent=11 // pred_fallthru
          _
        // Predicated region
        $region33: #{tpu_custom_call.1} parent=11 // pred_check
          %p424 = pneg %p209
        $region34: #{tpu_custom_call.1} parent=11 // pred_check_branch
          %426 = sbr.rel (%p424) target = $region36
        $region35: #{tpu_custom_call.1} parent=11 // pred_region
          %428 = vsyncadd [#allocation12], 0
          %s429 = sshll.u32 %s7, 4
          %s430 = int_to_ptr.hbm [resolvable:$true] %s429
          %s431 = sshll.u32 [#allocation11], 4
          %s432 = int_to_ptr.vmem [resolvable:$true] %s431
          %437 = dma.hbm_to_vmem [thread:$0]  %s430, 640, %s432, [#allocation12], 128, 128, 8
        $region36: #{tpu_custom_call.1} parent=11 // pred_fallthru
          _
        // Predicated region
        $region37: #{tpu_custom_call.1} parent=11 // pred_check
          %p438 = pneg %p230
        $region38: #{tpu_custom_call.1} parent=11 // pred_check_branch
          %440 = sbr.rel (%p438) target = $region40
        $region39: #{tpu_custom_call.1} parent=11 // pred_region
          _
        $region40: #{tpu_custom_call.1} parent=11 // pred_fallthru
          _
        // Predicated region
        $region41: #{tpu_custom_call.1} parent=11 // pred_check
          %p441 = pneg %p251
        $region42: #{tpu_custom_call.1} parent=11 // pred_check_branch
          %443 = sbr.rel (%p441) target = $region44
        $region43: #{tpu_custom_call.1} parent=11 // pred_region
          _
        $region44: #{tpu_custom_call.1} parent=11 // pred_fallthru
          _
        // Predicated region
        $region45: #{tpu_custom_call.1} parent=11 // pred_check
          %p444 = pneg %p272
        $region46: #{tpu_custom_call.1} parent=11 // pred_check_branch
          %446 = sbr.rel (%p444) target = $region48
        $region47: #{tpu_custom_call.1} parent=11 // pred_region
          _
        $region48: #{tpu_custom_call.1} parent=11 // pred_fallthru
          _
        // Predicated region
        $region49: #{tpu_custom_call.1} parent=11 // pred_check
          %p447 = pneg %p293
        $region50: #{tpu_custom_call.1} parent=11 // pred_check_branch
          %449 = sbr.rel (%p447) target = $region52
        $region51: #{tpu_custom_call.1} parent=11 // pred_region
          _
        $region52: #{tpu_custom_call.1} parent=11 // pred_fallthru
          _
        // Predicated region
        $region53: #{tpu_custom_call.1} parent=11 // pred_check
          %p450 = pneg %p314
        $region54: #{tpu_custom_call.1} parent=11 // pred_check_branch
          %452 = sbr.rel (%p450) target = $region56
        $region55: #{tpu_custom_call.1} parent=11 // pred_region
          _
        $region56: #{tpu_custom_call.1} parent=11 // pred_fallthru
          _
        // Predicated region
        $region57: #{tpu_custom_call.1} parent=11 // pred_check
          %p453 = pneg %p335
        $region58: #{tpu_custom_call.1} parent=11 // pred_check_branch
          %455 = sbr.rel (%p453) target = $region60
        $region59: #{tpu_custom_call.1} parent=11 // pred_region
          _
        $region60: #{tpu_custom_call.1} parent=11 // pred_fallthru
          _
      $region12: #{tpu_custom_call.1} parent=5 // pred_fallthru
        _
      %p456 = scmp.lt.s32.totalorder %s31, 2
      // Predicated region
      $region61: #{tpu_custom_call.1} parent=5 // pred_check
        %p457 = pneg %p456
      $region62: #{tpu_custom_call.1} parent=5 // pred_check_branch
        %459 = sbr.rel (%p457) target = $region64
      $region63: #{tpu_custom_call.1} parent=5 // pred_region
        // Predicated region
        $region65: #{tpu_custom_call.1} parent=63 // pred_check
          %p460 = pneg %p51
        $region66: #{tpu_custom_call.1} parent=63 // pred_check_branch
          %462 = sbr.rel (%p460) target = $region68
        $region67: #{tpu_custom_call.1} parent=63 // pred_region
          %s463 = sand.u32 %s41, 1
          %s464 = scalar_lea.sflag [#allocation3], %s463
          %s465 = sand.u32 %s41, 1
          %s466 = smul.addr %s465, 16
          %s467 = scalar_lea.vmem [#allocation2], %s466
          %469 = vsyncadd %s464, 0
          %s470 = smul.addr %s31, 2
          %s471 = smul.addr %s470, 8
          %s472 = scalar_lea.hbm %s0, %s471
          %s473 = sshll.u32 %s472, 4
          %s474 = int_to_ptr.hbm [resolvable:$true] %s473
          %s475 = sshll.u32 %s467, 4
          %s476 = int_to_ptr.vmem [resolvable:$true] %s475
          %481 = dma.hbm_to_vmem [thread:$0]  %s474, 256, %s476, %s464, 128, 128, 8
        $region68: #{tpu_custom_call.1} parent=63 // pred_fallthru
          _
        // Predicated region
        $region69: #{tpu_custom_call.1} parent=63 // pred_check
          %p482 = pneg %p77
        $region70: #{tpu_custom_call.1} parent=63 // pred_check_branch
          %484 = sbr.rel (%p482) target = $region72
        $region71: #{tpu_custom_call.1} parent=63 // pred_region
          %s485 = sand.u32 %s31, 1
          %s486 = scalar_lea.sflag [#allocation6], %s485
          %s487 = sand.u32 %s67, 1
          %s488 = smul.addr %s487, 16
          %s489 = scalar_lea.vmem [#allocation5], %s488
          %491 = vsyncadd %s486, 0
          %s492 = smul.addr %s31, 2
          %s493 = smul.addr %s492, 8
          %s494 = scalar_lea.hbm %s1, %s493
          %s495 = sshll.u32 %s494, 4
          %s496 = int_to_ptr.hbm [resolvable:$true] %s495
          %s497 = sshll.u32 %s489, 4
          %s498 = int_to_ptr.vmem [resolvable:$true] %s497
          %503 = dma.hbm_to_vmem [thread:$0]  %s496, 256, %s498, %s486, 128, 128, 8
        $region72: #{tpu_custom_call.1} parent=63 // pred_fallthru
          _
      $region64: #{tpu_custom_call.1} parent=5 // pred_fallthru
        _
      %p504 = scmp.le.s32.totalorder 1, %s31
      %p505 = scmp.lt.s32.totalorder %s31, 3
      %p506 = pnand %p504, %p505
      %p507 = pneg %p506
      // Predicated region
      $region73: #{tpu_custom_call.1} parent=5 // pred_check
        _
      $region74: #{tpu_custom_call.1} parent=5 // pred_check_branch
        %509 = sbr.rel (%p506) target = $region76
      $region75: #{tpu_custom_call.1} parent=5 // pred_region
        %s510 = ssub.s32 %s31, 1
        %s511 = sand.u32 %s44, 1
        %s512 = scalar_lea.sflag [#allocation3], %s511
        %s513 = sand.u32 %s44, 1
        %s514 = smul.addr %s513, 16
        %s515 = scalar_lea.vmem [#allocation2], %s514
        // Predicated region
        $region77: #{tpu_custom_call.1} parent=75 // pred_check
          %p516 = pneg %p57
        $region78: #{tpu_custom_call.1} parent=75 // pred_check_branch
          %518 = sbr.rel (%p516) target = $region80
        $region79: #{tpu_custom_call.1} parent=75 // pred_region
          %520 = dma.done %s512, 256
        $region80: #{tpu_custom_call.1} parent=75 // pred_fallthru
          _
        %s521 = sand.u32 %s36, 1
        %s522 = scalar_lea.sflag [#allocation6], %s521
        %s523 = sand.u32 %s70, 1
        %s524 = smul.addr %s523, 16
        %s525 = scalar_lea.vmem [#allocation5], %s524
        // Predicated region
        $region81: #{tpu_custom_call.1} parent=75 // pred_check
          %p526 = pneg %p83
        $region82: #{tpu_custom_call.1} parent=75 // pred_check_branch
          %528 = sbr.rel (%p526) target = $region84
        $region83: #{tpu_custom_call.1} parent=75 // pred_region
          %530 = dma.done %s522, 256
        $region84: #{tpu_custom_call.1} parent=75 // pred_fallthru
          _
        // Predicated region
        $region85: #{tpu_custom_call.1} parent=75 // pred_check
          %p531 = pneg %p104
        $region86: #{tpu_custom_call.1} parent=75 // pred_check_branch
          %533 = sbr.rel (%p531) target = $region88
        $region87: #{tpu_custom_call.1} parent=75 // pred_region
          %535 = dma.done [#allocation6], 1024
        $region88: #{tpu_custom_call.1} parent=75 // pred_fallthru
          _
        // Predicated region
        $region89: #{tpu_custom_call.1} parent=75 // pred_check
          %p536 = pneg %p167
        $region90: #{tpu_custom_call.1} parent=75 // pred_check_branch
          %538 = sbr.rel (%p536) target = $region92
        $region91: #{tpu_custom_call.1} parent=75 // pred_region
          %540 = dma.done [#allocation9], 640
        $region92: #{tpu_custom_call.1} parent=75 // pred_fallthru
          _
        // Predicated region
        $region93: #{tpu_custom_call.1} parent=75 // pred_check
          %p541 = pneg %p188
        $region94: #{tpu_custom_call.1} parent=75 // pred_check_branch
          %543 = sbr.rel (%p541) target = $region96
        $region95: #{tpu_custom_call.1} parent=75 // pred_region
          %545 = dma.done [#allocation9], 640
        $region96: #{tpu_custom_call.1} parent=75 // pred_fallthru
          _
        // Predicated region
        $region97: #{tpu_custom_call.1} parent=75 // pred_check
          %p546 = pneg %p209
        $region98: #{tpu_custom_call.1} parent=75 // pred_check_branch
          %548 = sbr.rel (%p546) target = $region100
        $region99: #{tpu_custom_call.1} parent=75 // pred_region
          %550 = dma.done [#allocation12], 640
        $region100: #{tpu_custom_call.1} parent=75 // pred_fallthru
          _
        %s551 = sand.u32 %s44, 1
        %s552 = scalar_lea.sflag [#allocation3], %s551
        %s553 = sand.u32 %s44, 1
        %s554 = smul.addr %s553, 16
        %s555 = scalar_lea.vmem [#allocation2], %s554
        %p556 = pneg %p57
        %p557 = pneg %p54
        %s558 = sand.u32 %s36, 1
        %s559 = scalar_lea.sflag [#allocation6], %s558
        %s560 = sand.u32 %s70, 1
        %s561 = smul.addr %s560, 16
        %s562 = scalar_lea.vmem [#allocation5], %s561
        %p563 = pneg %p83
        %p564 = pneg %p80
        %p565 = pneg %p104
        %p566 = pneg %p101
        %p567 = pneg %p125
        %p568 = pneg %p122
        %p569 = pneg %p146
        %p570 = pneg %p143
        %p571 = pneg %p167
        %p572 = pneg %p164
        %p573 = pneg %p188
        %p574 = pneg %p185
        %p575 = pneg %p209
        %p576 = pneg %p206
        %p577 = pneg %p230
        %p578 = pneg %p227
        %p579 = pneg %p251
        %p580 = pneg %p248
        %p581 = pneg %p272
        %p582 = pneg %p269
        %p583 = pneg %p293
        %p584 = pneg %p290
        %p585 = pneg %p314
        %p586 = pneg %p311
        %p587 = pneg %p335
        %p588 = pneg %p332
        %p589 = pneg %p361
        %p590 = pneg %p358
        %s591 = sand.u32 %s348, 1
        %s592 = scalar_lea.sflag [#allocation4], %s591
        %s593 = sand.u32 %s348, 1
        %s594 = smul.addr %s593, 32
        %s595 = scalar_lea.vmem [#allocation13], %s594
        %v596 = vlaneseq
        %v597 = vshrl.u32 %v596, 7
        %v598 = vadd.s32 %v597, 8
        %v599 = vlaneseq
        %v600 = vand.u32 %v599, 127
        %vm601 = vcmp.lt.s32.totalorder %v600, 0
        %v602 = vsub.s32 0, %v600
        %v603 = vsel %vm601, %v602, %v600
        %v604 = vshrl.u32 %v603, 4
        %v605 = vand.u32 %v603, 15
        %v606 = vsub.s32 0, %v605
        %v607 = vsel %vm601, %v606, %v605
        %vm608 = vcmp.ne.s32.totalorder %v607, 0
        %vm609 = vcmp.lt.s32.totalorder %v607, 0
        %vm610 = vmand %vm609, %vm608
        %v611 = vadd.s32 %v607, 16
        %v612 = vsel %vm610, %v611, %v607
        %vm613 = vcmp.eq.s32.totalorder %v597, 0
        %vm614 = vcmp.eq.s32.totalorder %v598, 0
        %vm615 = vcmp.eq.s32.totalorder %v597, 15
        %vm616 = vcmp.eq.s32.totalorder %v598, 15
        %vm617 = vcmp.eq.s32.totalorder %v612, 0
        %vm618 = vcmp.eq.s32.totalorder %v612, 15
        %v619 = vld [vmem:[%s515] sm:$0xff]
        %v620 = vld [vmem:[%s515 + $0x8] sm:$0xff]
        %v621 = vld [vmem:[%s525] sm:$0xff]
        %v622 = vld [vmem:[%s525 + $0x8] sm:$0xff]
        %v623 = vmax.f32 %v621, 0.0
        %v624 = vmax.f32 %v622, 0.0
        %v625 = vrot.slane %v623, 7
        %v626 = vrot.slane %v624, 7
        %vm627 = vcmp.lt.s32.totalorder %v597, 1
        %v628 = vsel %vm627, %v625, %v626
        %v629 = vsel %vm627, %v626, %v625
        %v630 = vsel %vm613, 0.0, %v629
        %v631 = vsel %vm614, 0.0, %v628
        %v632 = vrot.slane %v623, 1
        %v633 = vrot.slane %v624, 1
        %vm634 = vcmp.lt.s32.totalorder %v597, 7
        %v635 = vsel %vm634, %v632, %v633
        %v636 = vsel %vm634, %v633, %v632
        %v637 = vsel %vm615, 0.0, %v635
        %v638 = vsel %vm616, 0.0, %v636
        %vm639 = vcmask 1048064
        %640 = vrot.lane.b32.xlu0 %v630, 64
        %v641 = vpop.permute.xlu0 %640
        %v642 = vsel %vm639, %v641, %v630
        %643 = vrot.lane.b32.xlu0 %v631, 64
        %v644 = vpop.permute.xlu0 %643
        %v645 = vsel %vm639, %v644, %v631
        %646 = vrot.lane.b32.xlu0 %v642, 64
        %v647 = vpop.permute.xlu0 %646
        %648 = vrot.lane.b32.xlu0 %v645, 64
        %v649 = vpop.permute.xlu0 %648
        %v650 = vsel %vm639, %v647, %v630
        %v651 = vsel %vm639, %v649, %v631
        %654 = vrot.lane.b32.xlu0 %v650, 65
        %v655 = vpop.permute.xlu0 %654
        %656 = vrot.lane.b32.xlu0 %v651, 65
        %v657 = vpop.permute.xlu0 %656
        %v660 = vsel %vm617, 0.0, %v655
        %v661 = vsel %vm617, 0.0, %v657
        %662 = vrot.lane.b32.xlu0 %v650, 127
        %v663 = vpop.permute.xlu0 %662
        %664 = vrot.lane.b32.xlu0 %v651, 127
        %v665 = vpop.permute.xlu0 %664
        %v668 = vsel %vm618, 0.0, %v663
        %v669 = vsel %vm618, 0.0, %v665
        %670 = vrot.lane.b32.xlu0 %v623, 64
        %v671 = vpop.permute.xlu0 %670
        %v672 = vsel %vm639, %v671, %v623
        %673 = vrot.lane.b32.xlu0 %v624, 64
        %v674 = vpop.permute.xlu0 %673
        %v675 = vsel %vm639, %v674, %v624
        %676 = vrot.lane.b32.xlu0 %v672, 64
        %v677 = vpop.permute.xlu0 %676
        %678 = vrot.lane.b32.xlu0 %v675, 64
        %v679 = vpop.permute.xlu0 %678
        %v680 = vsel %vm639, %v677, %v623
        %v681 = vsel %vm639, %v679, %v624
        %684 = vrot.lane.b32.xlu0 %v680, 65
        %v685 = vpop.permute.xlu0 %684
        %686 = vrot.lane.b32.xlu0 %v681, 65
        %v687 = vpop.permute.xlu0 %686
        %v690 = vsel %vm617, 0.0, %v685
        %v691 = vsel %vm617, 0.0, %v687
        %692 = vrot.lane.b32.xlu0 %v680, 127
        %v693 = vpop.permute.xlu0 %692
        %694 = vrot.lane.b32.xlu0 %v681, 127
        %v695 = vpop.permute.xlu0 %694
        %v698 = vsel %vm618, 0.0, %v693
        %v699 = vsel %vm618, 0.0, %v695
        %700 = vrot.lane.b32.xlu0 %v637, 64
        %v701 = vpop.permute.xlu0 %700
        %v702 = vsel %vm639, %v701, %v637
        %703 = vrot.lane.b32.xlu0 %v638, 64
        %v704 = vpop.permute.xlu0 %703
        %v705 = vsel %vm639, %v704, %v638
        %706 = vrot.lane.b32.xlu0 %v702, 64
        %v707 = vpop.permute.xlu0 %706
        %708 = vrot.lane.b32.xlu0 %v705, 64
        %v709 = vpop.permute.xlu0 %708
        %v710 = vsel %vm639, %v707, %v637
        %v711 = vsel %vm639, %v709, %v638
        %714 = vrot.lane.b32.xlu0 %v710, 65
        %v715 = vpop.permute.xlu0 %714
        %716 = vrot.lane.b32.xlu0 %v711, 65
        %v717 = vpop.permute.xlu0 %716
        %v720 = vsel %vm617, 0.0, %v715
        %v721 = vsel %vm617, 0.0, %v717
        %722 = vrot.lane.b32.xlu0 %v710, 127
        %v723 = vpop.permute.xlu0 %722
        %724 = vrot.lane.b32.xlu0 %v711, 127
        %v725 = vpop.permute.xlu0 %724
        %v728 = vsel %vm618, 0.0, %v723
        %v729 = vsel %vm618, 0.0, %v725
        %v730 = vld [vmem:[%s4] sm:$0x1]
        %v731 = vperm.slane %v730, 0
        %v732 = vmul.f32 %v731, %v660
        %v733 = vmul.f32 %v731, %v661
        %v734 = vld [vmem:[%s4 + $0x4] sm:$0x1]
        %v735 = vperm.slane %v734, 0
        %v736 = vmul.f32 %v735, %v630
        %v737 = vmul.f32 %v735, %v631
        %v738 = vadd.f32 %v732, %v736
        %v739 = vadd.f32 %v733, %v737
        %v740 = vld [vmem:[%s4 + $0x8] sm:$0x1]
        %v741 = vperm.slane %v740, 0
        %v742 = vmul.f32 %v741, %v668
        %v743 = vmul.f32 %v741, %v669
        %v744 = vadd.f32 %v738, %v742
        %v745 = vadd.f32 %v739, %v743
        %v746 = vld [vmem:[%s4 + $0xc] sm:$0x1]
        %v747 = vperm.slane %v746, 0
        %v748 = vmul.f32 %v747, %v690
        %v749 = vmul.f32 %v747, %v691
        %v750 = vadd.f32 %v744, %v748
        %v751 = vadd.f32 %v745, %v749
        %v752 = vld [vmem:[%s4 + $0x10] sm:$0x1]
        %v753 = vperm.slane %v752, 0
        %v754 = vmul.f32 %v753, %v623
        %v755 = vmul.f32 %v753, %v624
        %v756 = vadd.f32 %v750, %v754
        %v757 = vadd.f32 %v751, %v755
        %v758 = vld [vmem:[%s4 + $0x14] sm:$0x1]
        %v759 = vperm.slane %v758, 0
        %v760 = vmul.f32 %v759, %v698
        %v761 = vmul.f32 %v759, %v699
        %v762 = vadd.f32 %v756, %v760
        %v763 = vadd.f32 %v757, %v761
        %v764 = vld [vmem:[%s4 + $0x18] sm:$0x1]
        %v765 = vperm.slane %v764, 0
        %v766 = vmul.f32 %v765, %v720
        %v767 = vmul.f32 %v765, %v721
        %v768 = vadd.f32 %v762, %v766
        %v769 = vadd.f32 %v763, %v767
        %v770 = vld [vmem:[%s4 + $0x1c] sm:$0x1]
        %v771 = vperm.slane %v770, 0
        %v772 = vmul.f32 %v771, %v637
        %v773 = vmul.f32 %v771, %v638
        %v774 = vadd.f32 %v768, %v772
        %v775 = vadd.f32 %v769, %v773
        %v776 = vld [vmem:[%s4 + $0x20] sm:$0x1]
        %v777 = vperm.slane %v776, 0
        %v778 = vmul.f32 %v777, %v728
        %v779 = vmul.f32 %v777, %v729
        %v780 = vadd.f32 %v774, %v778
        %v781 = vadd.f32 %v775, %v779
        %784 = vrot.lane.b32.xlu0 %v780, 112
        %v785 = vpop.permute.xlu0 %784
        %786 = vrot.lane.b32.xlu0 %v781, 112
        %v787 = vpop.permute.xlu0 %786
        %v790 = vadd.f32 %v780, %v785
        %v791 = vadd.f32 %v781, %v787
        %792 = vrot.lane.b32.xlu0 %v780, 96
        %v793 = vpop.permute.xlu0 %792
        %794 = vrot.lane.b32.xlu0 %v781, 96
        %v795 = vpop.permute.xlu0 %794
        %v798 = vadd.f32 %v790, %v793
        %v799 = vadd.f32 %v791, %v795
        %800 = vrot.lane.b32.xlu0 %v780, 80
        %v801 = vpop.permute.xlu0 %800
        %802 = vrot.lane.b32.xlu0 %v781, 80
        %v803 = vpop.permute.xlu0 %802
        %v806 = vadd.f32 %v798, %v801
        %v807 = vadd.f32 %v799, %v803
        %v808 = vld [vmem:[%s4 + $0x1] sm:$0x1]
        %v809 = vperm.slane %v808, 0
        %v810 = vmul.f32 %v809, %v660
        %v811 = vmul.f32 %v809, %v661
        %v812 = vld [vmem:[%s4 + $0x5] sm:$0x1]
        %v813 = vperm.slane %v812, 0
        %v814 = vmul.f32 %v813, %v630
        %v815 = vmul.f32 %v813, %v631
        %v816 = vadd.f32 %v810, %v814
        %v817 = vadd.f32 %v811, %v815
        %v818 = vld [vmem:[%s4 + $0x9] sm:$0x1]
        %v819 = vperm.slane %v818, 0
        %v820 = vmul.f32 %v819, %v668
        %v821 = vmul.f32 %v819, %v669
        %v822 = vadd.f32 %v816, %v820
        %v823 = vadd.f32 %v817, %v821
        %v824 = vld [vmem:[%s4 + $0xd] sm:$0x1]
        %v825 = vperm.slane %v824, 0
        %v826 = vmul.f32 %v825, %v690
        %v827 = vmul.f32 %v825, %v691
        %v828 = vadd.f32 %v822, %v826
        %v829 = vadd.f32 %v823, %v827
        %v830 = vld [vmem:[%s4 + $0x11] sm:$0x1]
        %v831 = vperm.slane %v830, 0
        %v832 = vmul.f32 %v831, %v623
        %v833 = vmul.f32 %v831, %v624
        %v834 = vadd.f32 %v828, %v832
        %v835 = vadd.f32 %v829, %v833
        %v836 = vld [vmem:[%s4 + $0x15] sm:$0x1]
        %v837 = vperm.slane %v836, 0
        %v838 = vmul.f32 %v837, %v698
        %v839 = vmul.f32 %v837, %v699
        %v840 = vadd.f32 %v834, %v838
        %v841 = vadd.f32 %v835, %v839
        %v842 = vld [vmem:[%s4 + $0x19] sm:$0x1]
        %v843 = vperm.slane %v842, 0
        %v844 = vmul.f32 %v843, %v720
        %v845 = vmul.f32 %v843, %v721
        %v846 = vadd.f32 %v840, %v844
        %v847 = vadd.f32 %v841, %v845
        %v848 = vld [vmem:[%s4 + $0x1d] sm:$0x1]
        %v849 = vperm.slane %v848, 0
        %v850 = vmul.f32 %v849, %v637
        %v851 = vmul.f32 %v849, %v638
        %v852 = vadd.f32 %v846, %v850
        %v853 = vadd.f32 %v847, %v851
        %v854 = vld [vmem:[%s4 + $0x21] sm:$0x1]
        %v855 = vperm.slane %v854, 0
        %v856 = vmul.f32 %v855, %v728
        %v857 = vmul.f32 %v855, %v729
        %v858 = vadd.f32 %v852, %v856
        %v859 = vadd.f32 %v853, %v857
        %862 = vrot.lane.b32.xlu0 %v858, 112
        %v863 = vpop.permute.xlu0 %862
        %864 = vrot.lane.b32.xlu0 %v859, 112
        %v865 = vpop.permute.xlu0 %864
        %v868 = vadd.f32 %v858, %v863
        %v869 = vadd.f32 %v859, %v865
        %870 = vrot.lane.b32.xlu0 %v858, 96
        %v871 = vpop.permute.xlu0 %870
        %872 = vrot.lane.b32.xlu0 %v859, 96
        %v873 = vpop.permute.xlu0 %872
        %v876 = vadd.f32 %v868, %v871
        %v877 = vadd.f32 %v869, %v873
        %878 = vrot.lane.b32.xlu0 %v858, 80
        %v879 = vpop.permute.xlu0 %878
        %880 = vrot.lane.b32.xlu0 %v859, 80
        %v881 = vpop.permute.xlu0 %880
        %v884 = vadd.f32 %v876, %v879
        %v885 = vadd.f32 %v877, %v881
        %v886 = vld [vmem:[%s4 + $0x2] sm:$0x1]
        %v887 = vperm.slane %v886, 0
        %v888 = vmul.f32 %v887, %v660
        %v889 = vmul.f32 %v887, %v661
        %v890 = vld [vmem:[%s4 + $0x6] sm:$0x1]
        %v891 = vperm.slane %v890, 0
        %v892 = vmul.f32 %v891, %v630
        %v893 = vmul.f32 %v891, %v631
        %v894 = vadd.f32 %v888, %v892
        %v895 = vadd.f32 %v889, %v893
        %v896 = vld [vmem:[%s4 + $0xa] sm:$0x1]
        %v897 = vperm.slane %v896, 0
        %v898 = vmul.f32 %v897, %v668
        %v899 = vmul.f32 %v897, %v669
        %v900 = vadd.f32 %v894, %v898
        %v901 = vadd.f32 %v895, %v899
        %v902 = vld [vmem:[%s4 + $0xe] sm:$0x1]
        %v903 = vperm.slane %v902, 0
        %v904 = vmul.f32 %v903, %v690
        %v905 = vmul.f32 %v903, %v691
        %v906 = vadd.f32 %v900, %v904
        %v907 = vadd.f32 %v901, %v905
        %v908 = vld [vmem:[%s4 + $0x12] sm:$0x1]
        %v909 = vperm.slane %v908, 0
        %v910 = vmul.f32 %v909, %v623
        %v911 = vmul.f32 %v909, %v624
        %v912 = vadd.f32 %v906, %v910
        %v913 = vadd.f32 %v907, %v911
        %v914 = vld [vmem:[%s4 + $0x16] sm:$0x1]
        %v915 = vperm.slane %v914, 0
        %v916 = vmul.f32 %v915, %v698
        %v917 = vmul.f32 %v915, %v699
        %v918 = vadd.f32 %v912, %v916
        %v919 = vadd.f32 %v913, %v917
        %v920 = vld [vmem:[%s4 + $0x1a] sm:$0x1]
        %v921 = vperm.slane %v920, 0
        %v922 = vmul.f32 %v921, %v720
        %v923 = vmul.f32 %v921, %v721
        %v924 = vadd.f32 %v918, %v922
        %v925 = vadd.f32 %v919, %v923
        %v926 = vld [vmem:[%s4 + $0x1e] sm:$0x1]
        %v927 = vperm.slane %v926, 0
        %v928 = vmul.f32 %v927, %v637
        %v929 = vmul.f32 %v927, %v638
        %v930 = vadd.f32 %v924, %v928
        %v931 = vadd.f32 %v925, %v929
        %v932 = vld [vmem:[%s4 + $0x22] sm:$0x1]
        %v933 = vperm.slane %v932, 0
        %v934 = vmul.f32 %v933, %v728
        %v935 = vmul.f32 %v933, %v729
        %v936 = vadd.f32 %v930, %v934
        %v937 = vadd.f32 %v931, %v935
        %940 = vrot.lane.b32.xlu0 %v936, 112
        %v941 = vpop.permute.xlu0 %940
        %942 = vrot.lane.b32.xlu0 %v937, 112
        %v943 = vpop.permute.xlu0 %942
        %v946 = vadd.f32 %v936, %v941
        %v947 = vadd.f32 %v937, %v943
        %948 = vrot.lane.b32.xlu0 %v936, 96
        %v949 = vpop.permute.xlu0 %948
        %950 = vrot.lane.b32.xlu0 %v937, 96
        %v951 = vpop.permute.xlu0 %950
        %v954 = vadd.f32 %v946, %v949
        %v955 = vadd.f32 %v947, %v951
        %956 = vrot.lane.b32.xlu0 %v936, 80
        %v957 = vpop.permute.xlu0 %956
        %958 = vrot.lane.b32.xlu0 %v937, 80
        %v959 = vpop.permute.xlu0 %958
        %v962 = vadd.f32 %v954, %v957
        %v963 = vadd.f32 %v955, %v959
        %v964 = vld [vmem:[%s4 + $0x3] sm:$0x1]
        %v965 = vperm.slane %v964, 0
        %v966 = vmul.f32 %v965, %v660
        %v967 = vmul.f32 %v965, %v661
        %v968 = vld [vmem:[%s4 + $0x7] sm:$0x1]
        %v969 = vperm.slane %v968, 0
        %v970 = vmul.f32 %v969, %v630
        %v971 = vmul.f32 %v969, %v631
        %v972 = vadd.f32 %v966, %v970
        %v973 = vadd.f32 %v967, %v971
        %v974 = vld [vmem:[%s4 + $0xb] sm:$0x1]
        %v975 = vperm.slane %v974, 0
        %v976 = vmul.f32 %v975, %v668
        %v977 = vmul.f32 %v975, %v669
        %v978 = vadd.f32 %v972, %v976
        %v979 = vadd.f32 %v973, %v977
        %v980 = vld [vmem:[%s4 + $0xf] sm:$0x1]
        %v981 = vperm.slane %v980, 0
        %v982 = vmul.f32 %v981, %v690
        %v983 = vmul.f32 %v981, %v691
        %v984 = vadd.f32 %v978, %v982
        %v985 = vadd.f32 %v979, %v983
        %v986 = vld [vmem:[%s4 + $0x13] sm:$0x1]
        %v987 = vperm.slane %v986, 0
        %v988 = vmul.f32 %v987, %v623
        %v989 = vmul.f32 %v987, %v624
        %v990 = vadd.f32 %v984, %v988
        %v991 = vadd.f32 %v985, %v989
        %v992 = vld [vmem:[%s4 + $0x17] sm:$0x1]
        %v993 = vperm.slane %v992, 0
        %v994 = vmul.f32 %v993, %v698
        %v995 = vmul.f32 %v993, %v699
        %v996 = vadd.f32 %v990, %v994
        %v997 = vadd.f32 %v991, %v995
        %v998 = vld [vmem:[%s4 + $0x1b] sm:$0x1]
        %v999 = vperm.slane %v998, 0
        %v1000 = vmul.f32 %v999, %v720
        %v1001 = vmul.f32 %v999, %v721
        %v1002 = vadd.f32 %v996, %v1000
        %v1003 = vadd.f32 %v997, %v1001
        %v1004 = vld [vmem:[%s4 + $0x1f] sm:$0x1]
        %v1005 = vperm.slane %v1004, 0
        %v1006 = vmul.f32 %v1005, %v637
        %v1007 = vmul.f32 %v1005, %v638
        %v1008 = vadd.f32 %v1002, %v1006
        %v1009 = vadd.f32 %v1003, %v1007
        %v1010 = vld [vmem:[%s4 + $0x23] sm:$0x1]
        %v1011 = vperm.slane %v1010, 0
        %v1012 = vmul.f32 %v1011, %v728
        %v1013 = vmul.f32 %v1011, %v729
        %v1014 = vadd.f32 %v1008, %v1012
        %v1015 = vadd.f32 %v1009, %v1013
        %1018 = vrot.lane.b32.xlu0 %v1014, 112
        %v1019 = vpop.permute.xlu0 %1018
        %1020 = vrot.lane.b32.xlu0 %v1015, 112
        %v1021 = vpop.permute.xlu0 %1020
        %v1024 = vadd.f32 %v1014, %v1019
        %v1025 = vadd.f32 %v1015, %v1021
        %1026 = vrot.lane.b32.xlu0 %v1014, 96
        %v1027 = vpop.permute.xlu0 %1026
        %1028 = vrot.lane.b32.xlu0 %v1015, 96
        %v1029 = vpop.permute.xlu0 %1028
        %v1032 = vadd.f32 %v1024, %v1027
        %v1033 = vadd.f32 %v1025, %v1029
        %1034 = vrot.lane.b32.xlu0 %v1014, 80
        %v1035 = vpop.permute.xlu0 %1034
        %1036 = vrot.lane.b32.xlu0 %v1015, 80
        %v1037 = vpop.permute.xlu0 %1036
        %v1040 = vadd.f32 %v1032, %v1035
        %v1041 = vadd.f32 %v1033, %v1037
        %1044 = vrot.lane.b32.xlu0 %v884, 16
        %v1045 = vpop.permute.xlu0 %1044
        %1046 = vrot.lane.b32.xlu0 %v885, 16
        %v1047 = vpop.permute.xlu0 %1046
        %1052 = vrot.lane.b32.xlu0 %v962, 32
        %v1053 = vpop.permute.xlu0 %1052
        %1054 = vrot.lane.b32.xlu0 %v963, 32
        %v1055 = vpop.permute.xlu0 %1054
        %1060 = vrot.lane.b32.xlu0 %v1040, 48
        %v1061 = vpop.permute.xlu0 %1060
        %1062 = vrot.lane.b32.xlu0 %v1041, 48
        %v1063 = vpop.permute.xlu0 %1062
        %vm1066 = vcmask 130048
        %v1067 = vsel %vm1066, %v806, %v1045
        %v1068 = vsel %vm1066, %v807, %v1047
        %vm1069 = vcmask 261120
        %v1070 = vsel %vm1069, %v1067, %v1053
        %v1071 = vsel %vm1069, %v1068, %v1055
        %vm1072 = vcmask 392192
        %v1073 = vsel %vm1072, %v1070, %v1061
        %v1074 = vsel %vm1072, %v1071, %v1063
        %v1075 = vld [vmem:[%s9] sm:$0x1]
        %v1077 = vperm.slane %v1075, 0
        %v1079 = vadd.f32 %v1073, %v1077
        %v1080 = vadd.f32 %v1074, %v1077
        %v1081 = vmax.f32 %v1079, 0.0
        %v1082 = vmax.f32 %v1080, 0.0
        %v1083 = vrot.slane %v1081, 7
        %v1084 = vrot.slane %v1082, 7
        %v1085 = vsel %vm627, %v1083, %v1084
        %v1086 = vsel %vm627, %v1084, %v1083
        %v1087 = vsel %vm613, 0.0, %v1086
        %v1088 = vsel %vm614, 0.0, %v1085
        %v1089 = vrot.slane %v1081, 1
        %v1090 = vrot.slane %v1082, 1
        %v1091 = vsel %vm634, %v1089, %v1090
        %v1092 = vsel %vm634, %v1090, %v1089
        %v1093 = vsel %vm615, 0.0, %v1091
        %v1094 = vsel %vm616, 0.0, %v1092
        %1095 = vrot.lane.b32.xlu0 %v1087, 64
        %v1096 = vpop.permute.xlu0 %1095
        %v1097 = vsel %vm639, %v1096, %v1087
        %1098 = vrot.lane.b32.xlu0 %v1088, 64
        %v1099 = vpop.permute.xlu0 %1098
        %v1100 = vsel %vm639, %v1099, %v1088
        %1101 = vrot.lane.b32.xlu0 %v1097, 64
        %v1102 = vpop.permute.xlu0 %1101
        %1103 = vrot.lane.b32.xlu0 %v1100, 64
        %v1104 = vpop.permute.xlu0 %1103
        %v1105 = vsel %vm639, %v1102, %v1087
        %v1106 = vsel %vm639, %v1104, %v1088
        %1109 = vrot.lane.b32.xlu0 %v1105, 65
        %v1110 = vpop.permute.xlu0 %1109
        %1111 = vrot.lane.b32.xlu0 %v1106, 65
        %v1112 = vpop.permute.xlu0 %1111
        %v1115 = vsel %vm617, 0.0, %v1110
        %v1116 = vsel %vm617, 0.0, %v1112
        %1117 = vrot.lane.b32.xlu0 %v1105, 127
        %v1118 = vpop.permute.xlu0 %1117
        %1119 = vrot.lane.b32.xlu0 %v1106, 127
        %v1120 = vpop.permute.xlu0 %1119
        %v1123 = vsel %vm618, 0.0, %v1118
        %v1124 = vsel %vm618, 0.0, %v1120
        %1125 = vrot.lane.b32.xlu0 %v1081, 64
        %v1126 = vpop.permute.xlu0 %1125
        %v1127 = vsel %vm639, %v1126, %v1081
        %1128 = vrot.lane.b32.xlu0 %v1082, 64
        %v1129 = vpop.permute.xlu0 %1128
        %v1130 = vsel %vm639, %v1129, %v1082
        %1131 = vrot.lane.b32.xlu0 %v1127, 64
        %v1132 = vpop.permute.xlu0 %1131
        %1133 = vrot.lane.b32.xlu0 %v1130, 64
        %v1134 = vpop.permute.xlu0 %1133
        %v1135 = vsel %vm639, %v1132, %v1081
        %v1136 = vsel %vm639, %v1134, %v1082
        %1139 = vrot.lane.b32.xlu0 %v1135, 65
        %v1140 = vpop.permute.xlu0 %1139
        %1141 = vrot.lane.b32.xlu0 %v1136, 65
        %v1142 = vpop.permute.xlu0 %1141
        %v1145 = vsel %vm617, 0.0, %v1140
        %v1146 = vsel %vm617, 0.0, %v1142
        %1147 = vrot.lane.b32.xlu0 %v1135, 127
        %v1148 = vpop.permute.xlu0 %1147
        %1149 = vrot.lane.b32.xlu0 %v1136, 127
        %v1150 = vpop.permute.xlu0 %1149
        %v1153 = vsel %vm618, 0.0, %v1148
        %v1154 = vsel %vm618, 0.0, %v1150
        %1155 = vrot.lane.b32.xlu0 %v1093, 64
        %v1156 = vpop.permute.xlu0 %1155
        %v1157 = vsel %vm639, %v1156, %v1093
        %1158 = vrot.lane.b32.xlu0 %v1094, 64
        %v1159 = vpop.permute.xlu0 %1158
        %v1160 = vsel %vm639, %v1159, %v1094
        %1161 = vrot.lane.b32.xlu0 %v1157, 64
        %v1162 = vpop.permute.xlu0 %1161
        %1163 = vrot.lane.b32.xlu0 %v1160, 64
        %v1164 = vpop.permute.xlu0 %1163
        %v1165 = vsel %vm639, %v1162, %v1093
        %v1166 = vsel %vm639, %v1164, %v1094
        %1169 = vrot.lane.b32.xlu0 %v1165, 65
        %v1170 = vpop.permute.xlu0 %1169
        %1171 = vrot.lane.b32.xlu0 %v1166, 65
        %v1172 = vpop.permute.xlu0 %1171
        %v1175 = vsel %vm617, 0.0, %v1170
        %v1176 = vsel %vm617, 0.0, %v1172
        %1177 = vrot.lane.b32.xlu0 %v1165, 127
        %v1178 = vpop.permute.xlu0 %1177
        %1179 = vrot.lane.b32.xlu0 %v1166, 127
        %v1180 = vpop.permute.xlu0 %1179
        %v1183 = vsel %vm618, 0.0, %v1178
        %v1184 = vsel %vm618, 0.0, %v1180
        %v1185 = vld [vmem:[#allocation8] sm:$0x1]
        %v1186 = vperm.slane %v1185, 0
        %v1187 = vmul.f32 %v1186, %v1115
        %v1188 = vmul.f32 %v1186, %v1116
        %v1189 = vld [vmem:[#allocation8 + $0x4] sm:$0x1]
        %v1190 = vperm.slane %v1189, 0
        %v1191 = vmul.f32 %v1190, %v1087
        %v1192 = vmul.f32 %v1190, %v1088
        %v1193 = vadd.f32 %v1187, %v1191
        %v1194 = vadd.f32 %v1188, %v1192
        %v1195 = vld [vmem:[#allocation8 + $0x8] sm:$0x1]
        %v1196 = vperm.slane %v1195, 0
        %v1197 = vmul.f32 %v1196, %v1123
        %v1198 = vmul.f32 %v1196, %v1124
        %v1199 = vadd.f32 %v1193, %v1197
        %v1200 = vadd.f32 %v1194, %v1198
        %v1201 = vld [vmem:[#allocation8 + $0xc] sm:$0x1]
        %v1202 = vperm.slane %v1201, 0
        %v1203 = vmul.f32 %v1202, %v1145
        %v1204 = vmul.f32 %v1202, %v1146
        %v1205 = vadd.f32 %v1199, %v1203
        %v1206 = vadd.f32 %v1200, %v1204
        %v1207 = vld [vmem:[#allocation8 + $0x10] sm:$0x1]
        %v1208 = vperm.slane %v1207, 0
        %v1209 = vmul.f32 %v1208, %v1081
        %v1210 = vmul.f32 %v1208, %v1082
        %v1211 = vadd.f32 %v1205, %v1209
        %v1212 = vadd.f32 %v1206, %v1210
        %v1213 = vld [vmem:[#allocation8 + $0x14] sm:$0x1]
        %v1214 = vperm.slane %v1213, 0
        %v1215 = vmul.f32 %v1214, %v1153
        %v1216 = vmul.f32 %v1214, %v1154
        %v1217 = vadd.f32 %v1211, %v1215
        %v1218 = vadd.f32 %v1212, %v1216
        %v1219 = vld [vmem:[#allocation8 + $0x18] sm:$0x1]
        %v1220 = vperm.slane %v1219, 0
        %v1221 = vmul.f32 %v1220, %v1175
        %v1222 = vmul.f32 %v1220, %v1176
        %v1223 = vadd.f32 %v1217, %v1221
        %v1224 = vadd.f32 %v1218, %v1222
        %v1225 = vld [vmem:[#allocation8 + $0x1c] sm:$0x1]
        %v1226 = vperm.slane %v1225, 0
        %v1227 = vmul.f32 %v1226, %v1093
        %v1228 = vmul.f32 %v1226, %v1094
        %v1229 = vadd.f32 %v1223, %v1227
        %v1230 = vadd.f32 %v1224, %v1228
        %v1231 = vld [vmem:[#allocation8 + $0x20] sm:$0x1]
        %v1232 = vperm.slane %v1231, 0
        %v1233 = vmul.f32 %v1232, %v1183
        %v1234 = vmul.f32 %v1232, %v1184
        %v1235 = vadd.f32 %v1229, %v1233
        %v1236 = vadd.f32 %v1230, %v1234
        %1239 = vrot.lane.b32.xlu0 %v1235, 112
        %v1240 = vpop.permute.xlu0 %1239
        %1241 = vrot.lane.b32.xlu0 %v1236, 112
        %v1242 = vpop.permute.xlu0 %1241
        %v1245 = vadd.f32 %v1235, %v1240
        %v1246 = vadd.f32 %v1236, %v1242
        %1247 = vrot.lane.b32.xlu0 %v1235, 96
        %v1248 = vpop.permute.xlu0 %1247
        %1249 = vrot.lane.b32.xlu0 %v1236, 96
        %v1250 = vpop.permute.xlu0 %1249
        %v1253 = vadd.f32 %v1245, %v1248
        %v1254 = vadd.f32 %v1246, %v1250
        %1255 = vrot.lane.b32.xlu0 %v1235, 80
        %v1256 = vpop.permute.xlu0 %1255
        %1257 = vrot.lane.b32.xlu0 %v1236, 80
        %v1258 = vpop.permute.xlu0 %1257
        %v1261 = vadd.f32 %v1253, %v1256
        %v1262 = vadd.f32 %v1254, %v1258
        %v1263 = vld [vmem:[#allocation8 + $0x1] sm:$0x1]
        %v1264 = vperm.slane %v1263, 0
        %v1265 = vmul.f32 %v1264, %v1115
        %v1266 = vmul.f32 %v1264, %v1116
        %v1267 = vld [vmem:[#allocation8 + $0x5] sm:$0x1]
        %v1268 = vperm.slane %v1267, 0
        %v1269 = vmul.f32 %v1268, %v1087
        %v1270 = vmul.f32 %v1268, %v1088
        %v1271 = vadd.f32 %v1265, %v1269
        %v1272 = vadd.f32 %v1266, %v1270
        %v1273 = vld [vmem:[#allocation8 + $0x9] sm:$0x1]
        %v1274 = vperm.slane %v1273, 0
        %v1275 = vmul.f32 %v1274, %v1123
        %v1276 = vmul.f32 %v1274, %v1124
        %v1277 = vadd.f32 %v1271, %v1275
        %v1278 = vadd.f32 %v1272, %v1276
        %v1279 = vld [vmem:[#allocation8 + $0xd] sm:$0x1]
        %v1280 = vperm.slane %v1279, 0
        %v1281 = vmul.f32 %v1280, %v1145
        %v1282 = vmul.f32 %v1280, %v1146
        %v1283 = vadd.f32 %v1277, %v1281
        %v1284 = vadd.f32 %v1278, %v1282
        %v1285 = vld [vmem:[#allocation8 + $0x11] sm:$0x1]
        %v1286 = vperm.slane %v1285, 0
        %v1287 = vmul.f32 %v1286, %v1081
        %v1288 = vmul.f32 %v1286, %v1082
        %v1289 = vadd.f32 %v1283, %v1287
        %v1290 = vadd.f32 %v1284, %v1288
        %v1291 = vld [vmem:[#allocation8 + $0x15] sm:$0x1]
        %v1292 = vperm.slane %v1291, 0
        %v1293 = vmul.f32 %v1292, %v1153
        %v1294 = vmul.f32 %v1292, %v1154
        %v1295 = vadd.f32 %v1289, %v1293
        %v1296 = vadd.f32 %v1290, %v1294
        %v1297 = vld [vmem:[#allocation8 + $0x19] sm:$0x1]
        %v1298 = vperm.slane %v1297, 0
        %v1299 = vmul.f32 %v1298, %v1175
        %v1300 = vmul.f32 %v1298, %v1176
        %v1301 = vadd.f32 %v1295, %v1299
        %v1302 = vadd.f32 %v1296, %v1300
        %v1303 = vld [vmem:[#allocation8 + $0x1d] sm:$0x1]
        %v1304 = vperm.slane %v1303, 0
        %v1305 = vmul.f32 %v1304, %v1093
        %v1306 = vmul.f32 %v1304, %v1094
        %v1307 = vadd.f32 %v1301, %v1305
        %v1308 = vadd.f32 %v1302, %v1306
        %v1309 = vld [vmem:[#allocation8 + $0x21] sm:$0x1]
        %v1310 = vperm.slane %v1309, 0
        %v1311 = vmul.f32 %v1310, %v1183
        %v1312 = vmul.f32 %v1310, %v1184
        %v1313 = vadd.f32 %v1307, %v1311
        %v1314 = vadd.f32 %v1308, %v1312
        %1317 = vrot.lane.b32.xlu0 %v1313, 112
        %v1318 = vpop.permute.xlu0 %1317
        %1319 = vrot.lane.b32.xlu0 %v1314, 112
        %v1320 = vpop.permute.xlu0 %1319
        %v1323 = vadd.f32 %v1313, %v1318
        %v1324 = vadd.f32 %v1314, %v1320
        %1325 = vrot.lane.b32.xlu0 %v1313, 96
        %v1326 = vpop.permute.xlu0 %1325
        %1327 = vrot.lane.b32.xlu0 %v1314, 96
        %v1328 = vpop.permute.xlu0 %1327
        %v1331 = vadd.f32 %v1323, %v1326
        %v1332 = vadd.f32 %v1324, %v1328
        %1333 = vrot.lane.b32.xlu0 %v1313, 80
        %v1334 = vpop.permute.xlu0 %1333
        %1335 = vrot.lane.b32.xlu0 %v1314, 80
        %v1336 = vpop.permute.xlu0 %1335
        %v1339 = vadd.f32 %v1331, %v1334
        %v1340 = vadd.f32 %v1332, %v1336
        %v1341 = vld [vmem:[#allocation8 + $0x2] sm:$0x1]
        %v1342 = vperm.slane %v1341, 0
        %v1343 = vmul.f32 %v1342, %v1115
        %v1344 = vmul.f32 %v1342, %v1116
        %v1345 = vld [vmem:[#allocation8 + $0x6] sm:$0x1]
        %v1346 = vperm.slane %v1345, 0
        %v1347 = vmul.f32 %v1346, %v1087
        %v1348 = vmul.f32 %v1346, %v1088
        %v1349 = vadd.f32 %v1343, %v1347
        %v1350 = vadd.f32 %v1344, %v1348
        %v1351 = vld [vmem:[#allocation8 + $0xa] sm:$0x1]
        %v1352 = vperm.slane %v1351, 0
        %v1353 = vmul.f32 %v1352, %v1123
        %v1354 = vmul.f32 %v1352, %v1124
        %v1355 = vadd.f32 %v1349, %v1353
        %v1356 = vadd.f32 %v1350, %v1354
        %v1357 = vld [vmem:[#allocation8 + $0xe] sm:$0x1]
        %v1358 = vperm.slane %v1357, 0
        %v1359 = vmul.f32 %v1358, %v1145
        %v1360 = vmul.f32 %v1358, %v1146
        %v1361 = vadd.f32 %v1355, %v1359
        %v1362 = vadd.f32 %v1356, %v1360
        %v1363 = vld [vmem:[#allocation8 + $0x12] sm:$0x1]
        %v1364 = vperm.slane %v1363, 0
        %v1365 = vmul.f32 %v1364, %v1081
        %v1366 = vmul.f32 %v1364, %v1082
        %v1367 = vadd.f32 %v1361, %v1365
        %v1368 = vadd.f32 %v1362, %v1366
        %v1369 = vld [vmem:[#allocation8 + $0x16] sm:$0x1]
        %v1370 = vperm.slane %v1369, 0
        %v1371 = vmul.f32 %v1370, %v1153
        %v1372 = vmul.f32 %v1370, %v1154
        %v1373 = vadd.f32 %v1367, %v1371
        %v1374 = vadd.f32 %v1368, %v1372
        %v1375 = vld [vmem:[#allocation8 + $0x1a] sm:$0x1]
        %v1376 = vperm.slane %v1375, 0
        %v1377 = vmul.f32 %v1376, %v1175
        %v1378 = vmul.f32 %v1376, %v1176
        %v1379 = vadd.f32 %v1373, %v1377
        %v1380 = vadd.f32 %v1374, %v1378
        %v1381 = vld [vmem:[#allocation8 + $0x1e] sm:$0x1]
        %v1382 = vperm.slane %v1381, 0
        %v1383 = vmul.f32 %v1382, %v1093
        %v1384 = vmul.f32 %v1382, %v1094
        %v1385 = vadd.f32 %v1379, %v1383
        %v1386 = vadd.f32 %v1380, %v1384
        %v1387 = vld [vmem:[#allocation8 + $0x22] sm:$0x1]
        %v1388 = vperm.slane %v1387, 0
        %v1389 = vmul.f32 %v1388, %v1183
        %v1390 = vmul.f32 %v1388, %v1184
        %v1391 = vadd.f32 %v1385, %v1389
        %v1392 = vadd.f32 %v1386, %v1390
        %1395 = vrot.lane.b32.xlu0 %v1391, 112
        %v1396 = vpop.permute.xlu0 %1395
        %1397 = vrot.lane.b32.xlu0 %v1392, 112
        %v1398 = vpop.permute.xlu0 %1397
        %v1401 = vadd.f32 %v1391, %v1396
        %v1402 = vadd.f32 %v1392, %v1398
        %1403 = vrot.lane.b32.xlu0 %v1391, 96
        %v1404 = vpop.permute.xlu0 %1403
        %1405 = vrot.lane.b32.xlu0 %v1392, 96
        %v1406 = vpop.permute.xlu0 %1405
        %v1409 = vadd.f32 %v1401, %v1404
        %v1410 = vadd.f32 %v1402, %v1406
        %1411 = vrot.lane.b32.xlu0 %v1391, 80
        %v1412 = vpop.permute.xlu0 %1411
        %1413 = vrot.lane.b32.xlu0 %v1392, 80
        %v1414 = vpop.permute.xlu0 %1413
        %v1417 = vadd.f32 %v1409, %v1412
        %v1418 = vadd.f32 %v1410, %v1414
        %v1419 = vld [vmem:[#allocation8 + $0x3] sm:$0x1]
        %v1420 = vperm.slane %v1419, 0
        %v1421 = vmul.f32 %v1420, %v1115
        %v1422 = vmul.f32 %v1420, %v1116
        %v1423 = vld [vmem:[#allocation8 + $0x7] sm:$0x1]
        %v1424 = vperm.slane %v1423, 0
        %v1425 = vmul.f32 %v1424, %v1087
        %v1426 = vmul.f32 %v1424, %v1088
        %v1427 = vadd.f32 %v1421, %v1425
        %v1428 = vadd.f32 %v1422, %v1426
        %v1429 = vld [vmem:[#allocation8 + $0xb] sm:$0x1]
        %v1430 = vperm.slane %v1429, 0
        %v1431 = vmul.f32 %v1430, %v1123
        %v1432 = vmul.f32 %v1430, %v1124
        %v1433 = vadd.f32 %v1427, %v1431
        %v1434 = vadd.f32 %v1428, %v1432
        %v1435 = vld [vmem:[#allocation8 + $0xf] sm:$0x1]
        %v1436 = vperm.slane %v1435, 0
        %v1437 = vmul.f32 %v1436, %v1145
        %v1438 = vmul.f32 %v1436, %v1146
        %v1439 = vadd.f32 %v1433, %v1437
        %v1440 = vadd.f32 %v1434, %v1438
        %v1441 = vld [vmem:[#allocation8 + $0x13] sm:$0x1]
        %v1442 = vperm.slane %v1441, 0
        %v1443 = vmul.f32 %v1442, %v1081
        %v1444 = vmul.f32 %v1442, %v1082
        %v1445 = vadd.f32 %v1439, %v1443
        %v1446 = vadd.f32 %v1440, %v1444
        %v1447 = vld [vmem:[#allocation8 + $0x17] sm:$0x1]
        %v1448 = vperm.slane %v1447, 0
        %v1449 = vmul.f32 %v1448, %v1153
        %v1450 = vmul.f32 %v1448, %v1154
        %v1451 = vadd.f32 %v1445, %v1449
        %v1452 = vadd.f32 %v1446, %v1450
        %v1453 = vld [vmem:[#allocation8 + $0x1b] sm:$0x1]
        %v1454 = vperm.slane %v1453, 0
        %v1455 = vmul.f32 %v1454, %v1175
        %v1456 = vmul.f32 %v1454, %v1176
        %v1457 = vadd.f32 %v1451, %v1455
        %v1458 = vadd.f32 %v1452, %v1456
        %v1459 = vld [vmem:[#allocation8 + $0x1f] sm:$0x1]
        %v1460 = vperm.slane %v1459, 0
        %v1461 = vmul.f32 %v1460, %v1093
        %v1462 = vmul.f32 %v1460, %v1094
        %v1463 = vadd.f32 %v1457, %v1461
        %v1464 = vadd.f32 %v1458, %v1462
        %v1465 = vld [vmem:[#allocation8 + $0x23] sm:$0x1]
        %v1466 = vperm.slane %v1465, 0
        %v1467 = vmul.f32 %v1466, %v1183
        %v1468 = vmul.f32 %v1466, %v1184
        %v1469 = vadd.f32 %v1463, %v1467
        %v1470 = vadd.f32 %v1464, %v1468
        %1473 = vrot.lane.b32.xlu0 %v1469, 112
        %v1474 = vpop.permute.xlu0 %1473
        %1475 = vrot.lane.b32.xlu0 %v1470, 112
        %v1476 = vpop.permute.xlu0 %1475
        %v1479 = vadd.f32 %v1469, %v1474
        %v1480 = vadd.f32 %v1470, %v1476
        %1481 = vrot.lane.b32.xlu0 %v1469, 96
        %v1482 = vpop.permute.xlu0 %1481
        %1483 = vrot.lane.b32.xlu0 %v1470, 96
        %v1484 = vpop.permute.xlu0 %1483
        %v1487 = vadd.f32 %v1479, %v1482
        %v1488 = vadd.f32 %v1480, %v1484
        %1489 = vrot.lane.b32.xlu0 %v1469, 80
        %v1490 = vpop.permute.xlu0 %1489
        %1491 = vrot.lane.b32.xlu0 %v1470, 80
        %v1492 = vpop.permute.xlu0 %1491
        %v1495 = vadd.f32 %v1487, %v1490
        %v1496 = vadd.f32 %v1488, %v1492
        %1499 = vrot.lane.b32.xlu0 %v1339, 16
        %v1500 = vpop.permute.xlu0 %1499
        %1501 = vrot.lane.b32.xlu0 %v1340, 16
        %v1502 = vpop.permute.xlu0 %1501
        %1507 = vrot.lane.b32.xlu0 %v1417, 32
        %v1508 = vpop.permute.xlu0 %1507
        %1509 = vrot.lane.b32.xlu0 %v1418, 32
        %v1510 = vpop.permute.xlu0 %1509
        %1515 = vrot.lane.b32.xlu0 %v1495, 48
        %v1516 = vpop.permute.xlu0 %1515
        %1517 = vrot.lane.b32.xlu0 %v1496, 48
        %v1518 = vpop.permute.xlu0 %1517
        %v1521 = vsel %vm1066, %v1261, %v1500
        %v1522 = vsel %vm1066, %v1262, %v1502
        %v1523 = vsel %vm1069, %v1521, %v1508
        %v1524 = vsel %vm1069, %v1522, %v1510
        %v1525 = vsel %vm1072, %v1523, %v1516
        %v1526 = vsel %vm1072, %v1524, %v1518
        %v1527 = vld [vmem:[%s10] sm:$0x1]
        %v1529 = vperm.slane %v1527, 0
        %v1531 = vadd.f32 %v1525, %v1529
        %v1532 = vadd.f32 %v1526, %v1529
        %v1533 = vadd.f32 %v1531, %v621
        %v1534 = vadd.f32 %v1532, %v622
        %v1535 = vadd.f32 %v619, %v1533
        %v1536 = vadd.f32 %v620, %v1534
        %v1537 = vmax.f32 %v1535, 0.0
        %v1538 = vmax.f32 %v1536, 0.0
        %v1539 = vrot.slane %v1537, 7
        %v1540 = vrot.slane %v1538, 7
        %v1541 = vsel %vm627, %v1539, %v1540
        %v1542 = vsel %vm627, %v1540, %v1539
        %v1543 = vsel %vm613, 0.0, %v1542
        %v1544 = vsel %vm614, 0.0, %v1541
        %v1545 = vrot.slane %v1537, 1
        %v1546 = vrot.slane %v1538, 1
        %v1547 = vsel %vm634, %v1545, %v1546
        %v1548 = vsel %vm634, %v1546, %v1545
        %v1549 = vsel %vm615, 0.0, %v1547
        %v1550 = vsel %vm616, 0.0, %v1548
        %1551 = vrot.lane.b32.xlu0 %v1543, 64
        %v1552 = vpop.permute.xlu0 %1551
        %v1553 = vsel %vm639, %v1552, %v1543
        %1554 = vrot.lane.b32.xlu0 %v1544, 64
        %v1555 = vpop.permute.xlu0 %1554
        %v1556 = vsel %vm639, %v1555, %v1544
        %1557 = vrot.lane.b32.xlu0 %v1553, 64
        %v1558 = vpop.permute.xlu0 %1557
        %1559 = vrot.lane.b32.xlu0 %v1556, 64
        %v1560 = vpop.permute.xlu0 %1559
        %v1561 = vsel %vm639, %v1558, %v1543
        %v1562 = vsel %vm639, %v1560, %v1544
        %1565 = vrot.lane.b32.xlu0 %v1561, 65
        %v1566 = vpop.permute.xlu0 %1565
        %1567 = vrot.lane.b32.xlu0 %v1562, 65
        %v1568 = vpop.permute.xlu0 %1567
        %v1571 = vsel %vm617, 0.0, %v1566
        %v1572 = vsel %vm617, 0.0, %v1568
        %1573 = vrot.lane.b32.xlu0 %v1561, 127
        %v1574 = vpop.permute.xlu0 %1573
        %1575 = vrot.lane.b32.xlu0 %v1562, 127
        %v1576 = vpop.permute.xlu0 %1575
        %v1579 = vsel %vm618, 0.0, %v1574
        %v1580 = vsel %vm618, 0.0, %v1576
        %1581 = vrot.lane.b32.xlu0 %v1537, 64
        %v1582 = vpop.permute.xlu0 %1581
        %v1583 = vsel %vm639, %v1582, %v1537
        %1584 = vrot.lane.b32.xlu0 %v1538, 64
        %v1585 = vpop.permute.xlu0 %1584
        %v1586 = vsel %vm639, %v1585, %v1538
        %1587 = vrot.lane.b32.xlu0 %v1583, 64
        %v1588 = vpop.permute.xlu0 %1587
        %1589 = vrot.lane.b32.xlu0 %v1586, 64
        %v1590 = vpop.permute.xlu0 %1589
        %v1591 = vsel %vm639, %v1588, %v1537
        %v1592 = vsel %vm639, %v1590, %v1538
        %1595 = vrot.lane.b32.xlu0 %v1591, 65
        %v1596 = vpop.permute.xlu0 %1595
        %1597 = vrot.lane.b32.xlu0 %v1592, 65
        %v1598 = vpop.permute.xlu0 %1597
        %v1601 = vsel %vm617, 0.0, %v1596
        %v1602 = vsel %vm617, 0.0, %v1598
        %1603 = vrot.lane.b32.xlu0 %v1591, 127
        %v1604 = vpop.permute.xlu0 %1603
        %1605 = vrot.lane.b32.xlu0 %v1592, 127
        %v1606 = vpop.permute.xlu0 %1605
        %v1609 = vsel %vm618, 0.0, %v1604
        %v1610 = vsel %vm618, 0.0, %v1606
        %1611 = vrot.lane.b32.xlu0 %v1549, 64
        %v1612 = vpop.permute.xlu0 %1611
        %v1613 = vsel %vm639, %v1612, %v1549
        %1614 = vrot.lane.b32.xlu0 %v1550, 64
        %v1615 = vpop.permute.xlu0 %1614
        %v1616 = vsel %vm639, %v1615, %v1550
        %1617 = vrot.lane.b32.xlu0 %v1613, 64
        %v1618 = vpop.permute.xlu0 %1617
        %1619 = vrot.lane.b32.xlu0 %v1616, 64
        %v1620 = vpop.permute.xlu0 %1619
        %v1621 = vsel %vm639, %v1618, %v1549
        %v1622 = vsel %vm639, %v1620, %v1550
        %1625 = vrot.lane.b32.xlu0 %v1621, 65
        %v1626 = vpop.permute.xlu0 %1625
        %1627 = vrot.lane.b32.xlu0 %v1622, 65
        %v1628 = vpop.permute.xlu0 %1627
        %v1631 = vsel %vm617, 0.0, %v1626
        %v1632 = vsel %vm617, 0.0, %v1628
        %1633 = vrot.lane.b32.xlu0 %v1621, 127
        %v1634 = vpop.permute.xlu0 %1633
        %1635 = vrot.lane.b32.xlu0 %v1622, 127
        %v1636 = vpop.permute.xlu0 %1635
        %v1639 = vsel %vm618, 0.0, %v1634
        %v1640 = vsel %vm618, 0.0, %v1636
        %v1641 = vld [vmem:[#allocation10] sm:$0x1]
        %v1642 = vperm.slane %v1641, 0
        %v1643 = vmul.f32 %v1642, %v1571
        %v1644 = vmul.f32 %v1642, %v1572
        %v1645 = vld [vmem:[#allocation10 + $0x4] sm:$0x1]
        %v1646 = vperm.slane %v1645, 0
        %v1647 = vmul.f32 %v1646, %v1543
        %v1648 = vmul.f32 %v1646, %v1544
        %v1649 = vadd.f32 %v1643, %v1647
        %v1650 = vadd.f32 %v1644, %v1648
        %v1651 = vld [vmem:[#allocation10 + $0x8] sm:$0x1]
        %v1652 = vperm.slane %v1651, 0
        %v1653 = vmul.f32 %v1652, %v1579
        %v1654 = vmul.f32 %v1652, %v1580
        %v1655 = vadd.f32 %v1649, %v1653
        %v1656 = vadd.f32 %v1650, %v1654
        %v1657 = vld [vmem:[#allocation10 + $0xc] sm:$0x1]
        %v1658 = vperm.slane %v1657, 0
        %v1659 = vmul.f32 %v1658, %v1601
        %v1660 = vmul.f32 %v1658, %v1602
        %v1661 = vadd.f32 %v1655, %v1659
        %v1662 = vadd.f32 %v1656, %v1660
        %v1663 = vld [vmem:[#allocation10 + $0x10] sm:$0x1]
        %v1664 = vperm.slane %v1663, 0
        %v1665 = vmul.f32 %v1664, %v1537
        %v1666 = vmul.f32 %v1664, %v1538
        %v1667 = vadd.f32 %v1661, %v1665
        %v1668 = vadd.f32 %v1662, %v1666
        %v1669 = vld [vmem:[#allocation10 + $0x14] sm:$0x1]
        %v1670 = vperm.slane %v1669, 0
        %v1671 = vmul.f32 %v1670, %v1609
        %v1672 = vmul.f32 %v1670, %v1610
        %v1673 = vadd.f32 %v1667, %v1671
        %v1674 = vadd.f32 %v1668, %v1672
        %v1675 = vld [vmem:[#allocation10 + $0x18] sm:$0x1]
        %v1676 = vperm.slane %v1675, 0
        %v1677 = vmul.f32 %v1676, %v1631
        %v1678 = vmul.f32 %v1676, %v1632
        %v1679 = vadd.f32 %v1673, %v1677
        %v1680 = vadd.f32 %v1674, %v1678
        %v1681 = vld [vmem:[#allocation10 + $0x1c] sm:$0x1]
        %v1682 = vperm.slane %v1681, 0
        %v1683 = vmul.f32 %v1682, %v1549
        %v1684 = vmul.f32 %v1682, %v1550
        %v1685 = vadd.f32 %v1679, %v1683
        %v1686 = vadd.f32 %v1680, %v1684
        %v1687 = vld [vmem:[#allocation10 + $0x20] sm:$0x1]
        %v1688 = vperm.slane %v1687, 0
        %v1689 = vmul.f32 %v1688, %v1639
        %v1690 = vmul.f32 %v1688, %v1640
        %v1691 = vadd.f32 %v1685, %v1689
        %v1692 = vadd.f32 %v1686, %v1690
        %1695 = vrot.lane.b32.xlu0 %v1691, 112
        %v1696 = vpop.permute.xlu0 %1695
        %1697 = vrot.lane.b32.xlu0 %v1692, 112
        %v1698 = vpop.permute.xlu0 %1697
        %v1701 = vadd.f32 %v1691, %v1696
        %v1702 = vadd.f32 %v1692, %v1698
        %1703 = vrot.lane.b32.xlu0 %v1691, 96
        %v1704 = vpop.permute.xlu0 %1703
        %1705 = vrot.lane.b32.xlu0 %v1692, 96
        %v1706 = vpop.permute.xlu0 %1705
        %v1709 = vadd.f32 %v1701, %v1704
        %v1710 = vadd.f32 %v1702, %v1706
        %1711 = vrot.lane.b32.xlu0 %v1691, 80
        %v1712 = vpop.permute.xlu0 %1711
        %1713 = vrot.lane.b32.xlu0 %v1692, 80
        %v1714 = vpop.permute.xlu0 %1713
        %v1717 = vadd.f32 %v1709, %v1712
        %v1718 = vadd.f32 %v1710, %v1714
        %v1719 = vld [vmem:[#allocation10 + $0x1] sm:$0x1]
        %v1720 = vperm.slane %v1719, 0
        %v1721 = vmul.f32 %v1720, %v1571
        %v1722 = vmul.f32 %v1720, %v1572
        %v1723 = vld [vmem:[#allocation10 + $0x5] sm:$0x1]
        %v1724 = vperm.slane %v1723, 0
        %v1725 = vmul.f32 %v1724, %v1543
        %v1726 = vmul.f32 %v1724, %v1544
        %v1727 = vadd.f32 %v1721, %v1725
        %v1728 = vadd.f32 %v1722, %v1726
        %v1729 = vld [vmem:[#allocation10 + $0x9] sm:$0x1]
        %v1730 = vperm.slane %v1729, 0
        %v1731 = vmul.f32 %v1730, %v1579
        %v1732 = vmul.f32 %v1730, %v1580
        %v1733 = vadd.f32 %v1727, %v1731
        %v1734 = vadd.f32 %v1728, %v1732
        %v1735 = vld [vmem:[#allocation10 + $0xd] sm:$0x1]
        %v1736 = vperm.slane %v1735, 0
        %v1737 = vmul.f32 %v1736, %v1601
        %v1738 = vmul.f32 %v1736, %v1602
        %v1739 = vadd.f32 %v1733, %v1737
        %v1740 = vadd.f32 %v1734, %v1738
        %v1741 = vld [vmem:[#allocation10 + $0x11] sm:$0x1]
        %v1742 = vperm.slane %v1741, 0
        %v1743 = vmul.f32 %v1742, %v1537
        %v1744 = vmul.f32 %v1742, %v1538
        %v1745 = vadd.f32 %v1739, %v1743
        %v1746 = vadd.f32 %v1740, %v1744
        %v1747 = vld [vmem:[#allocation10 + $0x15] sm:$0x1]
        %v1748 = vperm.slane %v1747, 0
        %v1749 = vmul.f32 %v1748, %v1609
        %v1750 = vmul.f32 %v1748, %v1610
        %v1751 = vadd.f32 %v1745, %v1749
        %v1752 = vadd.f32 %v1746, %v1750
        %v1753 = vld [vmem:[#allocation10 + $0x19] sm:$0x1]
        %v1754 = vperm.slane %v1753, 0
        %v1755 = vmul.f32 %v1754, %v1631
        %v1756 = vmul.f32 %v1754, %v1632
        %v1757 = vadd.f32 %v1751, %v1755
        %v1758 = vadd.f32 %v1752, %v1756
        %v1759 = vld [vmem:[#allocation10 + $0x1d] sm:$0x1]
        %v1760 = vperm.slane %v1759, 0
        %v1761 = vmul.f32 %v1760, %v1549
        %v1762 = vmul.f32 %v1760, %v1550
        %v1763 = vadd.f32 %v1757, %v1761
        %v1764 = vadd.f32 %v1758, %v1762
        %v1765 = vld [vmem:[#allocation10 + $0x21] sm:$0x1]
        %v1766 = vperm.slane %v1765, 0
        %v1767 = vmul.f32 %v1766, %v1639
        %v1768 = vmul.f32 %v1766, %v1640
        %v1769 = vadd.f32 %v1763, %v1767
        %v1770 = vadd.f32 %v1764, %v1768
        %1773 = vrot.lane.b32.xlu0 %v1769, 112
        %v1774 = vpop.permute.xlu0 %1773
        %1775 = vrot.lane.b32.xlu0 %v1770, 112
        %v1776 = vpop.permute.xlu0 %1775
        %v1779 = vadd.f32 %v1769, %v1774
        %v1780 = vadd.f32 %v1770, %v1776
        %1781 = vrot.lane.b32.xlu0 %v1769, 96
        %v1782 = vpop.permute.xlu0 %1781
        %1783 = vrot.lane.b32.xlu0 %v1770, 96
        %v1784 = vpop.permute.xlu0 %1783
        %v1787 = vadd.f32 %v1779, %v1782
        %v1788 = vadd.f32 %v1780, %v1784
        %1789 = vrot.lane.b32.xlu0 %v1769, 80
        %v1790 = vpop.permute.xlu0 %1789
        %1791 = vrot.lane.b32.xlu0 %v1770, 80
        %v1792 = vpop.permute.xlu0 %1791
        %v1795 = vadd.f32 %v1787, %v1790
        %v1796 = vadd.f32 %v1788, %v1792
        %v1797 = vld [vmem:[#allocation10 + $0x2] sm:$0x1]
        %v1798 = vperm.slane %v1797, 0
        %v1799 = vmul.f32 %v1798, %v1571
        %v1800 = vmul.f32 %v1798, %v1572
        %v1801 = vld [vmem:[#allocation10 + $0x6] sm:$0x1]
        %v1802 = vperm.slane %v1801, 0
        %v1803 = vmul.f32 %v1802, %v1543
        %v1804 = vmul.f32 %v1802, %v1544
        %v1805 = vadd.f32 %v1799, %v1803
        %v1806 = vadd.f32 %v1800, %v1804
        %v1807 = vld [vmem:[#allocation10 + $0xa] sm:$0x1]
        %v1808 = vperm.slane %v1807, 0
        %v1809 = vmul.f32 %v1808, %v1579
        %v1810 = vmul.f32 %v1808, %v1580
        %v1811 = vadd.f32 %v1805, %v1809
        %v1812 = vadd.f32 %v1806, %v1810
        %v1813 = vld [vmem:[#allocation10 + $0xe] sm:$0x1]
        %v1814 = vperm.slane %v1813, 0
        %v1815 = vmul.f32 %v1814, %v1601
        %v1816 = vmul.f32 %v1814, %v1602
        %v1817 = vadd.f32 %v1811, %v1815
        %v1818 = vadd.f32 %v1812, %v1816
        %v1819 = vld [vmem:[#allocation10 + $0x12] sm:$0x1]
        %v1820 = vperm.slane %v1819, 0
        %v1821 = vmul.f32 %v1820, %v1537
        %v1822 = vmul.f32 %v1820, %v1538
        %v1823 = vadd.f32 %v1817, %v1821
        %v1824 = vadd.f32 %v1818, %v1822
        %v1825 = vld [vmem:[#allocation10 + $0x16] sm:$0x1]
        %v1826 = vperm.slane %v1825, 0
        %v1827 = vmul.f32 %v1826, %v1609
        %v1828 = vmul.f32 %v1826, %v1610
        %v1829 = vadd.f32 %v1823, %v1827
        %v1830 = vadd.f32 %v1824, %v1828
        %v1831 = vld [vmem:[#allocation10 + $0x1a] sm:$0x1]
        %v1832 = vperm.slane %v1831, 0
        %v1833 = vmul.f32 %v1832, %v1631
        %v1834 = vmul.f32 %v1832, %v1632
        %v1835 = vadd.f32 %v1829, %v1833
        %v1836 = vadd.f32 %v1830, %v1834
        %v1837 = vld [vmem:[#allocation10 + $0x1e] sm:$0x1]
        %v1838 = vperm.slane %v1837, 0
        %v1839 = vmul.f32 %v1838, %v1549
        %v1840 = vmul.f32 %v1838, %v1550
        %v1841 = vadd.f32 %v1835, %v1839
        %v1842 = vadd.f32 %v1836, %v1840
        %v1843 = vld [vmem:[#allocation10 + $0x22] sm:$0x1]
        %v1844 = vperm.slane %v1843, 0
        %v1845 = vmul.f32 %v1844, %v1639
        %v1846 = vmul.f32 %v1844, %v1640
        %v1847 = vadd.f32 %v1841, %v1845
        %v1848 = vadd.f32 %v1842, %v1846
        %1851 = vrot.lane.b32.xlu0 %v1847, 112
        %v1852 = vpop.permute.xlu0 %1851
        %1853 = vrot.lane.b32.xlu0 %v1848, 112
        %v1854 = vpop.permute.xlu0 %1853
        %v1857 = vadd.f32 %v1847, %v1852
        %v1858 = vadd.f32 %v1848, %v1854
        %1859 = vrot.lane.b32.xlu0 %v1847, 96
        %v1860 = vpop.permute.xlu0 %1859
        %1861 = vrot.lane.b32.xlu0 %v1848, 96
        %v1862 = vpop.permute.xlu0 %1861
        %v1865 = vadd.f32 %v1857, %v1860
        %v1866 = vadd.f32 %v1858, %v1862
        %1867 = vrot.lane.b32.xlu0 %v1847, 80
        %v1868 = vpop.permute.xlu0 %1867
        %1869 = vrot.lane.b32.xlu0 %v1848, 80
        %v1870 = vpop.permute.xlu0 %1869
        %v1873 = vadd.f32 %v1865, %v1868
        %v1874 = vadd.f32 %v1866, %v1870
        %v1875 = vld [vmem:[#allocation10 + $0x3] sm:$0x1]
        %v1876 = vperm.slane %v1875, 0
        %v1877 = vmul.f32 %v1876, %v1571
        %v1878 = vmul.f32 %v1876, %v1572
        %v1879 = vld [vmem:[#allocation10 + $0x7] sm:$0x1]
        %v1880 = vperm.slane %v1879, 0
        %v1881 = vmul.f32 %v1880, %v1543
        %v1882 = vmul.f32 %v1880, %v1544
        %v1883 = vadd.f32 %v1877, %v1881
        %v1884 = vadd.f32 %v1878, %v1882
        %v1885 = vld [vmem:[#allocation10 + $0xb] sm:$0x1]
        %v1886 = vperm.slane %v1885, 0
        %v1887 = vmul.f32 %v1886, %v1579
        %v1888 = vmul.f32 %v1886, %v1580
        %v1889 = vadd.f32 %v1883, %v1887
        %v1890 = vadd.f32 %v1884, %v1888
        %v1891 = vld [vmem:[#allocation10 + $0xf] sm:$0x1]
        %v1892 = vperm.slane %v1891, 0
        %v1893 = vmul.f32 %v1892, %v1601
        %v1894 = vmul.f32 %v1892, %v1602
        %v1895 = vadd.f32 %v1889, %v1893
        %v1896 = vadd.f32 %v1890, %v1894
        %v1897 = vld [vmem:[#allocation10 + $0x13] sm:$0x1]
        %v1898 = vperm.slane %v1897, 0
        %v1899 = vmul.f32 %v1898, %v1537
        %v1900 = vmul.f32 %v1898, %v1538
        %v1901 = vadd.f32 %v1895, %v1899
        %v1902 = vadd.f32 %v1896, %v1900
        %v1903 = vld [vmem:[#allocation10 + $0x17] sm:$0x1]
        %v1904 = vperm.slane %v1903, 0
        %v1905 = vmul.f32 %v1904, %v1609
        %v1906 = vmul.f32 %v1904, %v1610
        %v1907 = vadd.f32 %v1901, %v1905
        %v1908 = vadd.f32 %v1902, %v1906
        %v1909 = vld [vmem:[#allocation10 + $0x1b] sm:$0x1]
        %v1910 = vperm.slane %v1909, 0
        %v1911 = vmul.f32 %v1910, %v1631
        %v1912 = vmul.f32 %v1910, %v1632
        %v1913 = vadd.f32 %v1907, %v1911
        %v1914 = vadd.f32 %v1908, %v1912
        %v1915 = vld [vmem:[#allocation10 + $0x1f] sm:$0x1]
        %v1916 = vperm.slane %v1915, 0
        %v1917 = vmul.f32 %v1916, %v1549
        %v1918 = vmul.f32 %v1916, %v1550
        %v1919 = vadd.f32 %v1913, %v1917
        %v1920 = vadd.f32 %v1914, %v1918
        %v1921 = vld [vmem:[#allocation10 + $0x23] sm:$0x1]
        %v1922 = vperm.slane %v1921, 0
        %v1923 = vmul.f32 %v1922, %v1639
        %v1924 = vmul.f32 %v1922, %v1640
        %v1925 = vadd.f32 %v1919, %v1923
        %v1926 = vadd.f32 %v1920, %v1924
        %1929 = vrot.lane.b32.xlu0 %v1925, 112
        %v1930 = vpop.permute.xlu0 %1929
        %1931 = vrot.lane.b32.xlu0 %v1926, 112
        %v1932 = vpop.permute.xlu0 %1931
        %v1935 = vadd.f32 %v1925, %v1930
        %v1936 = vadd.f32 %v1926, %v1932
        %1937 = vrot.lane.b32.xlu0 %v1925, 96
        %v1938 = vpop.permute.xlu0 %1937
        %1939 = vrot.lane.b32.xlu0 %v1926, 96
        %v1940 = vpop.permute.xlu0 %1939
        %v1943 = vadd.f32 %v1935, %v1938
        %v1944 = vadd.f32 %v1936, %v1940
        %1945 = vrot.lane.b32.xlu0 %v1925, 80
        %v1946 = vpop.permute.xlu0 %1945
        %1947 = vrot.lane.b32.xlu0 %v1926, 80
        %v1948 = vpop.permute.xlu0 %1947
        %v1951 = vadd.f32 %v1943, %v1946
        %v1952 = vadd.f32 %v1944, %v1948
        %1955 = vrot.lane.b32.xlu0 %v1795, 16
        %v1956 = vpop.permute.xlu0 %1955
        %1957 = vrot.lane.b32.xlu0 %v1796, 16
        %v1958 = vpop.permute.xlu0 %1957
        %1963 = vrot.lane.b32.xlu0 %v1873, 32
        %v1964 = vpop.permute.xlu0 %1963
        %1965 = vrot.lane.b32.xlu0 %v1874, 32
        %v1966 = vpop.permute.xlu0 %1965
        %1971 = vrot.lane.b32.xlu0 %v1951, 48
        %v1972 = vpop.permute.xlu0 %1971
        %1973 = vrot.lane.b32.xlu0 %v1952, 48
        %v1974 = vpop.permute.xlu0 %1973
        %v1977 = vsel %vm1066, %v1717, %v1956
        %v1978 = vsel %vm1066, %v1718, %v1958
        %v1979 = vsel %vm1069, %v1977, %v1964
        %v1980 = vsel %vm1069, %v1978, %v1966
        %v1981 = vsel %vm1072, %v1979, %v1972
        %v1982 = vsel %vm1072, %v1980, %v1974
        %v1983 = vld [vmem:[%s11] sm:$0x1]
        %v1985 = vperm.slane %v1983, 0
        %v1987 = vadd.f32 %v1981, %v1985
        %v1988 = vadd.f32 %v1982, %v1985
        %v1989 = vmax.f32 %v1987, 0.0
        %v1990 = vmax.f32 %v1988, 0.0
        %v1991 = vrot.slane %v1989, 7
        %v1992 = vrot.slane %v1990, 7
        %v1993 = vsel %vm627, %v1991, %v1992
        %v1994 = vsel %vm627, %v1992, %v1991
        %v1995 = vsel %vm613, 0.0, %v1994
        %v1996 = vsel %vm614, 0.0, %v1993
        %v1997 = vrot.slane %v1989, 1
        %v1998 = vrot.slane %v1990, 1
        %v1999 = vsel %vm634, %v1997, %v1998
        %v2000 = vsel %vm634, %v1998, %v1997
        %v2001 = vsel %vm615, 0.0, %v1999
        %v2002 = vsel %vm616, 0.0, %v2000
        %2003 = vrot.lane.b32.xlu0 %v1995, 64
        %v2004 = vpop.permute.xlu0 %2003
        %v2005 = vsel %vm639, %v2004, %v1995
        %2006 = vrot.lane.b32.xlu0 %v1996, 64
        %v2007 = vpop.permute.xlu0 %2006
        %v2008 = vsel %vm639, %v2007, %v1996
        %2009 = vrot.lane.b32.xlu0 %v2005, 64
        %v2010 = vpop.permute.xlu0 %2009
        %2011 = vrot.lane.b32.xlu0 %v2008, 64
        %v2012 = vpop.permute.xlu0 %2011
        %v2013 = vsel %vm639, %v2010, %v1995
        %v2014 = vsel %vm639, %v2012, %v1996
        %2017 = vrot.lane.b32.xlu0 %v2013, 65
        %v2018 = vpop.permute.xlu0 %2017
        %2019 = vrot.lane.b32.xlu0 %v2014, 65
        %v2020 = vpop.permute.xlu0 %2019
        %v2023 = vsel %vm617, 0.0, %v2018
        %v2024 = vsel %vm617, 0.0, %v2020
        %2025 = vrot.lane.b32.xlu0 %v2013, 127
        %v2026 = vpop.permute.xlu0 %2025
        %2027 = vrot.lane.b32.xlu0 %v2014, 127
        %v2028 = vpop.permute.xlu0 %2027
        %v2031 = vsel %vm618, 0.0, %v2026
        %v2032 = vsel %vm618, 0.0, %v2028
        %2033 = vrot.lane.b32.xlu0 %v1989, 64
        %v2034 = vpop.permute.xlu0 %2033
        %v2035 = vsel %vm639, %v2034, %v1989
        %2036 = vrot.lane.b32.xlu0 %v1990, 64
        %v2037 = vpop.permute.xlu0 %2036
        %v2038 = vsel %vm639, %v2037, %v1990
        %2039 = vrot.lane.b32.xlu0 %v2035, 64
        %v2040 = vpop.permute.xlu0 %2039
        %2041 = vrot.lane.b32.xlu0 %v2038, 64
        %v2042 = vpop.permute.xlu0 %2041
        %v2043 = vsel %vm639, %v2040, %v1989
        %v2044 = vsel %vm639, %v2042, %v1990
        %2047 = vrot.lane.b32.xlu0 %v2043, 65
        %v2048 = vpop.permute.xlu0 %2047
        %2049 = vrot.lane.b32.xlu0 %v2044, 65
        %v2050 = vpop.permute.xlu0 %2049
        %v2053 = vsel %vm617, 0.0, %v2048
        %v2054 = vsel %vm617, 0.0, %v2050
        %2055 = vrot.lane.b32.xlu0 %v2043, 127
        %v2056 = vpop.permute.xlu0 %2055
        %2057 = vrot.lane.b32.xlu0 %v2044, 127
        %v2058 = vpop.permute.xlu0 %2057
        %v2061 = vsel %vm618, 0.0, %v2056
        %v2062 = vsel %vm618, 0.0, %v2058
        %2063 = vrot.lane.b32.xlu0 %v2001, 64
        %v2064 = vpop.permute.xlu0 %2063
        %v2065 = vsel %vm639, %v2064, %v2001
        %2066 = vrot.lane.b32.xlu0 %v2002, 64
        %v2067 = vpop.permute.xlu0 %2066
        %v2068 = vsel %vm639, %v2067, %v2002
        %2069 = vrot.lane.b32.xlu0 %v2065, 64
        %v2070 = vpop.permute.xlu0 %2069
        %2071 = vrot.lane.b32.xlu0 %v2068, 64
        %v2072 = vpop.permute.xlu0 %2071
        %v2073 = vsel %vm639, %v2070, %v2001
        %v2074 = vsel %vm639, %v2072, %v2002
        %2077 = vrot.lane.b32.xlu0 %v2073, 65
        %v2078 = vpop.permute.xlu0 %2077
        %2079 = vrot.lane.b32.xlu0 %v2074, 65
        %v2080 = vpop.permute.xlu0 %2079
        %v2083 = vsel %vm617, 0.0, %v2078
        %v2084 = vsel %vm617, 0.0, %v2080
        %2085 = vrot.lane.b32.xlu0 %v2073, 127
        %v2086 = vpop.permute.xlu0 %2085
        %2087 = vrot.lane.b32.xlu0 %v2074, 127
        %v2088 = vpop.permute.xlu0 %2087
        %v2091 = vsel %vm618, 0.0, %v2086
        %v2092 = vsel %vm618, 0.0, %v2088
        %v2093 = vld [vmem:[#allocation11] sm:$0x1]
        %v2094 = vperm.slane %v2093, 0
        %v2095 = vmul.f32 %v2094, %v2023
        %v2096 = vmul.f32 %v2094, %v2024
        %v2097 = vld [vmem:[#allocation11 + $0x4] sm:$0x1]
        %v2098 = vperm.slane %v2097, 0
        %v2099 = vmul.f32 %v2098, %v1995
        %v2100 = vmul.f32 %v2098, %v1996
        %v2101 = vadd.f32 %v2095, %v2099
        %v2102 = vadd.f32 %v2096, %v2100
        %v2103 = vld [vmem:[#allocation11 + $0x8] sm:$0x1]
        %v2104 = vperm.slane %v2103, 0
        %v2105 = vmul.f32 %v2104, %v2031
        %v2106 = vmul.f32 %v2104, %v2032
        %v2107 = vadd.f32 %v2101, %v2105
        %v2108 = vadd.f32 %v2102, %v2106
        %v2109 = vld [vmem:[#allocation11 + $0xc] sm:$0x1]
        %v2110 = vperm.slane %v2109, 0
        %v2111 = vmul.f32 %v2110, %v2053
        %v2112 = vmul.f32 %v2110, %v2054
        %v2113 = vadd.f32 %v2107, %v2111
        %v2114 = vadd.f32 %v2108, %v2112
        %v2115 = vld [vmem:[#allocation11 + $0x10] sm:$0x1]
        %v2116 = vperm.slane %v2115, 0
        %v2117 = vmul.f32 %v2116, %v1989
        %v2118 = vmul.f32 %v2116, %v1990
        %v2119 = vadd.f32 %v2113, %v2117
        %v2120 = vadd.f32 %v2114, %v2118
        %v2121 = vld [vmem:[#allocation11 + $0x14] sm:$0x1]
        %v2122 = vperm.slane %v2121, 0
        %v2123 = vmul.f32 %v2122, %v2061
        %v2124 = vmul.f32 %v2122, %v2062
        %v2125 = vadd.f32 %v2119, %v2123
        %v2126 = vadd.f32 %v2120, %v2124
        %v2127 = vld [vmem:[#allocation11 + $0x18] sm:$0x1]
        %v2128 = vperm.slane %v2127, 0
        %v2129 = vmul.f32 %v2128, %v2083
        %v2130 = vmul.f32 %v2128, %v2084
        %v2131 = vadd.f32 %v2125, %v2129
        %v2132 = vadd.f32 %v2126, %v2130
        %v2133 = vld [vmem:[#allocation11 + $0x1c] sm:$0x1]
        %v2134 = vperm.slane %v2133, 0
        %v2135 = vmul.f32 %v2134, %v2001
        %v2136 = vmul.f32 %v2134, %v2002
        %v2137 = vadd.f32 %v2131, %v2135
        %v2138 = vadd.f32 %v2132, %v2136
        %v2139 = vld [vmem:[#allocation11 + $0x20] sm:$0x1]
        %v2140 = vperm.slane %v2139, 0
        %v2141 = vmul.f32 %v2140, %v2091
        %v2142 = vmul.f32 %v2140, %v2092
        %v2143 = vadd.f32 %v2137, %v2141
        %v2144 = vadd.f32 %v2138, %v2142
        %2147 = vrot.lane.b32.xlu0 %v2143, 112
        %v2148 = vpop.permute.xlu0 %2147
        %2149 = vrot.lane.b32.xlu0 %v2144, 112
        %v2150 = vpop.permute.xlu0 %2149
        %v2153 = vadd.f32 %v2143, %v2148
        %v2154 = vadd.f32 %v2144, %v2150
        %2155 = vrot.lane.b32.xlu0 %v2143, 96
        %v2156 = vpop.permute.xlu0 %2155
        %2157 = vrot.lane.b32.xlu0 %v2144, 96
        %v2158 = vpop.permute.xlu0 %2157
        %v2161 = vadd.f32 %v2153, %v2156
        %v2162 = vadd.f32 %v2154, %v2158
        %2163 = vrot.lane.b32.xlu0 %v2143, 80
        %v2164 = vpop.permute.xlu0 %2163
        %2165 = vrot.lane.b32.xlu0 %v2144, 80
        %v2166 = vpop.permute.xlu0 %2165
        %v2169 = vadd.f32 %v2161, %v2164
        %v2170 = vadd.f32 %v2162, %v2166
        %v2171 = vld [vmem:[#allocation11 + $0x1] sm:$0x1]
        %v2172 = vperm.slane %v2171, 0
        %v2173 = vmul.f32 %v2172, %v2023
        %v2174 = vmul.f32 %v2172, %v2024
        %v2175 = vld [vmem:[#allocation11 + $0x5] sm:$0x1]
        %v2176 = vperm.slane %v2175, 0
        %v2177 = vmul.f32 %v2176, %v1995
        %v2178 = vmul.f32 %v2176, %v1996
        %v2179 = vadd.f32 %v2173, %v2177
        %v2180 = vadd.f32 %v2174, %v2178
        %v2181 = vld [vmem:[#allocation11 + $0x9] sm:$0x1]
        %v2182 = vperm.slane %v2181, 0
        %v2183 = vmul.f32 %v2182, %v2031
        %v2184 = vmul.f32 %v2182, %v2032
        %v2185 = vadd.f32 %v2179, %v2183
        %v2186 = vadd.f32 %v2180, %v2184
        %v2187 = vld [vmem:[#allocation11 + $0xd] sm:$0x1]
        %v2188 = vperm.slane %v2187, 0
        %v2189 = vmul.f32 %v2188, %v2053
        %v2190 = vmul.f32 %v2188, %v2054
        %v2191 = vadd.f32 %v2185, %v2189
        %v2192 = vadd.f32 %v2186, %v2190
        %v2193 = vld [vmem:[#allocation11 + $0x11] sm:$0x1]
        %v2194 = vperm.slane %v2193, 0
        %v2195 = vmul.f32 %v2194, %v1989
        %v2196 = vmul.f32 %v2194, %v1990
        %v2197 = vadd.f32 %v2191, %v2195
        %v2198 = vadd.f32 %v2192, %v2196
        %v2199 = vld [vmem:[#allocation11 + $0x15] sm:$0x1]
        %v2200 = vperm.slane %v2199, 0
        %v2201 = vmul.f32 %v2200, %v2061
        %v2202 = vmul.f32 %v2200, %v2062
        %v2203 = vadd.f32 %v2197, %v2201
        %v2204 = vadd.f32 %v2198, %v2202
        %v2205 = vld [vmem:[#allocation11 + $0x19] sm:$0x1]
        %v2206 = vperm.slane %v2205, 0
        %v2207 = vmul.f32 %v2206, %v2083
        %v2208 = vmul.f32 %v2206, %v2084
        %v2209 = vadd.f32 %v2203, %v2207
        %v2210 = vadd.f32 %v2204, %v2208
        %v2211 = vld [vmem:[#allocation11 + $0x1d] sm:$0x1]
        %v2212 = vperm.slane %v2211, 0
        %v2213 = vmul.f32 %v2212, %v2001
        %v2214 = vmul.f32 %v2212, %v2002
        %v2215 = vadd.f32 %v2209, %v2213
        %v2216 = vadd.f32 %v2210, %v2214
        %v2217 = vld [vmem:[#allocation11 + $0x21] sm:$0x1]
        %v2218 = vperm.slane %v2217, 0
        %v2219 = vmul.f32 %v2218, %v2091
        %v2220 = vmul.f32 %v2218, %v2092
        %v2221 = vadd.f32 %v2215, %v2219
        %v2222 = vadd.f32 %v2216, %v2220
        %2225 = vrot.lane.b32.xlu0 %v2221, 112
        %v2226 = vpop.permute.xlu0 %2225
        %2227 = vrot.lane.b32.xlu0 %v2222, 112
        %v2228 = vpop.permute.xlu0 %2227
        %v2231 = vadd.f32 %v2221, %v2226
        %v2232 = vadd.f32 %v2222, %v2228
        %2233 = vrot.lane.b32.xlu0 %v2221, 96
        %v2234 = vpop.permute.xlu0 %2233
        %2235 = vrot.lane.b32.xlu0 %v2222, 96
        %v2236 = vpop.permute.xlu0 %2235
        %v2239 = vadd.f32 %v2231, %v2234
        %v2240 = vadd.f32 %v2232, %v2236
        %2241 = vrot.lane.b32.xlu0 %v2221, 80
        %v2242 = vpop.permute.xlu0 %2241
        %2243 = vrot.lane.b32.xlu0 %v2222, 80
        %v2244 = vpop.permute.xlu0 %2243
        %v2247 = vadd.f32 %v2239, %v2242
        %v2248 = vadd.f32 %v2240, %v2244
        %v2249 = vld [vmem:[#allocation11 + $0x2] sm:$0x1]
        %v2250 = vperm.slane %v2249, 0
        %v2251 = vmul.f32 %v2250, %v2023
        %v2252 = vmul.f32 %v2250, %v2024
        %v2253 = vld [vmem:[#allocation11 + $0x6] sm:$0x1]
        %v2254 = vperm.slane %v2253, 0
        %v2255 = vmul.f32 %v2254, %v1995
        %v2256 = vmul.f32 %v2254, %v1996
        %v2257 = vadd.f32 %v2251, %v2255
        %v2258 = vadd.f32 %v2252, %v2256
        %v2259 = vld [vmem:[#allocation11 + $0xa] sm:$0x1]
        %v2260 = vperm.slane %v2259, 0
        %v2261 = vmul.f32 %v2260, %v2031
        %v2262 = vmul.f32 %v2260, %v2032
        %v2263 = vadd.f32 %v2257, %v2261
        %v2264 = vadd.f32 %v2258, %v2262
        %v2265 = vld [vmem:[#allocation11 + $0xe] sm:$0x1]
        %v2266 = vperm.slane %v2265, 0
        %v2267 = vmul.f32 %v2266, %v2053
        %v2268 = vmul.f32 %v2266, %v2054
        %v2269 = vadd.f32 %v2263, %v2267
        %v2270 = vadd.f32 %v2264, %v2268
        %v2271 = vld [vmem:[#allocation11 + $0x12] sm:$0x1]
        %v2272 = vperm.slane %v2271, 0
        %v2273 = vmul.f32 %v2272, %v1989
        %v2274 = vmul.f32 %v2272, %v1990
        %v2275 = vadd.f32 %v2269, %v2273
        %v2276 = vadd.f32 %v2270, %v2274
        %v2277 = vld [vmem:[#allocation11 + $0x16] sm:$0x1]
        %v2278 = vperm.slane %v2277, 0
        %v2279 = vmul.f32 %v2278, %v2061
        %v2280 = vmul.f32 %v2278, %v2062
        %v2281 = vadd.f32 %v2275, %v2279
        %v2282 = vadd.f32 %v2276, %v2280
        %v2283 = vld [vmem:[#allocation11 + $0x1a] sm:$0x1]
        %v2284 = vperm.slane %v2283, 0
        %v2285 = vmul.f32 %v2284, %v2083
        %v2286 = vmul.f32 %v2284, %v2084
        %v2287 = vadd.f32 %v2281, %v2285
        %v2288 = vadd.f32 %v2282, %v2286
        %v2289 = vld [vmem:[#allocation11 + $0x1e] sm:$0x1]
        %v2290 = vperm.slane %v2289, 0
        %v2291 = vmul.f32 %v2290, %v2001
        %v2292 = vmul.f32 %v2290, %v2002
        %v2293 = vadd.f32 %v2287, %v2291
        %v2294 = vadd.f32 %v2288, %v2292
        %v2295 = vld [vmem:[#allocation11 + $0x22] sm:$0x1]
        %v2296 = vperm.slane %v2295, 0
        %v2297 = vmul.f32 %v2296, %v2091
        %v2298 = vmul.f32 %v2296, %v2092
        %v2299 = vadd.f32 %v2293, %v2297
        %v2300 = vadd.f32 %v2294, %v2298
        %2303 = vrot.lane.b32.xlu0 %v2299, 112
        %v2304 = vpop.permute.xlu0 %2303
        %2305 = vrot.lane.b32.xlu0 %v2300, 112
        %v2306 = vpop.permute.xlu0 %2305
        %v2309 = vadd.f32 %v2299, %v2304
        %v2310 = vadd.f32 %v2300, %v2306
        %2311 = vrot.lane.b32.xlu0 %v2299, 96
        %v2312 = vpop.permute.xlu0 %2311
        %2313 = vrot.lane.b32.xlu0 %v2300, 96
        %v2314 = vpop.permute.xlu0 %2313
        %v2317 = vadd.f32 %v2309, %v2312
        %v2318 = vadd.f32 %v2310, %v2314
        %2319 = vrot.lane.b32.xlu0 %v2299, 80
        %v2320 = vpop.permute.xlu0 %2319
        %2321 = vrot.lane.b32.xlu0 %v2300, 80
        %v2322 = vpop.permute.xlu0 %2321
        %v2325 = vadd.f32 %v2317, %v2320
        %v2326 = vadd.f32 %v2318, %v2322
        %v2327 = vld [vmem:[#allocation11 + $0x3] sm:$0x1]
        %v2328 = vperm.slane %v2327, 0
        %v2329 = vmul.f32 %v2328, %v2023
        %v2330 = vmul.f32 %v2328, %v2024
        %v2331 = vld [vmem:[#allocation11 + $0x7] sm:$0x1]
        %v2332 = vperm.slane %v2331, 0
        %v2333 = vmul.f32 %v2332, %v1995
        %v2334 = vmul.f32 %v2332, %v1996
        %v2335 = vadd.f32 %v2329, %v2333
        %v2336 = vadd.f32 %v2330, %v2334
        %v2337 = vld [vmem:[#allocation11 + $0xb] sm:$0x1]
        %v2338 = vperm.slane %v2337, 0
        %v2339 = vmul.f32 %v2338, %v2031
        %v2340 = vmul.f32 %v2338, %v2032
        %v2341 = vadd.f32 %v2335, %v2339
        %v2342 = vadd.f32 %v2336, %v2340
        %v2343 = vld [vmem:[#allocation11 + $0xf] sm:$0x1]
        %v2344 = vperm.slane %v2343, 0
        %v2345 = vmul.f32 %v2344, %v2053
        %v2346 = vmul.f32 %v2344, %v2054
        %v2347 = vadd.f32 %v2341, %v2345
        %v2348 = vadd.f32 %v2342, %v2346
        %v2349 = vld [vmem:[#allocation11 + $0x13] sm:$0x1]
        %v2350 = vperm.slane %v2349, 0
        %v2351 = vmul.f32 %v2350, %v1989
        %v2352 = vmul.f32 %v2350, %v1990
        %v2353 = vadd.f32 %v2347, %v2351
        %v2354 = vadd.f32 %v2348, %v2352
        %v2355 = vld [vmem:[#allocation11 + $0x17] sm:$0x1]
        %v2356 = vperm.slane %v2355, 0
        %v2357 = vmul.f32 %v2356, %v2061
        %v2358 = vmul.f32 %v2356, %v2062
        %v2359 = vadd.f32 %v2353, %v2357
        %v2360 = vadd.f32 %v2354, %v2358
        %v2361 = vld [vmem:[#allocation11 + $0x1b] sm:$0x1]
        %v2362 = vperm.slane %v2361, 0
        %v2363 = vmul.f32 %v2362, %v2083
        %v2364 = vmul.f32 %v2362, %v2084
        %v2365 = vadd.f32 %v2359, %v2363
        %v2366 = vadd.f32 %v2360, %v2364
        %v2367 = vld [vmem:[#allocation11 + $0x1f] sm:$0x1]
        %v2368 = vperm.slane %v2367, 0
        %v2369 = vmul.f32 %v2368, %v2001
        %v2370 = vmul.f32 %v2368, %v2002
        %v2371 = vadd.f32 %v2365, %v2369
        %v2372 = vadd.f32 %v2366, %v2370
        %v2373 = vld [vmem:[#allocation11 + $0x23] sm:$0x1]
        %v2374 = vperm.slane %v2373, 0
        %v2375 = vmul.f32 %v2374, %v2091
        %v2376 = vmul.f32 %v2374, %v2092
        %v2377 = vadd.f32 %v2371, %v2375
        %v2378 = vadd.f32 %v2372, %v2376
        %2381 = vrot.lane.b32.xlu0 %v2377, 112
        %v2382 = vpop.permute.xlu0 %2381
        %2383 = vrot.lane.b32.xlu0 %v2378, 112
        %v2384 = vpop.permute.xlu0 %2383
        %v2387 = vadd.f32 %v2377, %v2382
        %v2388 = vadd.f32 %v2378, %v2384
        %2389 = vrot.lane.b32.xlu0 %v2377, 96
        %v2390 = vpop.permute.xlu0 %2389
        %2391 = vrot.lane.b32.xlu0 %v2378, 96
        %v2392 = vpop.permute.xlu0 %2391
        %v2395 = vadd.f32 %v2387, %v2390
        %v2396 = vadd.f32 %v2388, %v2392
        %2397 = vrot.lane.b32.xlu0 %v2377, 80
        %v2398 = vpop.permute.xlu0 %2397
        %2399 = vrot.lane.b32.xlu0 %v2378, 80
        %v2400 = vpop.permute.xlu0 %2399
        %v2403 = vadd.f32 %v2395, %v2398
        %v2404 = vadd.f32 %v2396, %v2400
        %2407 = vrot.lane.b32.xlu0 %v2247, 16
        %v2408 = vpop.permute.xlu0 %2407
        %2409 = vrot.lane.b32.xlu0 %v2248, 16
        %v2410 = vpop.permute.xlu0 %2409
        %2415 = vrot.lane.b32.xlu0 %v2325, 32
        %v2416 = vpop.permute.xlu0 %2415
        %2417 = vrot.lane.b32.xlu0 %v2326, 32
        %v2418 = vpop.permute.xlu0 %2417
        %2423 = vrot.lane.b32.xlu0 %v2403, 48
        %v2424 = vpop.permute.xlu0 %2423
        %2425 = vrot.lane.b32.xlu0 %v2404, 48
        %v2426 = vpop.permute.xlu0 %2425
        %v2429 = vsel %vm1066, %v2169, %v2408
        %v2430 = vsel %vm1066, %v2170, %v2410
        %v2431 = vsel %vm1069, %v2429, %v2416
        %v2432 = vsel %vm1069, %v2430, %v2418
        %v2433 = vsel %vm1072, %v2431, %v2424
        %v2434 = vsel %vm1072, %v2432, %v2426
        %v2435 = vld [vmem:[%s12] sm:$0x1]
        %v2437 = vperm.slane %v2435, 0
        %v2439 = vadd.f32 %v2433, %v2437
        %v2440 = vadd.f32 %v2434, %v2437
        %v2441 = vadd.f32 %v2439, %v1535
        %v2442 = vadd.f32 %v2440, %v1536
        %v2443 = vld [vmem:[%s8] sm:$0x1]
        %v2444 = vperm.slane %v2443, 0
        %v2445 = vmul.f32 %v2444, %v2441
        %v2446 = vmul.f32 %v2444, %v2442
        %2449 = vrot.lane.b32.xlu0 %v2445, 112
        %v2450 = vpop.permute.xlu0 %2449
        %2451 = vrot.lane.b32.xlu0 %v2446, 112
        %v2452 = vpop.permute.xlu0 %2451
        %v2455 = vadd.f32 %v2445, %v2450
        %v2456 = vadd.f32 %v2446, %v2452
        %2457 = vrot.lane.b32.xlu0 %v2445, 96
        %v2458 = vpop.permute.xlu0 %2457
        %2459 = vrot.lane.b32.xlu0 %v2446, 96
        %v2460 = vpop.permute.xlu0 %2459
        %v2463 = vadd.f32 %v2455, %v2458
        %v2464 = vadd.f32 %v2456, %v2460
        %2465 = vrot.lane.b32.xlu0 %v2445, 80
        %v2466 = vpop.permute.xlu0 %2465
        %2467 = vrot.lane.b32.xlu0 %v2446, 80
        %v2468 = vpop.permute.xlu0 %2467
        %v2471 = vadd.f32 %v2463, %v2466
        %v2472 = vadd.f32 %v2464, %v2468
        %v2473 = vld [vmem:[%s8 + $0x1] sm:$0x1]
        %v2474 = vperm.slane %v2473, 0
        %v2475 = vmul.f32 %v2474, %v2441
        %v2476 = vmul.f32 %v2474, %v2442
        %2479 = vrot.lane.b32.xlu0 %v2475, 112
        %v2480 = vpop.permute.xlu0 %2479
        %2481 = vrot.lane.b32.xlu0 %v2476, 112
        %v2482 = vpop.permute.xlu0 %2481
        %v2485 = vadd.f32 %v2475, %v2480
        %v2486 = vadd.f32 %v2476, %v2482
        %2487 = vrot.lane.b32.xlu0 %v2475, 96
        %v2488 = vpop.permute.xlu0 %2487
        %2489 = vrot.lane.b32.xlu0 %v2476, 96
        %v2490 = vpop.permute.xlu0 %2489
        %v2493 = vadd.f32 %v2485, %v2488
        %v2494 = vadd.f32 %v2486, %v2490
        %2495 = vrot.lane.b32.xlu0 %v2475, 80
        %v2496 = vpop.permute.xlu0 %2495
        %2497 = vrot.lane.b32.xlu0 %v2476, 80
        %v2498 = vpop.permute.xlu0 %2497
        %v2501 = vadd.f32 %v2493, %v2496
        %v2502 = vadd.f32 %v2494, %v2498
        %v2503 = vld [vmem:[%s8 + $0x2] sm:$0x1]
        %v2504 = vperm.slane %v2503, 0
        %v2505 = vmul.f32 %v2504, %v2441
        %v2506 = vmul.f32 %v2504, %v2442
        %2509 = vrot.lane.b32.xlu0 %v2505, 112
        %v2510 = vpop.permute.xlu0 %2509
        %2511 = vrot.lane.b32.xlu0 %v2506, 112
        %v2512 = vpop.permute.xlu0 %2511
        %v2515 = vadd.f32 %v2505, %v2510
        %v2516 = vadd.f32 %v2506, %v2512
        %2517 = vrot.lane.b32.xlu0 %v2505, 96
        %v2518 = vpop.permute.xlu0 %2517
        %2519 = vrot.lane.b32.xlu0 %v2506, 96
        %v2520 = vpop.permute.xlu0 %2519
        %v2523 = vadd.f32 %v2515, %v2518
        %v2524 = vadd.f32 %v2516, %v2520
        %2525 = vrot.lane.b32.xlu0 %v2505, 80
        %v2526 = vpop.permute.xlu0 %2525
        %2527 = vrot.lane.b32.xlu0 %v2506, 80
        %v2528 = vpop.permute.xlu0 %2527
        %v2531 = vadd.f32 %v2523, %v2526
        %v2532 = vadd.f32 %v2524, %v2528
        %v2533 = vld [vmem:[%s8 + $0x3] sm:$0x1]
        %v2534 = vperm.slane %v2533, 0
        %v2535 = vmul.f32 %v2534, %v2441
        %v2536 = vmul.f32 %v2534, %v2442
        %2539 = vrot.lane.b32.xlu0 %v2535, 112
        %v2540 = vpop.permute.xlu0 %2539
        %2541 = vrot.lane.b32.xlu0 %v2536, 112
        %v2542 = vpop.permute.xlu0 %2541
        %v2545 = vadd.f32 %v2535, %v2540
        %v2546 = vadd.f32 %v2536, %v2542
        %2547 = vrot.lane.b32.xlu0 %v2535, 96
        %v2548 = vpop.permute.xlu0 %2547
        %2549 = vrot.lane.b32.xlu0 %v2536, 96
        %v2550 = vpop.permute.xlu0 %2549
        %v2553 = vadd.f32 %v2545, %v2548
        %v2554 = vadd.f32 %v2546, %v2550
        %2555 = vrot.lane.b32.xlu0 %v2535, 80
        %v2556 = vpop.permute.xlu0 %2555
        %2557 = vrot.lane.b32.xlu0 %v2536, 80
        %v2558 = vpop.permute.xlu0 %2557
        %v2561 = vadd.f32 %v2553, %v2556
        %v2562 = vadd.f32 %v2554, %v2558
        %2565 = vrot.lane.b32.xlu0 %v2501, 16
        %v2566 = vpop.permute.xlu0 %2565
        %2567 = vrot.lane.b32.xlu0 %v2502, 16
        %v2568 = vpop.permute.xlu0 %2567
        %2573 = vrot.lane.b32.xlu0 %v2531, 32
        %v2574 = vpop.permute.xlu0 %2573
        %2575 = vrot.lane.b32.xlu0 %v2532, 32
        %v2576 = vpop.permute.xlu0 %2575
        %2581 = vrot.lane.b32.xlu0 %v2561, 48
        %v2582 = vpop.permute.xlu0 %2581
        %2583 = vrot.lane.b32.xlu0 %v2562, 48
        %v2584 = vpop.permute.xlu0 %2583
        %v2587 = vsel %vm1066, %v2471, %v2566
        %v2588 = vsel %vm1066, %v2472, %v2568
        %v2589 = vsel %vm1069, %v2587, %v2574
        %v2590 = vsel %vm1069, %v2588, %v2576
        %v2591 = vsel %vm1072, %v2589, %v2582
        %v2592 = vsel %vm1072, %v2590, %v2584
        %v2593 = vld [vmem:[%s13] sm:$0x1]
        %v2595 = vperm.slane %v2593, 0
        %v2597 = vadd.f32 %v2591, %v2595
        %v2598 = vadd.f32 %v2592, %v2595
        %v2599 = vld [vmem:[#allocation7] sm:$0xff]
        %v2600 = vld [vmem:[#allocation7 + $0x8] sm:$0xff]
        %v2601 = vld [vmem:[#allocation7 + $0x10] sm:$0xff]
        %v2602 = vld [vmem:[#allocation7 + $0x18] sm:$0xff]
        %v2603 = vld [vmem:[#allocation7 + $0x20] sm:$0xff]
        %v2604 = vld [vmem:[#allocation7 + $0x28] sm:$0xff]
        %v2605 = vld [vmem:[#allocation7 + $0x30] sm:$0xff]
        %v2606 = vld [vmem:[#allocation7 + $0x38] sm:$0xff]
        %vm2607 = vcmask 523264
        %v2609 = vsel %vm2607, %v2597, 0
        %v2612 = vsel %vm2607, %v2598, 0
        %2614 = vmatpush.msra.mxu0 0.0
        %2615 = vmatpush.msra.mxu0 0.0
        %2616 = vmatpush.msra.mxu0 0.0
        %2617 = vmatpush.msra.mxu0 0.0
        %2618 = vmatpush.msra.mxu0 0.0
        %2619 = vmatpush.msra.mxu0 0.0
        %2620 = vmatpush.msra.mxu0 0.0
        %2621 = vmatpush.msra.mxu0 0.0
        %2622 = vmatpush.msra.mxu0 %v2606
        %2623 = vmatpush.msra.mxu0 %v2605
        %2624 = vmatpush.msra.mxu0 %v2604
        %2625 = vmatpush.msra.mxu0 %v2603
        %2626 = vmatpush.msra.mxu0 %v2602
        %2627 = vmatpush.msra.mxu0 %v2601
        %2628 = vmatpush.msra.mxu0 %v2600
        %2629 = vmatpush.msra.mxu0 %v2599
        %2630 = vmatmul.f32.gmra.mxu0 %v2609
        %v2631 = vpop.f32.mrf.mxu0
        %v2632 = vadd.f32 0.0, %v2631
        %2633 = vmatmul.f32.gmra.mxu0 %v2612
        %v2634 = vpop.f32.mrf.mxu0
        %v2635 = vadd.f32 0.0, %v2634
        %2636 = vdwg.mxu0
        %v2637 = vld [vmem:[%s3] sm:$0xff]
        %v2638 = vld [vmem:[%s3 + $0x8] sm:$0xff]
        %v2639 = vld [vmem:[%s3 + $0x10] sm:$0xff]
        %v2640 = vld [vmem:[%s3 + $0x18] sm:$0xff]
        %v2642 = vsel %vm1066, %v2637, 0
        %v2645 = vsel %vm1066, %v2638, 0
        %v2648 = vsel %vm1066, %v2639, 0
        %v2651 = vsel %vm1066, %v2640, 0
        %2653 = vmatpush.msra.mxu0 0.0
        %2654 = vmatpush.msra.mxu0 0.0
        %2655 = vmatpush.msra.mxu0 0.0
        %2656 = vmatpush.msra.mxu0 0.0
        %2657 = vmatpush.msra.mxu0 0.0
        %2658 = vmatpush.msra.mxu0 0.0
        %2659 = vmatpush.msra.mxu0 0.0
        %2660 = vmatpush.msra.mxu0 0.0
        %2661 = vmatpush.msra.mxu0 0.0
        %2662 = vmatpush.msra.mxu0 0.0
        %2663 = vmatpush.msra.mxu0 0.0
        %2664 = vmatpush.msra.mxu0 0.0
        %2665 = vmatpush.msra.mxu0 0.0
        %2666 = vmatpush.msra.mxu0 0.0
        %2667 = vmatpush.msra.mxu0 %v2635
        %2668 = vmatpush.msra.mxu0 %v2632
        %2669 = vmatmul.f32.gmra.mxu0 %v2642
        %v2670 = vpop.f32.mrf.mxu0
        %v2671 = vadd.f32 0.0, %v2670
        %2672 = vmatmul.f32.gmra.mxu0 %v2645
        %v2673 = vpop.f32.mrf.mxu0
        %v2674 = vadd.f32 0.0, %v2673
        %2675 = vmatmul.f32.gmra.mxu0 %v2648
        %v2676 = vpop.f32.mrf.mxu0
        %v2677 = vadd.f32 0.0, %v2676
        %2678 = vmatmul.f32.gmra.mxu0 %v2651
        %v2679 = vpop.f32.mrf.mxu0
        %v2680 = vadd.f32 0.0, %v2679
        %2681 = vdwg.mxu0
        %2682 = vst [vmem:[%s595] sm:$0xff] %v2671
        %2683 = vst [vmem:[%s595 + $0x8] sm:$0xff] %v2674
        %2684 = vst [vmem:[%s595 + $0x10] sm:$0xff] %v2677
        %2685 = vst [vmem:[%s595 + $0x18] sm:$0xff] %v2680
        %s2686 = sand.u32 %s348, 1
        %s2687 = scalar_lea.sflag [#allocation4], %s2686
        %s2688 = sand.u32 %s348, 1
        %s2689 = smul.addr %s2688, 32
        %s2690 = scalar_lea.vmem [#allocation13], %s2689
        // Predicated region
        $region101: #{tpu_custom_call.1} parent=75 // pred_check
          %p2691 = pneg %p358
        $region102: #{tpu_custom_call.1} parent=75 // pred_check_branch
          %2693 = sbr.rel (%p2691) target = $region104
        $region103: #{tpu_custom_call.1} parent=75 // pred_region
          %2695 = vsyncadd %s2687, 0
          %s2696 = smul.addr %s36, 4
          %s2697 = smul.addr %s2696, 8
          %s2698 = scalar_lea.hbm %s14, %s2697
          %s2699 = sshll.u32 %s2690, 4
          %s2700 = int_to_ptr.vmem [resolvable:$true] %s2699
          %s2701 = sshll.u32 %s2698, 4
          %s2702 = int_to_ptr.hbm [resolvable:$true] %s2701
          %2707 = dma.vmem_to_hbm [thread:$0]  %s2700, 512, %s2702, %s2687, 128, 128, 8
        $region104: #{tpu_custom_call.1} parent=75 // pred_fallthru
          _
      $region76: #{tpu_custom_call.1} parent=5 // pred_fallthru
        _
      %p2708 = scmp.le.s32.totalorder 2, %s31
      // Predicated region
      $region105: #{tpu_custom_call.1} parent=5 // pred_check
        %p2709 = pneg %p2708
      $region106: #{tpu_custom_call.1} parent=5 // pred_check_branch
        %2711 = sbr.rel (%p2709) target = $region108
      $region107: #{tpu_custom_call.1} parent=5 // pred_region
        %s2712 = ssub.s32 %s31, 2
        // Predicated region
        $region109: #{tpu_custom_call.1} parent=107 // pred_check
          %p2713 = pneg %p364
        $region110: #{tpu_custom_call.1} parent=107 // pred_check_branch
          %2715 = sbr.rel (%p2713) target = $region112
        $region111: #{tpu_custom_call.1} parent=107 // pred_region
          %s2716 = sand.u32 %s349, 1
          %s2717 = scalar_lea.sflag [#allocation4], %s2716
          %s2718 = sand.u32 %s349, 1
          %s2719 = smul.addr %s2718, 32
          %s2720 = scalar_lea.vmem [#allocation13], %s2719
          %2722 = dma.done %s2717, 512
        $region112: #{tpu_custom_call.1} parent=107 // pred_fallthru
          _
      $region108: #{tpu_custom_call.1} parent=5 // pred_fallthru
        _
    $region6: #{tpu_custom_call.1} parent=1 // loop_footer
      %s35 = sadd.s32 1, %s31
    $region7: #{tpu_custom_call.1} parent=1 // loop_footer_branch
      %30 = sbr.rel target = $region3
    $region8: #{tpu_custom_call.1} parent=1 // loop_exit
      _
    %2723 = vsyncpa [#allocation3], 1
    %s2724 = scalar_lea.sflag [#allocation3], 1
    %2725 = vsyncpa %s2724, 1
    %2726 = vsyncpa [#allocation6], 1
    %s2727 = scalar_lea.sflag [#allocation6], 1
    %2728 = vsyncpa %s2727, 1
    %2729 = vsyncpa [#allocation9], 1
    %2730 = vsyncpa [#allocation12], 1
    %2731 = vsyncpa [#allocation4], 1
    %s2732 = scalar_lea.sflag [#allocation4], 1
    %2733 = vsyncpa %s2732, 1

</llo_original>
